<compile_context>
chip_gen: v5e
topology: v5e:2x2
jax: 0.10.0
libtpu: 0.0.40
codegen_flags: <defaults>
</compile_context>

<pallas_src>
import functools

import jax
import jax.numpy as jnp
from jax import lax
from jax.experimental import pallas as pl
from jax.experimental.pallas import tpu as pltpu

EPS = 1e-5


# ---------------------------------------------------------------------------
# Fused kernel
#   xs_ref  : (C_s, LP) f32   zero-padded input, channel-major, flattened padded grid,
#                             with M zero lanes of margin on each side
#   mask_ref: (1, L)   f32    1.0 at valid (interior) pixels of the padded grid
#   w_ref   : (27, C_s, C_s) bf16  packed conv weights, tap-major:
#                             taps 0..8 = conv1, 9..17 = conv2, 18..26 = conv_skip
#   prm_ref : (C_s, 8) f32    per-channel params [g1, be1, g2, be2, gs, bes, b2, 0]
#   out_ref : (C_s, L) f32    conv_skip + conv_block on the padded grid (border garbage
#                             and padded channel rows are discarded by the wrapper)
#   hs_ref  : (C_s, LP) bf16  scratch store for h1/h2 (zero margins & border)
# ---------------------------------------------------------------------------
def _residual_conv_kernel(xs_ref, mask_ref, w_ref, prm_ref, out_ref, hs_ref,
                          *, L, M, Wp, count):
    # Tap offsets of a 3x3 stencil on the flattened (N, Hp, Wp) padded grid.
    offs = [(dy - 1) * Wp + (dx - 1) for dy in range(3) for dx in range(3)]

    mask = mask_ref[...]                          # (1, L)
    prm = prm_ref[...]                            # (C_s, 8)
    g1, be1 = prm[:, 0:1], prm[:, 1:2]
    g2, be2 = prm[:, 2:3], prm[:, 3:4]
    gs, bes = prm[:, 4:5], prm[:, 5:6]
    b2 = prm[:, 6:7]

    # Zero ONLY the lane margins of the activation scratch: the shifted taps read up to
    # Wp+1 lanes past the center, and NaN garbage there would poison the masked BN sums
    # via 0*NaN.  The center [M, M+L) is always fully overwritten before it is read.
    zmargin = jnp.zeros((hs_ref.shape[0], M), hs_ref.dtype)
    hs_ref[:, 0:M] = zmargin
    hs_ref[:, M + L:M + L + M] = zmargin

    def conv9(store_ref, wbase):
        # 3x3 'same' conv as 9 accumulating MXU matmuls over statically shifted slabs.
        def tap(t):
            o = offs[t]
            slab = store_ref[:, M + o:M + o + L].astype(jnp.bfloat16)
            return jnp.dot(w_ref[wbase + t], slab,
                           preferred_element_type=jnp.float32)
        acc = tap(0)
        for t in range(1, 9):
            acc = acc + tap(t)
        return acc                                # (C_s, L) f32

    def bn(y, gamma, beta):
        # Training-mode BN over the valid (N,H,W) positions; masked two-pass, f32.
        m = jnp.sum(y * mask, axis=1, keepdims=True) / count
        d = y - m
        v = jnp.sum(mask * d * d, axis=1, keepdims=True) / count
        return gamma * d * lax.rsqrt(v + EPS) + beta

    # ---- skip branch: BN(conv_skip(x)); written to out_ref immediately ------------
    out_ref[...] = bn(conv9(xs_ref, 18), gs, bes)

    # ---- block branch: BN1 -> ReLU -> conv1 -> BN2 -> ReLU -> conv2 ---------------
    x_c = xs_ref[:, M:M + L]                      # (C_s, L) f32, zeros at padding
    h1 = jnp.maximum(bn(x_c, g1, be1), 0.0)
    hs_ref[:, M:M + L] = (h1 * mask).astype(hs_ref.dtype)    # re-zero conv-1 padding
    y1 = conv9(hs_ref, 0)

    h2 = jnp.maximum(bn(y1, g2, be2), 0.0)
    hs_ref[:, M:M + L] = (h2 * mask).astype(hs_ref.dtype)    # re-zero conv-2 padding
    y2 = conv9(hs_ref, 9) + b2

    out_ref[...] = out_ref[...] + y2


# ---------------------------------------------------------------------------
# Wrapper (layout plumbing only: NCHW -> channel-major flattened padded grid)
# ---------------------------------------------------------------------------
def residual_conv_forward(x_nchw, p):
    N, Cin, H, W = x_nchw.shape
    Cout = p['w1_oihw'].shape[0]
    Hp, Wp = H + 2, W + 2
    L = N * Hp * Wp                                 # flattened padded-grid length
    M = ((Wp + 1 + 127) // 128) * 128               # lane-aligned zero margin (>= Wp+1)
    LP = L + 2 * M
    C_s = ((max(Cin, Cout) + 7) // 8) * 8           # common channel-padded row count
    count = float(N * H * W)

    # Channel-major, spatially zero-padded, flattened, with zero lane margins.  Kept in
    # f32 because it also feeds BN1's statistics; conv taps cast to bf16 at the MXU.
    xcm = jnp.transpose(x_nchw, (1, 0, 2, 3)).astype(jnp.float32)      # (Cin,N,H,W)
    xcm = jnp.pad(xcm, ((0, C_s - Cin), (0, 0), (1, 1), (1, 1)))       # (C_s,N,Hp,Wp)
    xs = jnp.pad(xcm.reshape(C_s, L), ((0, 0), (M, M)))                # (C_s, LP)

    mask = jnp.pad(jnp.ones((N, H, W), jnp.float32),
                   ((0, 0), (1, 1), (1, 1))).reshape(1, L)             # (1, L)

    def pack_w(w_oihw):
        co, ci = w_oihw.shape[0], w_oihw.shape[1]
        w = jnp.transpose(w_oihw, (2, 3, 0, 1))                        # (3,3,co,ci)
        w = jnp.pad(w, ((0, 0), (0, 0), (0, C_s - co), (0, C_s - ci)))
        return w.reshape(9, C_s, C_s)                                  # tap-major

    wall = jnp.concatenate([pack_w(p['w1_oihw']),                      # taps  0..8
                            pack_w(p['w2_oihw']),                      # taps  9..17
                            pack_w(p['ws_oihw'])],                     # taps 18..26
                           axis=0).astype(jnp.bfloat16)                # (27, C_s, C_s)

    def padc(v):
        return jnp.pad(v.astype(jnp.float32), (0, C_s - v.shape[0]))

    # One packed per-channel parameter table: [g1, be1, g2, be2, gs, bes, b2, 0].
    # b1 / bs are intentionally dropped: a bias before training-mode BN cancels.
    prm = jnp.stack([padc(p['g1']), padc(p['be1']),
                     padc(p['g2']), padc(p['be2']),
                     padc(p['gs']), padc(p['bes']),
                     padc(p['b2']), jnp.zeros((C_s,), jnp.float32)], axis=1)  # (C_s, 8)

    vmem = pl.BlockSpec(memory_space=pltpu.MemorySpace.VMEM)
    kernel = functools.partial(_residual_conv_kernel, L=L, M=M, Wp=Wp, count=count)

    out_flat = pl.pallas_call(
        kernel,
        out_shape=jax.ShapeDtypeStruct((C_s, L), jnp.float32),
        in_specs=[vmem] * 4,
        out_specs=vmem,
        scratch_shapes=[pltpu.VMEM((C_s, LP), jnp.bfloat16)],          # h1/h2 store
        compiler_params=pltpu.CompilerParams(vmem_limit_bytes=32 * 1024 * 1024),
    )(xs, mask, wall, prm)

    # TODO(synk): when chaining blocks, keep this channel-major flattened layout as the
    # persistent inter-layer format instead of transposing/padding around every block.
    out = out_flat[:Cout].reshape(Cout, N, Hp, Wp)[:, :, 1:H + 1, 1:W + 1]
    return jnp.transpose(out, (1, 0, 2, 3))                            # back to NCHW


# ---------------------------------------------------------------------------
# Deterministic parameter init (synthetic; shapes follow the PyTorch module)
# ---------------------------------------------------------------------------
def init_params(key, Cin, Cout):
    ks = jax.random.split(key, 12)

    def conv_w(k, ci, co):  # PyTorch OIHW
        return jax.random.normal(k, (co, ci, 3, 3), jnp.float32) / jnp.sqrt(ci * 9.0)

    def vec(k, c):
        return 0.1 * jax.random.normal(k, (c,), jnp.float32)

    return dict(
        w1_oihw=conv_w(ks[0], Cin, Cout),
        w2_oihw=conv_w(ks[1], Cout, Cout),
        ws_oihw=conv_w(ks[2], Cin, Cout),
        b1=vec(ks[3], Cout), b2=vec(ks[4], Cout), bs=vec(ks[5], Cout),
        g1=1.0 + vec(ks[6], Cin), be1=vec(ks[7], Cin),
        g2=1.0 + vec(ks[8], Cout), be2=vec(ks[9], Cout),
        gs=1.0 + vec(ks[10], Cout), bes=vec(ks[11], Cout),
    )


# ---------------------------------------------------------------------------
# Pure-JAX reference (mirrors the PyTorch forward, incl. the b1/bs biases that
# cancel under training-mode BN) for a numerical check
# ---------------------------------------------------------------------------
def reference_forward(x_nchw, p):
    x = x_nchw.astype(jnp.float32)

    def conv(h, w, b):
        y = lax.conv_general_dilated(h, w, (1, 1), ((1, 1), (1, 1)),
                                     dimension_numbers=('NCHW', 'OIHW', 'NCHW'),
                                     precision=lax.Precision.HIGHEST)
        return y + b.reshape(1, -1, 1, 1)

    def bn(h, g, b):
        m = jnp.mean(h, axis=(0, 2, 3), keepdims=True)
        v = jnp.mean((h - m) ** 2, axis=(0, 2, 3), keepdims=True)
        return g.reshape(1, -1, 1, 1) * (h - m) * lax.rsqrt(v + EPS) + b.reshape(1, -1, 1, 1)

    skip = bn(conv(x, p['ws_oihw'], p['bs']), p['gs'], p['bes'])
    h1 = jax.nn.relu(bn(x, p['g1'], p['be1']))
    y1 = conv(h1, p['w1_oihw'], p['b1'])
    h2 = jax.nn.relu(bn(y1, p['g2'], p['be2']))
    y2 = conv(h2, p['w2_oihw'], p['b2'])
    return skip + y2


if __name__ == "__main__":
    N, Cin, Cout, H, W = 2, 4, 8, 16, 16
    key = jax.random.PRNGKey(0)
    kx, kp = jax.random.split(key)
    x = jax.random.normal(kx, (N, Cin, H, W), jnp.float32)   # NCHW, like PyTorch
    params = init_params(kp, Cin, Cout)

    out = jax.block_until_ready(residual_conv_forward(x, params))
    ref = jax.block_until_ready(reference_forward(x, params))

    assert out.shape == (N, Cout, H, W), out.shape
    # bf16 MXU operands (f32 accumulation / f32 BN) -> ~1e-2-scale tolerance vs f32 ref
    assert jnp.allclose(out, ref, atol=2e-2, rtol=2e-2), float(jnp.max(jnp.abs(out - ref)))
    print("KERNEL_OK")
</pallas_src>

<mosaic_0001>
module attributes {stable_mosaic.version = 11 : i64} {
  func.func @_residual_conv_kernel(%arg0: memref<8x904xf32, #tpu.memory_space<vmem>>, %arg1: memref<1x648xf32, #tpu.memory_space<vmem>>, %arg2: memref<27x8x8xbf16, #tpu.memory_space<vmem>>, %arg3: memref<8x8xf32, #tpu.memory_space<vmem>>, %arg4: memref<8x648xf32, #tpu.memory_space<vmem>>, %arg5: memref<8x904xbf16, #tpu.memory_space<vmem>>) attributes {dimension_semantics = [], scalar_prefetch = 0 : i64, scratch_operands = 1 : i64, tpu.core_type = #tpu.core_type<tc>} {
    %c0 = arith.constant 0 : index
    %c0_0 = arith.constant 0 : index
    %0 = vector.load %arg1[%c0, %c0_0] : memref<1x648xf32, #tpu.memory_space<vmem>>, vector<1x648xf32>
    %c0_1 = arith.constant 0 : index
    %c0_2 = arith.constant 0 : index
    %1 = vector.load %arg3[%c0_1, %c0_2] : memref<8x8xf32, #tpu.memory_space<vmem>>, vector<8x8xf32>
    %2 = vector.extract_strided_slice %1 {offsets = [0, 0], sizes = [8, 1], strides = [1, 1]} : vector<8x8xf32> to vector<8x1xf32>
    %3 = vector.extract_strided_slice %1 {offsets = [0, 1], sizes = [8, 1], strides = [1, 1]} : vector<8x8xf32> to vector<8x1xf32>
    %4 = vector.extract_strided_slice %1 {offsets = [0, 2], sizes = [8, 1], strides = [1, 1]} : vector<8x8xf32> to vector<8x1xf32>
    %5 = vector.extract_strided_slice %1 {offsets = [0, 3], sizes = [8, 1], strides = [1, 1]} : vector<8x8xf32> to vector<8x1xf32>
    %6 = vector.extract_strided_slice %1 {offsets = [0, 4], sizes = [8, 1], strides = [1, 1]} : vector<8x8xf32> to vector<8x1xf32>
    %7 = vector.extract_strided_slice %1 {offsets = [0, 5], sizes = [8, 1], strides = [1, 1]} : vector<8x8xf32> to vector<8x1xf32>
    %8 = vector.extract_strided_slice %1 {offsets = [0, 6], sizes = [8, 1], strides = [1, 1]} : vector<8x8xf32> to vector<8x1xf32>
    %cst = arith.constant 0.000000e+00 : bf16
    %9 = vector.broadcast %cst : bf16 to vector<8x128xbf16>
    %c0_3 = arith.constant 0 : index
    %c0_4 = arith.constant 0 : index
    %10 = vector.load %arg5[%c0_3, %c0_4] : memref<8x904xbf16, #tpu.memory_space<vmem>>, vector<8x128xbf16>
    tpu.vector_store %arg5[%c0_3, %c0_4], %9 {strides = array<i32>} : memref<8x904xbf16, #tpu.memory_space<vmem>>, vector<8x128xbf16>,
    %c0_5 = arith.constant 0 : index
    %c776 = arith.constant 776 : index
    %11 = vector.load %arg5[%c0_5, %c776] : memref<8x904xbf16, #tpu.memory_space<vmem>>, vector<8x128xbf16>
    tpu.vector_store %arg5[%c0_5, %c776], %9 {strides = array<i32>} : memref<8x904xbf16, #tpu.memory_space<vmem>>, vector<8x128xbf16>,
    %c0_6 = arith.constant 0 : index
    %c109 = arith.constant 109 : index
    %12 = vector.load %arg0[%c0_6, %c109] : memref<8x904xf32, #tpu.memory_space<vmem>>, vector<8x648xf32>
    %13 = arith.truncf %12 : vector<8x648xf32> to vector<8x648xbf16>
    %c18 = arith.constant 18 : index
    %c0_7 = arith.constant 0 : index
    %c0_8 = arith.constant 0 : index
    %14 = vector.load %arg2[%c18, %c0_7, %c0_8] : memref<27x8x8xbf16, #tpu.memory_space<vmem>>, vector<1x8x8xbf16>
    %15 = vector.shape_cast %14 : vector<1x8x8xbf16> to vector<8x8xbf16>
    %cst_9 = arith.constant dense<0.000000e+00> : vector<8x648xf32>
    %16 = tpu.matmul %15, %13, %cst_9 {dimension_numbers = #tpu.dot_dimension_numbers<[1], [0], [0], [1], [0, 0, 1, 1], [], []>} : vector<8x8xbf16>, vector<8x648xbf16>, vector<8x648xf32> -> vector<8x648xf32>
    %c0_10 = arith.constant 0 : index
    %c110 = arith.constant 110 : index
    %17 = vector.load %arg0[%c0_10, %c110] : memref<8x904xf32, #tpu.memory_space<vmem>>, vector<8x648xf32>
    %18 = arith.truncf %17 : vector<8x648xf32> to vector<8x648xbf16>
    %c19 = arith.constant 19 : index
    %c0_11 = arith.constant 0 : index
    %c0_12 = arith.constant 0 : index
    %19 = vector.load %arg2[%c19, %c0_11, %c0_12] : memref<27x8x8xbf16, #tpu.memory_space<vmem>>, vector<1x8x8xbf16>
    %20 = vector.shape_cast %19 : vector<1x8x8xbf16> to vector<8x8xbf16>
    %cst_13 = arith.constant dense<0.000000e+00> : vector<8x648xf32>
    %21 = tpu.matmul %20, %18, %cst_13 {dimension_numbers = #tpu.dot_dimension_numbers<[1], [0], [0], [1], [0, 0, 1, 1], [], []>} : vector<8x8xbf16>, vector<8x648xbf16>, vector<8x648xf32> -> vector<8x648xf32>
    %22 = arith.addf %16, %21 : vector<8x648xf32>
    %c0_14 = arith.constant 0 : index
    %c111 = arith.constant 111 : index
    %23 = vector.load %arg0[%c0_14, %c111] : memref<8x904xf32, #tpu.memory_space<vmem>>, vector<8x648xf32>
    %24 = arith.truncf %23 : vector<8x648xf32> to vector<8x648xbf16>
    %c20 = arith.constant 20 : index
    %c0_15 = arith.constant 0 : index
    %c0_16 = arith.constant 0 : index
    %25 = vector.load %arg2[%c20, %c0_15, %c0_16] : memref<27x8x8xbf16, #tpu.memory_space<vmem>>, vector<1x8x8xbf16>
    %26 = vector.shape_cast %25 : vector<1x8x8xbf16> to vector<8x8xbf16>
    %cst_17 = arith.constant dense<0.000000e+00> : vector<8x648xf32>
    %27 = tpu.matmul %26, %24, %cst_17 {dimension_numbers = #tpu.dot_dimension_numbers<[1], [0], [0], [1], [0, 0, 1, 1], [], []>} : vector<8x8xbf16>, vector<8x648xbf16>, vector<8x648xf32> -> vector<8x648xf32>
    %28 = arith.addf %22, %27 : vector<8x648xf32>
    %c0_18 = arith.constant 0 : index
    %c127 = arith.constant 127 : index
    %29 = vector.load %arg0[%c0_18, %c127] : memref<8x904xf32, #tpu.memory_space<vmem>>, vector<8x648xf32>
    %30 = arith.truncf %29 : vector<8x648xf32> to vector<8x648xbf16>
    %c21 = arith.constant 21 : index
    %c0_19 = arith.constant 0 : index
    %c0_20 = arith.constant 0 : index
    %31 = vector.load %arg2[%c21, %c0_19, %c0_20] : memref<27x8x8xbf16, #tpu.memory_space<vmem>>, vector<1x8x8xbf16>
    %32 = vector.shape_cast %31 : vector<1x8x8xbf16> to vector<8x8xbf16>
    %cst_21 = arith.constant dense<0.000000e+00> : vector<8x648xf32>
    %33 = tpu.matmul %32, %30, %cst_21 {dimension_numbers = #tpu.dot_dimension_numbers<[1], [0], [0], [1], [0, 0, 1, 1], [], []>} : vector<8x8xbf16>, vector<8x648xbf16>, vector<8x648xf32> -> vector<8x648xf32>
    %34 = arith.addf %28, %33 : vector<8x648xf32>
    %c0_22 = arith.constant 0 : index
    %c128 = arith.constant 128 : index
    %35 = vector.load %arg0[%c0_22, %c128] : memref<8x904xf32, #tpu.memory_space<vmem>>, vector<8x648xf32>
    %36 = arith.truncf %35 : vector<8x648xf32> to vector<8x648xbf16>
    %c22 = arith.constant 22 : index
    %c0_23 = arith.constant 0 : index
    %c0_24 = arith.constant 0 : index
    %37 = vector.load %arg2[%c22, %c0_23, %c0_24] : memref<27x8x8xbf16, #tpu.memory_space<vmem>>, vector<1x8x8xbf16>
    %38 = vector.shape_cast %37 : vector<1x8x8xbf16> to vector<8x8xbf16>
    %cst_25 = arith.constant dense<0.000000e+00> : vector<8x648xf32>
    %39 = tpu.matmul %38, %36, %cst_25 {dimension_numbers = #tpu.dot_dimension_numbers<[1], [0], [0], [1], [0, 0, 1, 1], [], []>} : vector<8x8xbf16>, vector<8x648xbf16>, vector<8x648xf32> -> vector<8x648xf32>
    %40 = arith.addf %34, %39 : vector<8x648xf32>
    %c0_26 = arith.constant 0 : index
    %c129 = arith.constant 129 : index
    %41 = vector.load %arg0[%c0_26, %c129] : memref<8x904xf32, #tpu.memory_space<vmem>>, vector<8x648xf32>
    %42 = arith.truncf %41 : vector<8x648xf32> to vector<8x648xbf16>
    %c23 = arith.constant 23 : index
    %c0_27 = arith.constant 0 : index
    %c0_28 = arith.constant 0 : index
    %43 = vector.load %arg2[%c23, %c0_27, %c0_28] : memref<27x8x8xbf16, #tpu.memory_space<vmem>>, vector<1x8x8xbf16>
    %44 = vector.shape_cast %43 : vector<1x8x8xbf16> to vector<8x8xbf16>
    %cst_29 = arith.constant dense<0.000000e+00> : vector<8x648xf32>
    %45 = tpu.matmul %44, %42, %cst_29 {dimension_numbers = #tpu.dot_dimension_numbers<[1], [0], [0], [1], [0, 0, 1, 1], [], []>} : vector<8x8xbf16>, vector<8x648xbf16>, vector<8x648xf32> -> vector<8x648xf32>
    %46 = arith.addf %40, %45 : vector<8x648xf32>
    %c0_30 = arith.constant 0 : index
    %c145 = arith.constant 145 : index
    %47 = vector.load %arg0[%c0_30, %c145] : memref<8x904xf32, #tpu.memory_space<vmem>>, vector<8x648xf32>
    %48 = arith.truncf %47 : vector<8x648xf32> to vector<8x648xbf16>
    %c24 = arith.constant 24 : index
    %c0_31 = arith.constant 0 : index
    %c0_32 = arith.constant 0 : index
    %49 = vector.load %arg2[%c24, %c0_31, %c0_32] : memref<27x8x8xbf16, #tpu.memory_space<vmem>>, vector<1x8x8xbf16>
    %50 = vector.shape_cast %49 : vector<1x8x8xbf16> to vector<8x8xbf16>
    %cst_33 = arith.constant dense<0.000000e+00> : vector<8x648xf32>
    %51 = tpu.matmul %50, %48, %cst_33 {dimension_numbers = #tpu.dot_dimension_numbers<[1], [0], [0], [1], [0, 0, 1, 1], [], []>} : vector<8x8xbf16>, vector<8x648xbf16>, vector<8x648xf32> -> vector<8x648xf32>
    %52 = arith.addf %46, %51 : vector<8x648xf32>
    %c0_34 = arith.constant 0 : index
    %c146 = arith.constant 146 : index
    %53 = vector.load %arg0[%c0_34, %c146] : memref<8x904xf32, #tpu.memory_space<vmem>>, vector<8x648xf32>
    %54 = arith.truncf %53 : vector<8x648xf32> to vector<8x648xbf16>
    %c25 = arith.constant 25 : index
    %c0_35 = arith.constant 0 : index
    %c0_36 = arith.constant 0 : index
    %55 = vector.load %arg2[%c25, %c0_35, %c0_36] : memref<27x8x8xbf16, #tpu.memory_space<vmem>>, vector<1x8x8xbf16>
    %56 = vector.shape_cast %55 : vector<1x8x8xbf16> to vector<8x8xbf16>
    %cst_37 = arith.constant dense<0.000000e+00> : vector<8x648xf32>
    %57 = tpu.matmul %56, %54, %cst_37 {dimension_numbers = #tpu.dot_dimension_numbers<[1], [0], [0], [1], [0, 0, 1, 1], [], []>} : vector<8x8xbf16>, vector<8x648xbf16>, vector<8x648xf32> -> vector<8x648xf32>
    %58 = arith.addf %52, %57 : vector<8x648xf32>
    %c0_38 = arith.constant 0 : index
    %c147 = arith.constant 147 : index
    %59 = vector.load %arg0[%c0_38, %c147] : memref<8x904xf32, #tpu.memory_space<vmem>>, vector<8x648xf32>
    %60 = arith.truncf %59 : vector<8x648xf32> to vector<8x648xbf16>
    %c26 = arith.constant 26 : index
    %c0_39 = arith.constant 0 : index
    %c0_40 = arith.constant 0 : index
    %61 = vector.load %arg2[%c26, %c0_39, %c0_40] : memref<27x8x8xbf16, #tpu.memory_space<vmem>>, vector<1x8x8xbf16>
    %62 = vector.shape_cast %61 : vector<1x8x8xbf16> to vector<8x8xbf16>
    %cst_41 = arith.constant dense<0.000000e+00> : vector<8x648xf32>
    %63 = tpu.matmul %62, %60, %cst_41 {dimension_numbers = #tpu.dot_dimension_numbers<[1], [0], [0], [1], [0, 0, 1, 1], [], []>} : vector<8x8xbf16>, vector<8x648xbf16>, vector<8x648xf32> -> vector<8x648xf32>
    %64 = arith.addf %58, %63 : vector<8x648xf32>
    %65 = vector.broadcast %0 : vector<1x648xf32> to vector<8x648xf32>
    %66 = arith.mulf %64, %65 : vector<8x648xf32>
    %cst_42 = arith.constant dense<0.000000e+00> : vector<8xf32>
    %67 = vector.multi_reduction <add>, %66, %cst_42 [1] : vector<8x648xf32> to vector<8xf32>
    %68 = vector.shape_cast %67 : vector<8xf32> to vector<8x1xf32>
    %cst_43 = arith.constant 5.120000e+02 : f32
    %69 = vector.broadcast %cst_43 : f32 to vector<8x1xf32>
    %70 = arith.divf %68, %69 : vector<8x1xf32>
    %71 = vector.broadcast %70 : vector<8x1xf32> to vector<8x648xf32>
    %72 = arith.subf %64, %71 : vector<8x648xf32>
    %73 = vector.broadcast %0 : vector<1x648xf32> to vector<8x648xf32>
    %74 = arith.mulf %73, %72 : vector<8x648xf32>
    %75 = arith.mulf %74, %72 : vector<8x648xf32>
    %cst_44 = arith.constant dense<0.000000e+00> : vector<8xf32>
    %76 = vector.multi_reduction <add>, %75, %cst_44 [1] : vector<8x648xf32> to vector<8xf32>
    %77 = vector.shape_cast %76 : vector<8xf32> to vector<8x1xf32>
    %cst_45 = arith.constant 5.120000e+02 : f32
    %78 = vector.broadcast %cst_45 : f32 to vector<8x1xf32>
    %79 = arith.divf %77, %78 : vector<8x1xf32>
    %80 = vector.broadcast %6 : vector<8x1xf32> to vector<8x648xf32>
    %81 = arith.mulf %80, %72 : vector<8x648xf32>
    %cst_46 = arith.constant 9.99999974E-6 : f32
    %82 = vector.broadcast %cst_46 : f32 to vector<8x1xf32>
    %83 = arith.addf %79, %82 : vector<8x1xf32>
    %84 = math.rsqrt %83 : vector<8x1xf32>
    %85 = vector.broadcast %84 : vector<8x1xf32> to vector<8x648xf32>
    %86 = arith.mulf %81, %85 : vector<8x648xf32>
    %87 = vector.broadcast %7 : vector<8x1xf32> to vector<8x648xf32>
    %88 = arith.addf %86, %87 : vector<8x648xf32>
    %c0_47 = arith.constant 0 : index
    %c0_48 = arith.constant 0 : index
    %89 = vector.load %arg4[%c0_47, %c0_48] : memref<8x648xf32, #tpu.memory_space<vmem>>, vector<8x648xf32>
    tpu.vector_store %arg4[%c0_47, %c0_48], %88 {strides = array<i32>} : memref<8x648xf32, #tpu.memory_space<vmem>>, vector<8x648xf32>,
    %c0_49 = arith.constant 0 : index
    %c128_50 = arith.constant 128 : index
    %90 = vector.load %arg0[%c0_49, %c128_50] : memref<8x904xf32, #tpu.memory_space<vmem>>, vector<8x648xf32>
    %91 = vector.broadcast %0 : vector<1x648xf32> to vector<8x648xf32>
    %92 = arith.mulf %90, %91 : vector<8x648xf32>
    %cst_51 = arith.constant dense<0.000000e+00> : vector<8xf32>
    %93 = vector.multi_reduction <add>, %92, %cst_51 [1] : vector<8x648xf32> to vector<8xf32>
    %94 = vector.shape_cast %93 : vector<8xf32> to vector<8x1xf32>
    %cst_52 = arith.constant 5.120000e+02 : f32
    %95 = vector.broadcast %cst_52 : f32 to vector<8x1xf32>
    %96 = arith.divf %94, %95 : vector<8x1xf32>
    %97 = vector.broadcast %96 : vector<8x1xf32> to vector<8x648xf32>
    %98 = arith.subf %90, %97 : vector<8x648xf32>
    %99 = vector.broadcast %0 : vector<1x648xf32> to vector<8x648xf32>
    %100 = arith.mulf %99, %98 : vector<8x648xf32>
    %101 = arith.mulf %100, %98 : vector<8x648xf32>
    %cst_53 = arith.constant dense<0.000000e+00> : vector<8xf32>
    %102 = vector.multi_reduction <add>, %101, %cst_53 [1] : vector<8x648xf32> to vector<8xf32>
    %103 = vector.shape_cast %102 : vector<8xf32> to vector<8x1xf32>
    %cst_54 = arith.constant 5.120000e+02 : f32
    %104 = vector.broadcast %cst_54 : f32 to vector<8x1xf32>
    %105 = arith.divf %103, %104 : vector<8x1xf32>
    %106 = vector.broadcast %2 : vector<8x1xf32> to vector<8x648xf32>
    %107 = arith.mulf %106, %98 : vector<8x648xf32>
    %cst_55 = arith.constant 9.99999974E-6 : f32
    %108 = vector.broadcast %cst_55 : f32 to vector<8x1xf32>
    %109 = arith.addf %105, %108 : vector<8x1xf32>
    %110 = math.rsqrt %109 : vector<8x1xf32>
    %111 = vector.broadcast %110 : vector<8x1xf32> to vector<8x648xf32>
    %112 = arith.mulf %107, %111 : vector<8x648xf32>
    %113 = vector.broadcast %3 : vector<8x1xf32> to vector<8x648xf32>
    %114 = arith.addf %112, %113 : vector<8x648xf32>
    %cst_56 = arith.constant 0.000000e+00 : f32
    %115 = vector.broadcast %cst_56 : f32 to vector<8x648xf32>
    %116 = arith.maximumf %114, %115 : vector<8x648xf32>
    %117 = vector.broadcast %0 : vector<1x648xf32> to vector<8x648xf32>
    %118 = arith.mulf %116, %117 : vector<8x648xf32>
    %119 = arith.truncf %118 : vector<8x648xf32> to vector<8x648xbf16>
    %c0_57 = arith.constant 0 : index
    %c128_58 = arith.constant 128 : index
    %120 = vector.load %arg5[%c0_57, %c128_58] : memref<8x904xbf16, #tpu.memory_space<vmem>>, vector<8x648xbf16>
    tpu.vector_store %arg5[%c0_57, %c128_58], %119 {strides = array<i32>} : memref<8x904xbf16, #tpu.memory_space<vmem>>, vector<8x648xbf16>,
    %c0_59 = arith.constant 0 : index
    %c109_60 = arith.constant 109 : index
    %121 = vector.load %arg5[%c0_59, %c109_60] : memref<8x904xbf16, #tpu.memory_space<vmem>>, vector<8x648xbf16>
    %c0_61 = arith.constant 0 : index
    %c0_62 = arith.constant 0 : index
    %c0_63 = arith.constant 0 : index
    %122 = vector.load %arg2[%c0_61, %c0_62, %c0_63] : memref<27x8x8xbf16, #tpu.memory_space<vmem>>, vector<1x8x8xbf16>
    %123 = vector.shape_cast %122 : vector<1x8x8xbf16> to vector<8x8xbf16>
    %cst_64 = arith.constant dense<0.000000e+00> : vector<8x648xf32>
    %124 = tpu.matmul %123, %121, %cst_64 {dimension_numbers = #tpu.dot_dimension_numbers<[1], [0], [0], [1], [0, 0, 1, 1], [], []>} : vector<8x8xbf16>, vector<8x648xbf16>, vector<8x648xf32> -> vector<8x648xf32>
    %c0_65 = arith.constant 0 : index
    %c110_66 = arith.constant 110 : index
    %125 = vector.load %arg5[%c0_65, %c110_66] : memref<8x904xbf16, #tpu.memory_space<vmem>>, vector<8x648xbf16>
    %c1 = arith.constant 1 : index
    %c0_67 = arith.constant 0 : index
    %c0_68 = arith.constant 0 : index
    %126 = vector.load %arg2[%c1, %c0_67, %c0_68] : memref<27x8x8xbf16, #tpu.memory_space<vmem>>, vector<1x8x8xbf16>
    %127 = vector.shape_cast %126 : vector<1x8x8xbf16> to vector<8x8xbf16>
    %cst_69 = arith.constant dense<0.000000e+00> : vector<8x648xf32>
    %128 = tpu.matmul %127, %125, %cst_69 {dimension_numbers = #tpu.dot_dimension_numbers<[1], [0], [0], [1], [0, 0, 1, 1], [], []>} : vector<8x8xbf16>, vector<8x648xbf16>, vector<8x648xf32> -> vector<8x648xf32>
    %129 = arith.addf %124, %128 : vector<8x648xf32>
    %c0_70 = arith.constant 0 : index
    %c111_71 = arith.constant 111 : index
    %130 = vector.load %arg5[%c0_70, %c111_71] : memref<8x904xbf16, #tpu.memory_space<vmem>>, vector<8x648xbf16>
    %c2 = arith.constant 2 : index
    %c0_72 = arith.constant 0 : index
    %c0_73 = arith.constant 0 : index
    %131 = vector.load %arg2[%c2, %c0_72, %c0_73] : memref<27x8x8xbf16, #tpu.memory_space<vmem>>, vector<1x8x8xbf16>
    %132 = vector.shape_cast %131 : vector<1x8x8xbf16> to vector<8x8xbf16>
    %cst_74 = arith.constant dense<0.000000e+00> : vector<8x648xf32>
    %133 = tpu.matmul %132, %130, %cst_74 {dimension_numbers = #tpu.dot_dimension_numbers<[1], [0], [0], [1], [0, 0, 1, 1], [], []>} : vector<8x8xbf16>, vector<8x648xbf16>, vector<8x648xf32> -> vector<8x648xf32>
    %134 = arith.addf %129, %133 : vector<8x648xf32>
    %c0_75 = arith.constant 0 : index
    %c127_76 = arith.constant 127 : index
    %135 = vector.load %arg5[%c0_75, %c127_76] : memref<8x904xbf16, #tpu.memory_space<vmem>>, vector<8x648xbf16>
    %c3 = arith.constant 3 : index
    %c0_77 = arith.constant 0 : index
    %c0_78 = arith.constant 0 : index
    %136 = vector.load %arg2[%c3, %c0_77, %c0_78] : memref<27x8x8xbf16, #tpu.memory_space<vmem>>, vector<1x8x8xbf16>
    %137 = vector.shape_cast %136 : vector<1x8x8xbf16> to vector<8x8xbf16>
    %cst_79 = arith.constant dense<0.000000e+00> : vector<8x648xf32>
    %138 = tpu.matmul %137, %135, %cst_79 {dimension_numbers = #tpu.dot_dimension_numbers<[1], [0], [0], [1], [0, 0, 1, 1], [], []>} : vector<8x8xbf16>, vector<8x648xbf16>, vector<8x648xf32> -> vector<8x648xf32>
    %139 = arith.addf %134, %138 : vector<8x648xf32>
    %c0_80 = arith.constant 0 : index
    %c128_81 = arith.constant 128 : index
    %140 = vector.load %arg5[%c0_80, %c128_81] : memref<8x904xbf16, #tpu.memory_space<vmem>>, vector<8x648xbf16>
    %c4 = arith.constant 4 : index
    %c0_82 = arith.constant 0 : index
    %c0_83 = arith.constant 0 : index
    %141 = vector.load %arg2[%c4, %c0_82, %c0_83] : memref<27x8x8xbf16, #tpu.memory_space<vmem>>, vector<1x8x8xbf16>
    %142 = vector.shape_cast %141 : vector<1x8x8xbf16> to vector<8x8xbf16>
    %cst_84 = arith.constant dense<0.000000e+00> : vector<8x648xf32>
    %143 = tpu.matmul %142, %140, %cst_84 {dimension_numbers = #tpu.dot_dimension_numbers<[1], [0], [0], [1], [0, 0, 1, 1], [], []>} : vector<8x8xbf16>, vector<8x648xbf16>, vector<8x648xf32> -> vector<8x648xf32>
    %144 = arith.addf %139, %143 : vector<8x648xf32>
    %c0_85 = arith.constant 0 : index
    %c129_86 = arith.constant 129 : index
    %145 = vector.load %arg5[%c0_85, %c129_86] : memref<8x904xbf16, #tpu.memory_space<vmem>>, vector<8x648xbf16>
    %c5 = arith.constant 5 : index
    %c0_87 = arith.constant 0 : index
    %c0_88 = arith.constant 0 : index
    %146 = vector.load %arg2[%c5, %c0_87, %c0_88] : memref<27x8x8xbf16, #tpu.memory_space<vmem>>, vector<1x8x8xbf16>
    %147 = vector.shape_cast %146 : vector<1x8x8xbf16> to vector<8x8xbf16>
    %cst_89 = arith.constant dense<0.000000e+00> : vector<8x648xf32>
    %148 = tpu.matmul %147, %145, %cst_89 {dimension_numbers = #tpu.dot_dimension_numbers<[1], [0], [0], [1], [0, 0, 1, 1], [], []>} : vector<8x8xbf16>, vector<8x648xbf16>, vector<8x648xf32> -> vector<8x648xf32>
    %149 = arith.addf %144, %148 : vector<8x648xf32>
    %c0_90 = arith.constant 0 : index
    %c145_91 = arith.constant 145 : index
    %150 = vector.load %arg5[%c0_90, %c145_91] : memref<8x904xbf16, #tpu.memory_space<vmem>>, vector<8x648xbf16>
    %c6 = arith.constant 6 : index
    %c0_92 = arith.constant 0 : index
    %c0_93 = arith.constant 0 : index
    %151 = vector.load %arg2[%c6, %c0_92, %c0_93] : memref<27x8x8xbf16, #tpu.memory_space<vmem>>, vector<1x8x8xbf16>
    %152 = vector.shape_cast %151 : vector<1x8x8xbf16> to vector<8x8xbf16>
    %cst_94 = arith.constant dense<0.000000e+00> : vector<8x648xf32>
    %153 = tpu.matmul %152, %150, %cst_94 {dimension_numbers = #tpu.dot_dimension_numbers<[1], [0], [0], [1], [0, 0, 1, 1], [], []>} : vector<8x8xbf16>, vector<8x648xbf16>, vector<8x648xf32> -> vector<8x648xf32>
    %154 = arith.addf %149, %153 : vector<8x648xf32>
    %c0_95 = arith.constant 0 : index
    %c146_96 = arith.constant 146 : index
    %155 = vector.load %arg5[%c0_95, %c146_96] : memref<8x904xbf16, #tpu.memory_space<vmem>>, vector<8x648xbf16>
    %c7 = arith.constant 7 : index
    %c0_97 = arith.constant 0 : index
    %c0_98 = arith.constant 0 : index
    %156 = vector.load %arg2[%c7, %c0_97, %c0_98] : memref<27x8x8xbf16, #tpu.memory_space<vmem>>, vector<1x8x8xbf16>
    %157 = vector.shape_cast %156 : vector<1x8x8xbf16> to vector<8x8xbf16>
    %cst_99 = arith.constant dense<0.000000e+00> : vector<8x648xf32>
    %158 = tpu.matmul %157, %155, %cst_99 {dimension_numbers = #tpu.dot_dimension_numbers<[1], [0], [0], [1], [0, 0, 1, 1], [], []>} : vector<8x8xbf16>, vector<8x648xbf16>, vector<8x648xf32> -> vector<8x648xf32>
    %159 = arith.addf %154, %158 : vector<8x648xf32>
    %c0_100 = arith.constant 0 : index
    %c147_101 = arith.constant 147 : index
    %160 = vector.load %arg5[%c0_100, %c147_101] : memref<8x904xbf16, #tpu.memory_space<vmem>>, vector<8x648xbf16>
    %c8 = arith.constant 8 : index
    %c0_102 = arith.constant 0 : index
    %c0_103 = arith.constant 0 : index
    %161 = vector.load %arg2[%c8, %c0_102, %c0_103] : memref<27x8x8xbf16, #tpu.memory_space<vmem>>, vector<1x8x8xbf16>
    %162 = vector.shape_cast %161 : vector<1x8x8xbf16> to vector<8x8xbf16>
    %cst_104 = arith.constant dense<0.000000e+00> : vector<8x648xf32>
    %163 = tpu.matmul %162, %160, %cst_104 {dimension_numbers = #tpu.dot_dimension_numbers<[1], [0], [0], [1], [0, 0, 1, 1], [], []>} : vector<8x8xbf16>, vector<8x648xbf16>, vector<8x648xf32> -> vector<8x648xf32>
    %164 = arith.addf %159, %163 : vector<8x648xf32>
    %165 = vector.broadcast %0 : vector<1x648xf32> to vector<8x648xf32>
    %166 = arith.mulf %164, %165 : vector<8x648xf32>
    %cst_105 = arith.constant dense<0.000000e+00> : vector<8xf32>
    %167 = vector.multi_reduction <add>, %166, %cst_105 [1] : vector<8x648xf32> to vector<8xf32>
    %168 = vector.shape_cast %167 : vector<8xf32> to vector<8x1xf32>
    %cst_106 = arith.constant 5.120000e+02 : f32
    %169 = vector.broadcast %cst_106 : f32 to vector<8x1xf32>
    %170 = arith.divf %168, %169 : vector<8x1xf32>
    %171 = vector.broadcast %170 : vector<8x1xf32> to vector<8x648xf32>
    %172 = arith.subf %164, %171 : vector<8x648xf32>
    %173 = vector.broadcast %0 : vector<1x648xf32> to vector<8x648xf32>
    %174 = arith.mulf %173, %172 : vector<8x648xf32>
    %175 = arith.mulf %174, %172 : vector<8x648xf32>
    %cst_107 = arith.constant dense<0.000000e+00> : vector<8xf32>
    %176 = vector.multi_reduction <add>, %175, %cst_107 [1] : vector<8x648xf32> to vector<8xf32>
    %177 = vector.shape_cast %176 : vector<8xf32> to vector<8x1xf32>
    %cst_108 = arith.constant 5.120000e+02 : f32
    %178 = vector.broadcast %cst_108 : f32 to vector<8x1xf32>
    %179 = arith.divf %177, %178 : vector<8x1xf32>
    %180 = vector.broadcast %4 : vector<8x1xf32> to vector<8x648xf32>
    %181 = arith.mulf %180, %172 : vector<8x648xf32>
    %cst_109 = arith.constant 9.99999974E-6 : f32
    %182 = vector.broadcast %cst_109 : f32 to vector<8x1xf32>
    %183 = arith.addf %179, %182 : vector<8x1xf32>
    %184 = math.rsqrt %183 : vector<8x1xf32>
    %185 = vector.broadcast %184 : vector<8x1xf32> to vector<8x648xf32>
    %186 = arith.mulf %181, %185 : vector<8x648xf32>
    %187 = vector.broadcast %5 : vector<8x1xf32> to vector<8x648xf32>
    %188 = arith.addf %186, %187 : vector<8x648xf32>
    %cst_110 = arith.constant 0.000000e+00 : f32
    %189 = vector.broadcast %cst_110 : f32 to vector<8x648xf32>
    %190 = arith.maximumf %188, %189 : vector<8x648xf32>
    %191 = vector.broadcast %0 : vector<1x648xf32> to vector<8x648xf32>
    %192 = arith.mulf %190, %191 : vector<8x648xf32>
    %193 = arith.truncf %192 : vector<8x648xf32> to vector<8x648xbf16>
    %c0_111 = arith.constant 0 : index
    %c128_112 = arith.constant 128 : index
    %194 = vector.load %arg5[%c0_111, %c128_112] : memref<8x904xbf16, #tpu.memory_space<vmem>>, vector<8x648xbf16>
    tpu.vector_store %arg5[%c0_111, %c128_112], %193 {strides = array<i32>} : memref<8x904xbf16, #tpu.memory_space<vmem>>, vector<8x648xbf16>,
    %c0_113 = arith.constant 0 : index
    %c109_114 = arith.constant 109 : index
    %195 = vector.load %arg5[%c0_113, %c109_114] : memref<8x904xbf16, #tpu.memory_space<vmem>>, vector<8x648xbf16>
    %c9 = arith.constant 9 : index
    %c0_115 = arith.constant 0 : index
    %c0_116 = arith.constant 0 : index
    %196 = vector.load %arg2[%c9, %c0_115, %c0_116] : memref<27x8x8xbf16, #tpu.memory_space<vmem>>, vector<1x8x8xbf16>
    %197 = vector.shape_cast %196 : vector<1x8x8xbf16> to vector<8x8xbf16>
    %cst_117 = arith.constant dense<0.000000e+00> : vector<8x648xf32>
    %198 = tpu.matmul %197, %195, %cst_117 {dimension_numbers = #tpu.dot_dimension_numbers<[1], [0], [0], [1], [0, 0, 1, 1], [], []>} : vector<8x8xbf16>, vector<8x648xbf16>, vector<8x648xf32> -> vector<8x648xf32>
    %c0_118 = arith.constant 0 : index
    %c110_119 = arith.constant 110 : index
    %199 = vector.load %arg5[%c0_118, %c110_119] : memref<8x904xbf16, #tpu.memory_space<vmem>>, vector<8x648xbf16>
    %c10 = arith.constant 10 : index
    %c0_120 = arith.constant 0 : index
    %c0_121 = arith.constant 0 : index
    %200 = vector.load %arg2[%c10, %c0_120, %c0_121] : memref<27x8x8xbf16, #tpu.memory_space<vmem>>, vector<1x8x8xbf16>
    %201 = vector.shape_cast %200 : vector<1x8x8xbf16> to vector<8x8xbf16>
    %cst_122 = arith.constant dense<0.000000e+00> : vector<8x648xf32>
    %202 = tpu.matmul %201, %199, %cst_122 {dimension_numbers = #tpu.dot_dimension_numbers<[1], [0], [0], [1], [0, 0, 1, 1], [], []>} : vector<8x8xbf16>, vector<8x648xbf16>, vector<8x648xf32> -> vector<8x648xf32>
    %203 = arith.addf %198, %202 : vector<8x648xf32>
    %c0_123 = arith.constant 0 : index
    %c111_124 = arith.constant 111 : index
    %204 = vector.load %arg5[%c0_123, %c111_124] : memref<8x904xbf16, #tpu.memory_space<vmem>>, vector<8x648xbf16>
    %c11 = arith.constant 11 : index
    %c0_125 = arith.constant 0 : index
    %c0_126 = arith.constant 0 : index
    %205 = vector.load %arg2[%c11, %c0_125, %c0_126] : memref<27x8x8xbf16, #tpu.memory_space<vmem>>, vector<1x8x8xbf16>
    %206 = vector.shape_cast %205 : vector<1x8x8xbf16> to vector<8x8xbf16>
    %cst_127 = arith.constant dense<0.000000e+00> : vector<8x648xf32>
    %207 = tpu.matmul %206, %204, %cst_127 {dimension_numbers = #tpu.dot_dimension_numbers<[1], [0], [0], [1], [0, 0, 1, 1], [], []>} : vector<8x8xbf16>, vector<8x648xbf16>, vector<8x648xf32> -> vector<8x648xf32>
    %208 = arith.addf %203, %207 : vector<8x648xf32>
    %c0_128 = arith.constant 0 : index
    %c127_129 = arith.constant 127 : index
    %209 = vector.load %arg5[%c0_128, %c127_129] : memref<8x904xbf16, #tpu.memory_space<vmem>>, vector<8x648xbf16>
    %c12 = arith.constant 12 : index
    %c0_130 = arith.constant 0 : index
    %c0_131 = arith.constant 0 : index
    %210 = vector.load %arg2[%c12, %c0_130, %c0_131] : memref<27x8x8xbf16, #tpu.memory_space<vmem>>, vector<1x8x8xbf16>
    %211 = vector.shape_cast %210 : vector<1x8x8xbf16> to vector<8x8xbf16>
    %cst_132 = arith.constant dense<0.000000e+00> : vector<8x648xf32>
    %212 = tpu.matmul %211, %209, %cst_132 {dimension_numbers = #tpu.dot_dimension_numbers<[1], [0], [0], [1], [0, 0, 1, 1], [], []>} : vector<8x8xbf16>, vector<8x648xbf16>, vector<8x648xf32> -> vector<8x648xf32>
    %213 = arith.addf %208, %212 : vector<8x648xf32>
    %c0_133 = arith.constant 0 : index
    %c128_134 = arith.constant 128 : index
    %214 = vector.load %arg5[%c0_133, %c128_134] : memref<8x904xbf16, #tpu.memory_space<vmem>>, vector<8x648xbf16>
    %c13 = arith.constant 13 : index
    %c0_135 = arith.constant 0 : index
    %c0_136 = arith.constant 0 : index
    %215 = vector.load %arg2[%c13, %c0_135, %c0_136] : memref<27x8x8xbf16, #tpu.memory_space<vmem>>, vector<1x8x8xbf16>
    %216 = vector.shape_cast %215 : vector<1x8x8xbf16> to vector<8x8xbf16>
    %cst_137 = arith.constant dense<0.000000e+00> : vector<8x648xf32>
    %217 = tpu.matmul %216, %214, %cst_137 {dimension_numbers = #tpu.dot_dimension_numbers<[1], [0], [0], [1], [0, 0, 1, 1], [], []>} : vector<8x8xbf16>, vector<8x648xbf16>, vector<8x648xf32> -> vector<8x648xf32>
    %218 = arith.addf %213, %217 : vector<8x648xf32>
    %c0_138 = arith.constant 0 : index
    %c129_139 = arith.constant 129 : index
    %219 = vector.load %arg5[%c0_138, %c129_139] : memref<8x904xbf16, #tpu.memory_space<vmem>>, vector<8x648xbf16>
    %c14 = arith.constant 14 : index
    %c0_140 = arith.constant 0 : index
    %c0_141 = arith.constant 0 : index
    %220 = vector.load %arg2[%c14, %c0_140, %c0_141] : memref<27x8x8xbf16, #tpu.memory_space<vmem>>, vector<1x8x8xbf16>
    %221 = vector.shape_cast %220 : vector<1x8x8xbf16> to vector<8x8xbf16>
    %cst_142 = arith.constant dense<0.000000e+00> : vector<8x648xf32>
    %222 = tpu.matmul %221, %219, %cst_142 {dimension_numbers = #tpu.dot_dimension_numbers<[1], [0], [0], [1], [0, 0, 1, 1], [], []>} : vector<8x8xbf16>, vector<8x648xbf16>, vector<8x648xf32> -> vector<8x648xf32>
    %223 = arith.addf %218, %222 : vector<8x648xf32>
    %c0_143 = arith.constant 0 : index
    %c145_144 = arith.constant 145 : index
    %224 = vector.load %arg5[%c0_143, %c145_144] : memref<8x904xbf16, #tpu.memory_space<vmem>>, vector<8x648xbf16>
    %c15 = arith.constant 15 : index
    %c0_145 = arith.constant 0 : index
    %c0_146 = arith.constant 0 : index
    %225 = vector.load %arg2[%c15, %c0_145, %c0_146] : memref<27x8x8xbf16, #tpu.memory_space<vmem>>, vector<1x8x8xbf16>
    %226 = vector.shape_cast %225 : vector<1x8x8xbf16> to vector<8x8xbf16>
    %cst_147 = arith.constant dense<0.000000e+00> : vector<8x648xf32>
    %227 = tpu.matmul %226, %224, %cst_147 {dimension_numbers = #tpu.dot_dimension_numbers<[1], [0], [0], [1], [0, 0, 1, 1], [], []>} : vector<8x8xbf16>, vector<8x648xbf16>, vector<8x648xf32> -> vector<8x648xf32>
    %228 = arith.addf %223, %227 : vector<8x648xf32>
    %c0_148 = arith.constant 0 : index
    %c146_149 = arith.constant 146 : index
    %229 = vector.load %arg5[%c0_148, %c146_149] : memref<8x904xbf16, #tpu.memory_space<vmem>>, vector<8x648xbf16>
    %c16 = arith.constant 16 : index
    %c0_150 = arith.constant 0 : index
    %c0_151 = arith.constant 0 : index
    %230 = vector.load %arg2[%c16, %c0_150, %c0_151] : memref<27x8x8xbf16, #tpu.memory_space<vmem>>, vector<1x8x8xbf16>
    %231 = vector.shape_cast %230 : vector<1x8x8xbf16> to vector<8x8xbf16>
    %cst_152 = arith.constant dense<0.000000e+00> : vector<8x648xf32>
    %232 = tpu.matmul %231, %229, %cst_152 {dimension_numbers = #tpu.dot_dimension_numbers<[1], [0], [0], [1], [0, 0, 1, 1], [], []>} : vector<8x8xbf16>, vector<8x648xbf16>, vector<8x648xf32> -> vector<8x648xf32>
    %233 = arith.addf %228, %232 : vector<8x648xf32>
    %c0_153 = arith.constant 0 : index
    %c147_154 = arith.constant 147 : index
    %234 = vector.load %arg5[%c0_153, %c147_154] : memref<8x904xbf16, #tpu.memory_space<vmem>>, vector<8x648xbf16>
    %c17 = arith.constant 17 : index
    %c0_155 = arith.constant 0 : index
    %c0_156 = arith.constant 0 : index
    %235 = vector.load %arg2[%c17, %c0_155, %c0_156] : memref<27x8x8xbf16, #tpu.memory_space<vmem>>, vector<1x8x8xbf16>
    %236 = vector.shape_cast %235 : vector<1x8x8xbf16> to vector<8x8xbf16>
    %cst_157 = arith.constant dense<0.000000e+00> : vector<8x648xf32>
    %237 = tpu.matmul %236, %234, %cst_157 {dimension_numbers = #tpu.dot_dimension_numbers<[1], [0], [0], [1], [0, 0, 1, 1], [], []>} : vector<8x8xbf16>, vector<8x648xbf16>, vector<8x648xf32> -> vector<8x648xf32>
    %238 = arith.addf %233, %237 : vector<8x648xf32>
    %239 = vector.broadcast %8 : vector<8x1xf32> to vector<8x648xf32>
    %240 = arith.addf %238, %239 : vector<8x648xf32>
    %c0_158 = arith.constant 0 : index
    %c0_159 = arith.constant 0 : index
    %241 = vector.load %arg4[%c0_158, %c0_159] : memref<8x648xf32, #tpu.memory_space<vmem>>, vector<8x648xf32>
    %242 = arith.addf %241, %240 : vector<8x648xf32>
    %c0_160 = arith.constant 0 : index
    %c0_161 = arith.constant 0 : index
    %243 = vector.load %arg4[%c0_160, %c0_161] : memref<8x648xf32, #tpu.memory_space<vmem>>, vector<8x648xf32>
    tpu.vector_store %arg4[%c0_160, %c0_161], %242 {strides = array<i32>} : memref<8x648xf32, #tpu.memory_space<vmem>>, vector<8x648xf32>,
    return
  }
}

</mosaic_0001>

<llo_original>
// kernel: tpu_custom_call.1
$region0: #{tpu_custom_call.1}
  #allocation0 [shape = 'u32[]', space=smem, size = 0x4, offset = 0x4, fixed_abs, tag = 'smem constant byte address 0x4 - core index']
  #allocation1 [shape = 'u32[72,128]{1,0:T(1,128)}', space=vmem, size = 0x9000, scoped, tag = 'internal scratch']
  #allocation2 [shape = 'bf16[8,904]{1,0:T(8,128)(2,1)}', space=vmem, size = 0x4000, scoped, tag = 'scratch operand']
  %s0 = inlined_call_operand.vmem [shape: f32[8,904], index: 0, kind: input, shape index: {}]
  %s1 = inlined_call_operand.vmem [shape: f32[1,648], index: 1, kind: input, shape index: {}]
  %s2 = inlined_call_operand.vmem [shape: bf16[27,8,8], index: 2, kind: input, shape index: {}]
  %s3 = inlined_call_operand.vmem [shape: f32[8,8], index: 3, kind: input, shape index: {}]
  %s4 = inlined_call_operand.hbm [shape: f32[8,648], index: 4, kind: output, shape index: {}]
  %s5 = sld [smem:[#allocation0]]
  $region26: #{tpu_custom_call.1} parent=0
    _
  %s7 = ssub.s32 1, %s5
  %s8 = scalar_select 0, %s7, %s5
  $region1: #{tpu_custom_call.1} parent=0
    #allocation3 [shape = 'u8[24576]{0}', space=vmem, size = 0x6000, scoped, tag = 'output window, operand 0, single buffered']
    #allocation4 [shape = 's32[1]{0}', space=sflag, size = 0x4, scoped, tag = 'scoped memory for tpu_custom_call.1']
    %9 = vsyncpa [#allocation4], 0
    // Predicated region
    $region2: #{tpu_custom_call.1} parent=1 // pred_check
      _
    $region3: #{tpu_custom_call.1} parent=1 // pred_check_branch
      %11 = sbr.rel (0) target = $region5
    $region4: #{tpu_custom_call.1} parent=1 // pred_region
      _
    $region5: #{tpu_custom_call.1} parent=1 // pred_fallthru
      _
    // Predicated region
    $region6: #{tpu_custom_call.1} parent=1 // pred_check
      _
    $region7: #{tpu_custom_call.1} parent=1 // pred_check_branch
      %13 = sbr.rel (0) target = $region9
    $region8: #{tpu_custom_call.1} parent=1 // pred_region
      _
    $region9: #{tpu_custom_call.1} parent=1 // pred_fallthru
      _
    // Predicated region
    $region10: #{tpu_custom_call.1} parent=1 // pred_check
      _
    $region11: #{tpu_custom_call.1} parent=1 // pred_check_branch
      %15 = sbr.rel (0) target = $region13
    $region12: #{tpu_custom_call.1} parent=1 // pred_region
      _
    $region13: #{tpu_custom_call.1} parent=1 // pred_fallthru
      _
    // Predicated region
    $region14: #{tpu_custom_call.1} parent=1 // pred_check
      _
    $region15: #{tpu_custom_call.1} parent=1 // pred_check_branch
      %17 = sbr.rel (0) target = $region17
    $region16: #{tpu_custom_call.1} parent=1 // pred_region
      _
    $region17: #{tpu_custom_call.1} parent=1 // pred_fallthru
      _
    %v19 = vld [vmem:[%s1] sm:$0x3f]
    %v20 = vld [vmem:[%s3] sm:$0xff]
    %21 = vst [vmem:[#allocation2] sm:$0xf] 0
    %vm22 = vcmask 1043520
    %vm23 = vcmask 64516
    %vm24 = vmor %vm23, %vm22
    %25 = vst.msk [vmem:[#allocation2 + $0x18] sm:$0xff] %vm24, 0
    %v26 = vld [vmem:[%s0] sm:$0xff]
    %v27 = vld [vmem:[%s0 + $0x8] sm:$0xff]
    %v28 = vld [vmem:[%s0 + $0x10] sm:$0xff]
    %v29 = vld [vmem:[%s0 + $0x18] sm:$0xff]
    %v30 = vld [vmem:[%s0 + $0x20] sm:$0xff]
    %v31 = vld [vmem:[%s0 + $0x28] sm:$0xff]
    %v32 = vpack.c.bf16 %v26, %v26
    %v33 = vpack.c.bf16 %v27, %v27
    %v34 = vpack.c.bf16 %v28, %v28
    %v35 = vpack.c.bf16 %v29, %v29
    %v36 = vpack.c.bf16 %v30, %v30
    %v37 = vpack.c.bf16 %v31, %v31
    %s38 = scalar_lea.vmem %s2, 72
    %v39 = vld [vmem:[%s38] sm:$0xf]
    %s40 = scalar_lea.vmem %s2, 76
    %v41 = vld [vmem:[%s40] sm:$0xf]
    %48 = vrot.lane.b32.xlu0 %v32, 18
    %v49 = vpop.permute.xlu0 %48
    %50 = vrot.lane.b32.xlu0 %v33, 18
    %v51 = vpop.permute.xlu0 %50
    %52 = vrot.lane.b32.xlu0 %v34, 18
    %v53 = vpop.permute.xlu0 %52
    %54 = vrot.lane.b32.xlu0 %v35, 18
    %v55 = vpop.permute.xlu0 %54
    %56 = vrot.lane.b32.xlu0 %v36, 18
    %v57 = vpop.permute.xlu0 %56
    %58 = vrot.lane.b32.xlu0 %v37, 18
    %v59 = vpop.permute.xlu0 %58
    %vm60 = vcmask 146432
    %v61 = vsel %vm60, %v49, %v51
    %v62 = vsel %vm60, %v51, %v53
    %v63 = vsel %vm60, %v53, %v55
    %v64 = vsel %vm60, %v55, %v57
    %v65 = vsel %vm60, %v57, %v59
    %vm66 = vcmask 64512
    %v68 = vsel %vm66, %v41, 0
    %vm70 = vcmask 1043456
    %v72 = vsel %vm70, %v61, 0
    %v75 = vsel %vm70, %v62, 0
    %v78 = vsel %vm70, %v63, 0
    %v81 = vsel %vm70, %v64, 0
    %v84 = vsel %vm70, %v65, 0
    %v87 = vsel %vm70, %v59, 0
    %89 = vmatpush.bf16.msra.mxu0 0
    %90 = vmatpush.bf16.msra.mxu0 0
    %91 = vmatpush.bf16.msra.mxu0 0
    %92 = vmatpush.bf16.msra.mxu0 0
    %93 = vmatpush.bf16.msra.mxu0 0
    %94 = vmatpush.bf16.msra.mxu0 0
    %95 = vmatpush.bf16.msra.mxu0 0
    %96 = vmatpush.bf16.msra.mxu0 %v72
    %97 = vmatmul.bf16.gmra.mxu0 %v68
    %v98 = vpop.f32.mrf.mxu0
    %v99 = vadd.f32 0.0, %v98
    %v100 = vpop.f32.mrf.mxu0
    %101 = vdwg.mxu0
    %102 = vmatpush.bf16.msra.mxu0 0
    %103 = vmatpush.bf16.msra.mxu0 0
    %104 = vmatpush.bf16.msra.mxu0 0
    %105 = vmatpush.bf16.msra.mxu0 0
    %106 = vmatpush.bf16.msra.mxu0 0
    %107 = vmatpush.bf16.msra.mxu0 0
    %108 = vmatpush.bf16.msra.mxu0 0
    %109 = vmatpush.bf16.msra.mxu0 %v75
    %110 = vmatmul.bf16.gmra.mxu0 %v68
    %v111 = vpop.f32.mrf.mxu0
    %v112 = vadd.f32 0.0, %v111
    %v113 = vpop.f32.mrf.mxu0
    %114 = vdwg.mxu0
    %115 = vmatpush.bf16.msra.mxu0 0
    %116 = vmatpush.bf16.msra.mxu0 0
    %117 = vmatpush.bf16.msra.mxu0 0
    %118 = vmatpush.bf16.msra.mxu0 0
    %119 = vmatpush.bf16.msra.mxu0 0
    %120 = vmatpush.bf16.msra.mxu0 0
    %121 = vmatpush.bf16.msra.mxu0 0
    %122 = vmatpush.bf16.msra.mxu0 %v78
    %123 = vmatmul.bf16.gmra.mxu0 %v68
    %v124 = vpop.f32.mrf.mxu0
    %v125 = vadd.f32 0.0, %v124
    %v126 = vpop.f32.mrf.mxu0
    %127 = vdwg.mxu0
    %128 = vmatpush.bf16.msra.mxu0 0
    %129 = vmatpush.bf16.msra.mxu0 0
    %130 = vmatpush.bf16.msra.mxu0 0
    %131 = vmatpush.bf16.msra.mxu0 0
    %132 = vmatpush.bf16.msra.mxu0 0
    %133 = vmatpush.bf16.msra.mxu0 0
    %134 = vmatpush.bf16.msra.mxu0 0
    %135 = vmatpush.bf16.msra.mxu0 %v81
    %136 = vmatmul.bf16.gmra.mxu0 %v68
    %v137 = vpop.f32.mrf.mxu0
    %v138 = vadd.f32 0.0, %v137
    %v139 = vpop.f32.mrf.mxu0
    %140 = vdwg.mxu0
    %141 = vmatpush.bf16.msra.mxu0 0
    %142 = vmatpush.bf16.msra.mxu0 0
    %143 = vmatpush.bf16.msra.mxu0 0
    %144 = vmatpush.bf16.msra.mxu0 0
    %145 = vmatpush.bf16.msra.mxu0 0
    %146 = vmatpush.bf16.msra.mxu0 0
    %147 = vmatpush.bf16.msra.mxu0 0
    %148 = vmatpush.bf16.msra.mxu0 %v84
    %149 = vmatmul.bf16.gmra.mxu0 %v68
    %v150 = vpop.f32.mrf.mxu0
    %v151 = vadd.f32 0.0, %v150
    %v152 = vpop.f32.mrf.mxu0
    %153 = vdwg.mxu0
    %154 = vmatpush.bf16.msra.mxu0 0
    %155 = vmatpush.bf16.msra.mxu0 0
    %156 = vmatpush.bf16.msra.mxu0 0
    %157 = vmatpush.bf16.msra.mxu0 0
    %158 = vmatpush.bf16.msra.mxu0 0
    %159 = vmatpush.bf16.msra.mxu0 0
    %160 = vmatpush.bf16.msra.mxu0 0
    %161 = vmatpush.bf16.msra.mxu0 %v87
    %162 = vmatmul.bf16.gmra.mxu0 %v68
    %v163 = vpop.f32.mrf.mxu0
    %v164 = vadd.f32 0.0, %v163
    %v165 = vpop.f32.mrf.mxu0
    %166 = vdwg.mxu0
    %167 = vrot.lane.b32.xlu0 %v32, 19
    %v168 = vpop.permute.xlu0 %167
    %169 = vrot.lane.b32.xlu0 %v33, 19
    %v170 = vpop.permute.xlu0 %169
    %171 = vrot.lane.b32.xlu0 %v34, 19
    %v172 = vpop.permute.xlu0 %171
    %173 = vrot.lane.b32.xlu0 %v35, 19
    %v174 = vpop.permute.xlu0 %173
    %175 = vrot.lane.b32.xlu0 %v36, 19
    %v176 = vpop.permute.xlu0 %175
    %177 = vrot.lane.b32.xlu0 %v37, 19
    %v178 = vpop.permute.xlu0 %177
    %vm179 = vcmask 154624
    %v180 = vsel %vm179, %v168, %v170
    %v181 = vsel %vm179, %v170, %v172
    %v182 = vsel %vm179, %v172, %v174
    %v183 = vsel %vm179, %v174, %v176
    %v184 = vsel %vm179, %v176, %v178
    %v186 = vsel %vm66, %v39, 0
    %v189 = vsel %vm70, %v180, 0
    %v192 = vsel %vm70, %v181, 0
    %v195 = vsel %vm70, %v182, 0
    %v198 = vsel %vm70, %v183, 0
    %v201 = vsel %vm70, %v184, 0
    %v204 = vsel %vm70, %v178, 0
    %206 = vmatpush.bf16.msra.mxu0 0
    %207 = vmatpush.bf16.msra.mxu0 0
    %208 = vmatpush.bf16.msra.mxu0 0
    %209 = vmatpush.bf16.msra.mxu0 0
    %210 = vmatpush.bf16.msra.mxu0 0
    %211 = vmatpush.bf16.msra.mxu0 0
    %212 = vmatpush.bf16.msra.mxu0 0
    %213 = vmatpush.bf16.msra.mxu0 %v189
    %214 = vmatmul.bf16.gmra.mxu0 %v186
    %v215 = vpop.f32.mrf.mxu0
    %v216 = vadd.f32 %v99, %v215
    %v217 = vpop.f32.mrf.mxu0
    %218 = vdwg.mxu0
    %219 = vmatpush.bf16.msra.mxu0 0
    %220 = vmatpush.bf16.msra.mxu0 0
    %221 = vmatpush.bf16.msra.mxu0 0
    %222 = vmatpush.bf16.msra.mxu0 0
    %223 = vmatpush.bf16.msra.mxu0 0
    %224 = vmatpush.bf16.msra.mxu0 0
    %225 = vmatpush.bf16.msra.mxu0 0
    %226 = vmatpush.bf16.msra.mxu0 %v192
    %227 = vmatmul.bf16.gmra.mxu0 %v186
    %v228 = vpop.f32.mrf.mxu0
    %v229 = vadd.f32 %v112, %v228
    %v230 = vpop.f32.mrf.mxu0
    %231 = vdwg.mxu0
    %232 = vmatpush.bf16.msra.mxu0 0
    %233 = vmatpush.bf16.msra.mxu0 0
    %234 = vmatpush.bf16.msra.mxu0 0
    %235 = vmatpush.bf16.msra.mxu0 0
    %236 = vmatpush.bf16.msra.mxu0 0
    %237 = vmatpush.bf16.msra.mxu0 0
    %238 = vmatpush.bf16.msra.mxu0 0
    %239 = vmatpush.bf16.msra.mxu0 %v195
    %240 = vmatmul.bf16.gmra.mxu0 %v186
    %v241 = vpop.f32.mrf.mxu0
    %v242 = vadd.f32 %v125, %v241
    %v243 = vpop.f32.mrf.mxu0
    %244 = vdwg.mxu0
    %245 = vmatpush.bf16.msra.mxu0 0
    %246 = vmatpush.bf16.msra.mxu0 0
    %247 = vmatpush.bf16.msra.mxu0 0
    %248 = vmatpush.bf16.msra.mxu0 0
    %249 = vmatpush.bf16.msra.mxu0 0
    %250 = vmatpush.bf16.msra.mxu0 0
    %251 = vmatpush.bf16.msra.mxu0 0
    %252 = vmatpush.bf16.msra.mxu0 %v198
    %253 = vmatmul.bf16.gmra.mxu0 %v186
    %v254 = vpop.f32.mrf.mxu0
    %v255 = vadd.f32 %v138, %v254
    %v256 = vpop.f32.mrf.mxu0
    %257 = vdwg.mxu0
    %258 = vmatpush.bf16.msra.mxu0 0
    %259 = vmatpush.bf16.msra.mxu0 0
    %260 = vmatpush.bf16.msra.mxu0 0
    %261 = vmatpush.bf16.msra.mxu0 0
    %262 = vmatpush.bf16.msra.mxu0 0
    %263 = vmatpush.bf16.msra.mxu0 0
    %264 = vmatpush.bf16.msra.mxu0 0
    %265 = vmatpush.bf16.msra.mxu0 %v201
    %266 = vmatmul.bf16.gmra.mxu0 %v186
    %v267 = vpop.f32.mrf.mxu0
    %v268 = vadd.f32 %v151, %v267
    %v269 = vpop.f32.mrf.mxu0
    %270 = vdwg.mxu0
    %271 = vmatpush.bf16.msra.mxu0 0
    %272 = vmatpush.bf16.msra.mxu0 0
    %273 = vmatpush.bf16.msra.mxu0 0
    %274 = vmatpush.bf16.msra.mxu0 0
    %275 = vmatpush.bf16.msra.mxu0 0
    %276 = vmatpush.bf16.msra.mxu0 0
    %277 = vmatpush.bf16.msra.mxu0 0
    %278 = vmatpush.bf16.msra.mxu0 %v204
    %279 = vmatmul.bf16.gmra.mxu0 %v186
    %v280 = vpop.f32.mrf.mxu0
    %v281 = vadd.f32 %v164, %v280
    %v282 = vpop.f32.mrf.mxu0
    %283 = vdwg.mxu0
    %s284 = scalar_lea.vmem %s2, 80
    %v285 = vld [vmem:[%s284] sm:$0xf]
    %286 = vrot.lane.b32.xlu0 %v32, 17
    %v287 = vpop.permute.xlu0 %286
    %288 = vrot.lane.b32.xlu0 %v33, 17
    %v289 = vpop.permute.xlu0 %288
    %290 = vrot.lane.b32.xlu0 %v34, 17
    %v291 = vpop.permute.xlu0 %290
    %292 = vrot.lane.b32.xlu0 %v35, 17
    %v293 = vpop.permute.xlu0 %292
    %294 = vrot.lane.b32.xlu0 %v36, 17
    %v295 = vpop.permute.xlu0 %294
    %296 = vrot.lane.b32.xlu0 %v37, 17
    %v297 = vpop.permute.xlu0 %296
    %vm298 = vcmask 138240
    %v299 = vsel %vm298, %v287, %v289
    %v300 = vsel %vm298, %v289, %v291
    %v301 = vsel %vm298, %v291, %v293
    %v302 = vsel %vm298, %v293, %v295
    %v303 = vsel %vm298, %v295, %v297
    %v305 = vsel %vm66, %v285, 0
    %v308 = vsel %vm70, %v299, 0
    %v311 = vsel %vm70, %v300, 0
    %v314 = vsel %vm70, %v301, 0
    %v317 = vsel %vm70, %v302, 0
    %v320 = vsel %vm70, %v303, 0
    %v323 = vsel %vm70, %v297, 0
    %325 = vmatpush.bf16.msra.mxu0 0
    %326 = vmatpush.bf16.msra.mxu0 0
    %327 = vmatpush.bf16.msra.mxu0 0
    %328 = vmatpush.bf16.msra.mxu0 0
    %329 = vmatpush.bf16.msra.mxu0 0
    %330 = vmatpush.bf16.msra.mxu0 0
    %331 = vmatpush.bf16.msra.mxu0 0
    %332 = vmatpush.bf16.msra.mxu0 %v308
    %333 = vmatmul.bf16.gmra.mxu0 %v305
    %v334 = vpop.f32.mrf.mxu0
    %v335 = vadd.f32 0.0, %v334
    %v336 = vpop.f32.mrf.mxu0
    %337 = vdwg.mxu0
    %338 = vmatpush.bf16.msra.mxu0 0
    %339 = vmatpush.bf16.msra.mxu0 0
    %340 = vmatpush.bf16.msra.mxu0 0
    %341 = vmatpush.bf16.msra.mxu0 0
    %342 = vmatpush.bf16.msra.mxu0 0
    %343 = vmatpush.bf16.msra.mxu0 0
    %344 = vmatpush.bf16.msra.mxu0 0
    %345 = vmatpush.bf16.msra.mxu0 %v311
    %346 = vmatmul.bf16.gmra.mxu0 %v305
    %v347 = vpop.f32.mrf.mxu0
    %v348 = vadd.f32 0.0, %v347
    %v349 = vpop.f32.mrf.mxu0
    %350 = vdwg.mxu0
    %351 = vmatpush.bf16.msra.mxu0 0
    %352 = vmatpush.bf16.msra.mxu0 0
    %353 = vmatpush.bf16.msra.mxu0 0
    %354 = vmatpush.bf16.msra.mxu0 0
    %355 = vmatpush.bf16.msra.mxu0 0
    %356 = vmatpush.bf16.msra.mxu0 0
    %357 = vmatpush.bf16.msra.mxu0 0
    %358 = vmatpush.bf16.msra.mxu0 %v314
    %359 = vmatmul.bf16.gmra.mxu0 %v305
    %v360 = vpop.f32.mrf.mxu0
    %v361 = vadd.f32 0.0, %v360
    %v362 = vpop.f32.mrf.mxu0
    %363 = vdwg.mxu0
    %364 = vmatpush.bf16.msra.mxu0 0
    %365 = vmatpush.bf16.msra.mxu0 0
    %366 = vmatpush.bf16.msra.mxu0 0
    %367 = vmatpush.bf16.msra.mxu0 0
    %368 = vmatpush.bf16.msra.mxu0 0
    %369 = vmatpush.bf16.msra.mxu0 0
    %370 = vmatpush.bf16.msra.mxu0 0
    %371 = vmatpush.bf16.msra.mxu0 %v317
    %372 = vmatmul.bf16.gmra.mxu0 %v305
    %v373 = vpop.f32.mrf.mxu0
    %v374 = vadd.f32 0.0, %v373
    %v375 = vpop.f32.mrf.mxu0
    %376 = vdwg.mxu0
    %377 = vmatpush.bf16.msra.mxu0 0
    %378 = vmatpush.bf16.msra.mxu0 0
    %379 = vmatpush.bf16.msra.mxu0 0
    %380 = vmatpush.bf16.msra.mxu0 0
    %381 = vmatpush.bf16.msra.mxu0 0
    %382 = vmatpush.bf16.msra.mxu0 0
    %383 = vmatpush.bf16.msra.mxu0 0
    %384 = vmatpush.bf16.msra.mxu0 %v320
    %385 = vmatmul.bf16.gmra.mxu0 %v305
    %v386 = vpop.f32.mrf.mxu0
    %v387 = vadd.f32 0.0, %v386
    %v388 = vpop.f32.mrf.mxu0
    %389 = vdwg.mxu0
    %390 = vmatpush.bf16.msra.mxu0 0
    %391 = vmatpush.bf16.msra.mxu0 0
    %392 = vmatpush.bf16.msra.mxu0 0
    %393 = vmatpush.bf16.msra.mxu0 0
    %394 = vmatpush.bf16.msra.mxu0 0
    %395 = vmatpush.bf16.msra.mxu0 0
    %396 = vmatpush.bf16.msra.mxu0 0
    %397 = vmatpush.bf16.msra.mxu0 %v323
    %398 = vmatmul.bf16.gmra.mxu0 %v305
    %v399 = vpop.f32.mrf.mxu0
    %v400 = vadd.f32 0.0, %v399
    %v401 = vpop.f32.mrf.mxu0
    %402 = vdwg.mxu0
    %v403 = vadd.f32 %v216, %v335
    %v404 = vadd.f32 %v229, %v348
    %v405 = vadd.f32 %v242, %v361
    %v406 = vadd.f32 %v255, %v374
    %v407 = vadd.f32 %v268, %v387
    %v408 = vadd.f32 %v281, %v400
    %v409 = vld [vmem:[%s0] sm:$0xff]
    %v410 = vld [vmem:[%s0 + $0x8] sm:$0xff]
    %v411 = vld [vmem:[%s0 + $0x10] sm:$0xff]
    %v412 = vld [vmem:[%s0 + $0x18] sm:$0xff]
    %v413 = vld [vmem:[%s0 + $0x20] sm:$0xff]
    %v414 = vld [vmem:[%s0 + $0x28] sm:$0xff]
    %v415 = vld [vmem:[%s0 + $0x30] sm:$0xff]
    %v416 = vpack.c.bf16 %v409, %v409
    %v417 = vpack.c.bf16 %v410, %v410
    %v418 = vpack.c.bf16 %v411, %v411
    %v419 = vpack.c.bf16 %v412, %v412
    %v420 = vpack.c.bf16 %v413, %v413
    %v421 = vpack.c.bf16 %v414, %v414
    %v422 = vpack.c.bf16 %v415, %v415
    %s423 = scalar_lea.vmem %s2, 84
    %v424 = vld [vmem:[%s423] sm:$0xf]
    %432 = vrot.lane.b32.xlu0 %v416, 1
    %v433 = vpop.permute.xlu0 %432
    %434 = vrot.lane.b32.xlu0 %v417, 1
    %v435 = vpop.permute.xlu0 %434
    %436 = vrot.lane.b32.xlu0 %v418, 1
    %v437 = vpop.permute.xlu0 %436
    %438 = vrot.lane.b32.xlu0 %v419, 1
    %v439 = vpop.permute.xlu0 %438
    %440 = vrot.lane.b32.xlu0 %v420, 1
    %v441 = vpop.permute.xlu0 %440
    %442 = vrot.lane.b32.xlu0 %v421, 1
    %v443 = vpop.permute.xlu0 %442
    %444 = vrot.lane.b32.xlu0 %v422, 1
    %v445 = vpop.permute.xlu0 %444
    %vm446 = vcmask 7168
    %v447 = vsel %vm446, %v433, %v435
    %v448 = vsel %vm446, %v435, %v437
    %v449 = vsel %vm446, %v437, %v439
    %v450 = vsel %vm446, %v439, %v441
    %v451 = vsel %vm446, %v441, %v443
    %v452 = vsel %vm446, %v443, %v445
    %v454 = vsel %vm66, %v424, 0
    %v457 = vsel %vm70, %v447, 0
    %v460 = vsel %vm70, %v448, 0
    %v463 = vsel %vm70, %v449, 0
    %v466 = vsel %vm70, %v450, 0
    %v469 = vsel %vm70, %v451, 0
    %v472 = vsel %vm70, %v452, 0
    %474 = vmatpush.bf16.msra.mxu0 0
    %475 = vmatpush.bf16.msra.mxu0 0
    %476 = vmatpush.bf16.msra.mxu0 0
    %477 = vmatpush.bf16.msra.mxu0 0
    %478 = vmatpush.bf16.msra.mxu0 0
    %479 = vmatpush.bf16.msra.mxu0 0
    %480 = vmatpush.bf16.msra.mxu0 0
    %481 = vmatpush.bf16.msra.mxu0 %v457
    %482 = vmatmul.bf16.gmra.mxu0 %v454
    %v483 = vpop.f32.mrf.mxu0
    %v484 = vadd.f32 0.0, %v483
    %v485 = vpop.f32.mrf.mxu0
    %486 = vdwg.mxu0
    %487 = vmatpush.bf16.msra.mxu0 0
    %488 = vmatpush.bf16.msra.mxu0 0
    %489 = vmatpush.bf16.msra.mxu0 0
    %490 = vmatpush.bf16.msra.mxu0 0
    %491 = vmatpush.bf16.msra.mxu0 0
    %492 = vmatpush.bf16.msra.mxu0 0
    %493 = vmatpush.bf16.msra.mxu0 0
    %494 = vmatpush.bf16.msra.mxu0 %v460
    %495 = vmatmul.bf16.gmra.mxu0 %v454
    %v496 = vpop.f32.mrf.mxu0
    %v497 = vadd.f32 0.0, %v496
    %v498 = vpop.f32.mrf.mxu0
    %499 = vdwg.mxu0
    %500 = vmatpush.bf16.msra.mxu0 0
    %501 = vmatpush.bf16.msra.mxu0 0
    %502 = vmatpush.bf16.msra.mxu0 0
    %503 = vmatpush.bf16.msra.mxu0 0
    %504 = vmatpush.bf16.msra.mxu0 0
    %505 = vmatpush.bf16.msra.mxu0 0
    %506 = vmatpush.bf16.msra.mxu0 0
    %507 = vmatpush.bf16.msra.mxu0 %v463
    %508 = vmatmul.bf16.gmra.mxu0 %v454
    %v509 = vpop.f32.mrf.mxu0
    %v510 = vadd.f32 0.0, %v509
    %v511 = vpop.f32.mrf.mxu0
    %512 = vdwg.mxu0
    %513 = vmatpush.bf16.msra.mxu0 0
    %514 = vmatpush.bf16.msra.mxu0 0
    %515 = vmatpush.bf16.msra.mxu0 0
    %516 = vmatpush.bf16.msra.mxu0 0
    %517 = vmatpush.bf16.msra.mxu0 0
    %518 = vmatpush.bf16.msra.mxu0 0
    %519 = vmatpush.bf16.msra.mxu0 0
    %520 = vmatpush.bf16.msra.mxu0 %v466
    %521 = vmatmul.bf16.gmra.mxu0 %v454
    %v522 = vpop.f32.mrf.mxu0
    %v523 = vadd.f32 0.0, %v522
    %v524 = vpop.f32.mrf.mxu0
    %525 = vdwg.mxu0
    %526 = vmatpush.bf16.msra.mxu0 0
    %527 = vmatpush.bf16.msra.mxu0 0
    %528 = vmatpush.bf16.msra.mxu0 0
    %529 = vmatpush.bf16.msra.mxu0 0
    %530 = vmatpush.bf16.msra.mxu0 0
    %531 = vmatpush.bf16.msra.mxu0 0
    %532 = vmatpush.bf16.msra.mxu0 0
    %533 = vmatpush.bf16.msra.mxu0 %v469
    %534 = vmatmul.bf16.gmra.mxu0 %v454
    %v535 = vpop.f32.mrf.mxu0
    %v536 = vadd.f32 0.0, %v535
    %v537 = vpop.f32.mrf.mxu0
    %538 = vdwg.mxu0
    %539 = vmatpush.bf16.msra.mxu0 0
    %540 = vmatpush.bf16.msra.mxu0 0
    %541 = vmatpush.bf16.msra.mxu0 0
    %542 = vmatpush.bf16.msra.mxu0 0
    %543 = vmatpush.bf16.msra.mxu0 0
    %544 = vmatpush.bf16.msra.mxu0 0
    %545 = vmatpush.bf16.msra.mxu0 0
    %546 = vmatpush.bf16.msra.mxu0 %v472
    %547 = vmatmul.bf16.gmra.mxu0 %v454
    %v548 = vpop.f32.mrf.mxu0
    %v549 = vadd.f32 0.0, %v548
    %v550 = vpop.f32.mrf.mxu0
    %551 = vdwg.mxu0
    %v552 = vadd.f32 %v403, %v484
    %v553 = vadd.f32 %v404, %v497
    %v554 = vadd.f32 %v405, %v510
    %v555 = vadd.f32 %v406, %v523
    %v556 = vadd.f32 %v407, %v536
    %v557 = vadd.f32 %v408, %v549
    %s558 = scalar_lea.vmem %s2, 88
    %v559 = vld [vmem:[%s558] sm:$0xf]
    %v561 = vsel %vm66, %v559, 0
    %v564 = vsel %vm70, %v417, 0
    %v567 = vsel %vm70, %v418, 0
    %v570 = vsel %vm70, %v419, 0
    %v573 = vsel %vm70, %v420, 0
    %v576 = vsel %vm70, %v421, 0
    %v579 = vsel %vm70, %v422, 0
    %581 = vmatpush.bf16.msra.mxu0 0
    %582 = vmatpush.bf16.msra.mxu0 0
    %583 = vmatpush.bf16.msra.mxu0 0
    %584 = vmatpush.bf16.msra.mxu0 0
    %585 = vmatpush.bf16.msra.mxu0 0
    %586 = vmatpush.bf16.msra.mxu0 0
    %587 = vmatpush.bf16.msra.mxu0 0
    %588 = vmatpush.bf16.msra.mxu0 %v564
    %589 = vmatmul.bf16.gmra.mxu0 %v561
    %v590 = vpop.f32.mrf.mxu0
    %v591 = vadd.f32 0.0, %v590
    %v592 = vpop.f32.mrf.mxu0
    %593 = vdwg.mxu0
    %594 = vmatpush.bf16.msra.mxu0 0
    %595 = vmatpush.bf16.msra.mxu0 0
    %596 = vmatpush.bf16.msra.mxu0 0
    %597 = vmatpush.bf16.msra.mxu0 0
    %598 = vmatpush.bf16.msra.mxu0 0
    %599 = vmatpush.bf16.msra.mxu0 0
    %600 = vmatpush.bf16.msra.mxu0 0
    %601 = vmatpush.bf16.msra.mxu0 %v567
    %602 = vmatmul.bf16.gmra.mxu0 %v561
    %v603 = vpop.f32.mrf.mxu0
    %v604 = vadd.f32 0.0, %v603
    %v605 = vpop.f32.mrf.mxu0
    %606 = vdwg.mxu0
    %607 = vmatpush.bf16.msra.mxu0 0
    %608 = vmatpush.bf16.msra.mxu0 0
    %609 = vmatpush.bf16.msra.mxu0 0
    %610 = vmatpush.bf16.msra.mxu0 0
    %611 = vmatpush.bf16.msra.mxu0 0
    %612 = vmatpush.bf16.msra.mxu0 0
    %613 = vmatpush.bf16.msra.mxu0 0
    %614 = vmatpush.bf16.msra.mxu0 %v570
    %615 = vmatmul.bf16.gmra.mxu0 %v561
    %v616 = vpop.f32.mrf.mxu0
    %v617 = vadd.f32 0.0, %v616
    %v618 = vpop.f32.mrf.mxu0
    %619 = vdwg.mxu0
    %620 = vmatpush.bf16.msra.mxu0 0
    %621 = vmatpush.bf16.msra.mxu0 0
    %622 = vmatpush.bf16.msra.mxu0 0
    %623 = vmatpush.bf16.msra.mxu0 0
    %624 = vmatpush.bf16.msra.mxu0 0
    %625 = vmatpush.bf16.msra.mxu0 0
    %626 = vmatpush.bf16.msra.mxu0 0
    %627 = vmatpush.bf16.msra.mxu0 %v573
    %628 = vmatmul.bf16.gmra.mxu0 %v561
    %v629 = vpop.f32.mrf.mxu0
    %v630 = vadd.f32 0.0, %v629
    %v631 = vpop.f32.mrf.mxu0
    %632 = vdwg.mxu0
    %633 = vmatpush.bf16.msra.mxu0 0
    %634 = vmatpush.bf16.msra.mxu0 0
    %635 = vmatpush.bf16.msra.mxu0 0
    %636 = vmatpush.bf16.msra.mxu0 0
    %637 = vmatpush.bf16.msra.mxu0 0
    %638 = vmatpush.bf16.msra.mxu0 0
    %639 = vmatpush.bf16.msra.mxu0 0
    %640 = vmatpush.bf16.msra.mxu0 %v576
    %641 = vmatmul.bf16.gmra.mxu0 %v561
    %v642 = vpop.f32.mrf.mxu0
    %v643 = vadd.f32 0.0, %v642
    %v644 = vpop.f32.mrf.mxu0
    %645 = vdwg.mxu0
    %646 = vmatpush.bf16.msra.mxu0 0
    %647 = vmatpush.bf16.msra.mxu0 0
    %648 = vmatpush.bf16.msra.mxu0 0
    %649 = vmatpush.bf16.msra.mxu0 0
    %650 = vmatpush.bf16.msra.mxu0 0
    %651 = vmatpush.bf16.msra.mxu0 0
    %652 = vmatpush.bf16.msra.mxu0 0
    %653 = vmatpush.bf16.msra.mxu0 %v579
    %654 = vmatmul.bf16.gmra.mxu0 %v561
    %v655 = vpop.f32.mrf.mxu0
    %v656 = vadd.f32 0.0, %v655
    %v657 = vpop.f32.mrf.mxu0
    %658 = vdwg.mxu0
    %v659 = vadd.f32 %v552, %v591
    %v660 = vadd.f32 %v553, %v604
    %v661 = vadd.f32 %v554, %v617
    %v662 = vadd.f32 %v555, %v630
    %v663 = vadd.f32 %v556, %v643
    %v664 = vadd.f32 %v557, %v656
    %s665 = scalar_lea.vmem %s2, 92
    %v666 = vld [vmem:[%s665] sm:$0xf]
    %667 = vrot.lane.b32.xlu0 %v417, 127
    %v668 = vpop.permute.xlu0 %667
    %669 = vrot.lane.b32.xlu0 %v418, 127
    %v670 = vpop.permute.xlu0 %669
    %671 = vrot.lane.b32.xlu0 %v419, 127
    %v672 = vpop.permute.xlu0 %671
    %673 = vrot.lane.b32.xlu0 %v420, 127
    %v674 = vpop.permute.xlu0 %673
    %675 = vrot.lane.b32.xlu0 %v421, 127
    %v676 = vpop.permute.xlu0 %675
    %677 = vrot.lane.b32.xlu0 %v422, 127
    %v678 = vpop.permute.xlu0 %677
    %vm679 = vcmask 1039360
    %v680 = vsel %vm679, %v668, %v670
    %v681 = vsel %vm679, %v670, %v672
    %v682 = vsel %vm679, %v672, %v674
    %v683 = vsel %vm679, %v674, %v676
    %v684 = vsel %vm679, %v676, %v678
    %v686 = vsel %vm66, %v666, 0
    %v689 = vsel %vm70, %v680, 0
    %v692 = vsel %vm70, %v681, 0
    %v695 = vsel %vm70, %v682, 0
    %v698 = vsel %vm70, %v683, 0
    %v701 = vsel %vm70, %v684, 0
    %v704 = vsel %vm70, %v678, 0
    %706 = vmatpush.bf16.msra.mxu0 0
    %707 = vmatpush.bf16.msra.mxu0 0
    %708 = vmatpush.bf16.msra.mxu0 0
    %709 = vmatpush.bf16.msra.mxu0 0
    %710 = vmatpush.bf16.msra.mxu0 0
    %711 = vmatpush.bf16.msra.mxu0 0
    %712 = vmatpush.bf16.msra.mxu0 0
    %713 = vmatpush.bf16.msra.mxu0 %v689
    %714 = vmatmul.bf16.gmra.mxu0 %v686
    %v715 = vpop.f32.mrf.mxu0
    %v716 = vadd.f32 0.0, %v715
    %v717 = vpop.f32.mrf.mxu0
    %718 = vdwg.mxu0
    %719 = vmatpush.bf16.msra.mxu0 0
    %720 = vmatpush.bf16.msra.mxu0 0
    %721 = vmatpush.bf16.msra.mxu0 0
    %722 = vmatpush.bf16.msra.mxu0 0
    %723 = vmatpush.bf16.msra.mxu0 0
    %724 = vmatpush.bf16.msra.mxu0 0
    %725 = vmatpush.bf16.msra.mxu0 0
    %726 = vmatpush.bf16.msra.mxu0 %v692
    %727 = vmatmul.bf16.gmra.mxu0 %v686
    %v728 = vpop.f32.mrf.mxu0
    %v729 = vadd.f32 0.0, %v728
    %v730 = vpop.f32.mrf.mxu0
    %731 = vdwg.mxu0
    %732 = vmatpush.bf16.msra.mxu0 0
    %733 = vmatpush.bf16.msra.mxu0 0
    %734 = vmatpush.bf16.msra.mxu0 0
    %735 = vmatpush.bf16.msra.mxu0 0
    %736 = vmatpush.bf16.msra.mxu0 0
    %737 = vmatpush.bf16.msra.mxu0 0
    %738 = vmatpush.bf16.msra.mxu0 0
    %739 = vmatpush.bf16.msra.mxu0 %v695
    %740 = vmatmul.bf16.gmra.mxu0 %v686
    %v741 = vpop.f32.mrf.mxu0
    %v742 = vadd.f32 0.0, %v741
    %v743 = vpop.f32.mrf.mxu0
    %744 = vdwg.mxu0
    %745 = vmatpush.bf16.msra.mxu0 0
    %746 = vmatpush.bf16.msra.mxu0 0
    %747 = vmatpush.bf16.msra.mxu0 0
    %748 = vmatpush.bf16.msra.mxu0 0
    %749 = vmatpush.bf16.msra.mxu0 0
    %750 = vmatpush.bf16.msra.mxu0 0
    %751 = vmatpush.bf16.msra.mxu0 0
    %752 = vmatpush.bf16.msra.mxu0 %v698
    %753 = vmatmul.bf16.gmra.mxu0 %v686
    %v754 = vpop.f32.mrf.mxu0
    %v755 = vadd.f32 0.0, %v754
    %v756 = vpop.f32.mrf.mxu0
    %757 = vdwg.mxu0
    %758 = vmatpush.bf16.msra.mxu0 0
    %759 = vmatpush.bf16.msra.mxu0 0
    %760 = vmatpush.bf16.msra.mxu0 0
    %761 = vmatpush.bf16.msra.mxu0 0
    %762 = vmatpush.bf16.msra.mxu0 0
    %763 = vmatpush.bf16.msra.mxu0 0
    %764 = vmatpush.bf16.msra.mxu0 0
    %765 = vmatpush.bf16.msra.mxu0 %v701
    %766 = vmatmul.bf16.gmra.mxu0 %v686
    %v767 = vpop.f32.mrf.mxu0
    %v768 = vadd.f32 0.0, %v767
    %v769 = vpop.f32.mrf.mxu0
    %770 = vdwg.mxu0
    %771 = vmatpush.bf16.msra.mxu0 0
    %772 = vmatpush.bf16.msra.mxu0 0
    %773 = vmatpush.bf16.msra.mxu0 0
    %774 = vmatpush.bf16.msra.mxu0 0
    %775 = vmatpush.bf16.msra.mxu0 0
    %776 = vmatpush.bf16.msra.mxu0 0
    %777 = vmatpush.bf16.msra.mxu0 0
    %778 = vmatpush.bf16.msra.mxu0 %v704
    %779 = vmatmul.bf16.gmra.mxu0 %v686
    %v780 = vpop.f32.mrf.mxu0
    %v781 = vadd.f32 0.0, %v780
    %v782 = vpop.f32.mrf.mxu0
    %783 = vdwg.mxu0
    %v784 = vadd.f32 %v659, %v716
    %v785 = vadd.f32 %v660, %v729
    %v786 = vadd.f32 %v661, %v742
    %v787 = vadd.f32 %v662, %v755
    %v788 = vadd.f32 %v663, %v768
    %v789 = vadd.f32 %v664, %v781
    %s790 = scalar_lea.vmem %s2, 96
    %v791 = vld [vmem:[%s790] sm:$0xf]
    %792 = vrot.lane.b32.xlu0 %v417, 111
    %v793 = vpop.permute.xlu0 %792
    %794 = vrot.lane.b32.xlu0 %v418, 111
    %v795 = vpop.permute.xlu0 %794
    %796 = vrot.lane.b32.xlu0 %v419, 111
    %v797 = vpop.permute.xlu0 %796
    %798 = vrot.lane.b32.xlu0 %v420, 111
    %v799 = vpop.permute.xlu0 %798
    %800 = vrot.lane.b32.xlu0 %v421, 111
    %v801 = vpop.permute.xlu0 %800
    %802 = vrot.lane.b32.xlu0 %v422, 111
    %v803 = vpop.permute.xlu0 %802
    %vm804 = vcmask 908288
    %v805 = vsel %vm804, %v793, %v795
    %v806 = vsel %vm804, %v795, %v797
    %v807 = vsel %vm804, %v797, %v799
    %v808 = vsel %vm804, %v799, %v801
    %v809 = vsel %vm804, %v801, %v803
    %v811 = vsel %vm66, %v791, 0
    %v814 = vsel %vm70, %v805, 0
    %v817 = vsel %vm70, %v806, 0
    %v820 = vsel %vm70, %v807, 0
    %v823 = vsel %vm70, %v808, 0
    %v826 = vsel %vm70, %v809, 0
    %v829 = vsel %vm70, %v803, 0
    %831 = vmatpush.bf16.msra.mxu0 0
    %832 = vmatpush.bf16.msra.mxu0 0
    %833 = vmatpush.bf16.msra.mxu0 0
    %834 = vmatpush.bf16.msra.mxu0 0
    %835 = vmatpush.bf16.msra.mxu0 0
    %836 = vmatpush.bf16.msra.mxu0 0
    %837 = vmatpush.bf16.msra.mxu0 0
    %838 = vmatpush.bf16.msra.mxu0 %v814
    %839 = vmatmul.bf16.gmra.mxu0 %v811
    %v840 = vpop.f32.mrf.mxu0
    %v841 = vadd.f32 0.0, %v840
    %v842 = vpop.f32.mrf.mxu0
    %843 = vdwg.mxu0
    %844 = vmatpush.bf16.msra.mxu0 0
    %845 = vmatpush.bf16.msra.mxu0 0
    %846 = vmatpush.bf16.msra.mxu0 0
    %847 = vmatpush.bf16.msra.mxu0 0
    %848 = vmatpush.bf16.msra.mxu0 0
    %849 = vmatpush.bf16.msra.mxu0 0
    %850 = vmatpush.bf16.msra.mxu0 0
    %851 = vmatpush.bf16.msra.mxu0 %v817
    %852 = vmatmul.bf16.gmra.mxu0 %v811
    %v853 = vpop.f32.mrf.mxu0
    %v854 = vadd.f32 0.0, %v853
    %v855 = vpop.f32.mrf.mxu0
    %856 = vdwg.mxu0
    %857 = vmatpush.bf16.msra.mxu0 0
    %858 = vmatpush.bf16.msra.mxu0 0
    %859 = vmatpush.bf16.msra.mxu0 0
    %860 = vmatpush.bf16.msra.mxu0 0
    %861 = vmatpush.bf16.msra.mxu0 0
    %862 = vmatpush.bf16.msra.mxu0 0
    %863 = vmatpush.bf16.msra.mxu0 0
    %864 = vmatpush.bf16.msra.mxu0 %v820
    %865 = vmatmul.bf16.gmra.mxu0 %v811
    %v866 = vpop.f32.mrf.mxu0
    %v867 = vadd.f32 0.0, %v866
    %v868 = vpop.f32.mrf.mxu0
    %869 = vdwg.mxu0
    %870 = vmatpush.bf16.msra.mxu0 0
    %871 = vmatpush.bf16.msra.mxu0 0
    %872 = vmatpush.bf16.msra.mxu0 0
    %873 = vmatpush.bf16.msra.mxu0 0
    %874 = vmatpush.bf16.msra.mxu0 0
    %875 = vmatpush.bf16.msra.mxu0 0
    %876 = vmatpush.bf16.msra.mxu0 0
    %877 = vmatpush.bf16.msra.mxu0 %v823
    %878 = vmatmul.bf16.gmra.mxu0 %v811
    %v879 = vpop.f32.mrf.mxu0
    %v880 = vadd.f32 0.0, %v879
    %v881 = vpop.f32.mrf.mxu0
    %882 = vdwg.mxu0
    %883 = vmatpush.bf16.msra.mxu0 0
    %884 = vmatpush.bf16.msra.mxu0 0
    %885 = vmatpush.bf16.msra.mxu0 0
    %886 = vmatpush.bf16.msra.mxu0 0
    %887 = vmatpush.bf16.msra.mxu0 0
    %888 = vmatpush.bf16.msra.mxu0 0
    %889 = vmatpush.bf16.msra.mxu0 0
    %890 = vmatpush.bf16.msra.mxu0 %v826
    %891 = vmatmul.bf16.gmra.mxu0 %v811
    %v892 = vpop.f32.mrf.mxu0
    %v893 = vadd.f32 0.0, %v892
    %v894 = vpop.f32.mrf.mxu0
    %895 = vdwg.mxu0
    %896 = vmatpush.bf16.msra.mxu0 0
    %897 = vmatpush.bf16.msra.mxu0 0
    %898 = vmatpush.bf16.msra.mxu0 0
    %899 = vmatpush.bf16.msra.mxu0 0
    %900 = vmatpush.bf16.msra.mxu0 0
    %901 = vmatpush.bf16.msra.mxu0 0
    %902 = vmatpush.bf16.msra.mxu0 0
    %903 = vmatpush.bf16.msra.mxu0 %v829
    %904 = vmatmul.bf16.gmra.mxu0 %v811
    %v905 = vpop.f32.mrf.mxu0
    %v906 = vadd.f32 0.0, %v905
    %v907 = vpop.f32.mrf.mxu0
    %908 = vdwg.mxu0
    %v909 = vadd.f32 %v784, %v841
    %v910 = vadd.f32 %v785, %v854
    %v911 = vadd.f32 %v786, %v867
    %v912 = vadd.f32 %v787, %v880
    %v913 = vadd.f32 %v788, %v893
    %v914 = vadd.f32 %v789, %v906
    %s915 = scalar_lea.vmem %s2, 100
    %v916 = vld [vmem:[%s915] sm:$0xf]
    %917 = vrot.lane.b32.xlu0 %v417, 110
    %v918 = vpop.permute.xlu0 %917
    %919 = vrot.lane.b32.xlu0 %v418, 110
    %v920 = vpop.permute.xlu0 %919
    %921 = vrot.lane.b32.xlu0 %v419, 110
    %v922 = vpop.permute.xlu0 %921
    %923 = vrot.lane.b32.xlu0 %v420, 110
    %v924 = vpop.permute.xlu0 %923
    %925 = vrot.lane.b32.xlu0 %v421, 110
    %v926 = vpop.permute.xlu0 %925
    %927 = vrot.lane.b32.xlu0 %v422, 110
    %v928 = vpop.permute.xlu0 %927
    %vm929 = vcmask 900096
    %v930 = vsel %vm929, %v918, %v920
    %v931 = vsel %vm929, %v920, %v922
    %v932 = vsel %vm929, %v922, %v924
    %v933 = vsel %vm929, %v924, %v926
    %v934 = vsel %vm929, %v926, %v928
    %v936 = vsel %vm66, %v916, 0
    %v939 = vsel %vm70, %v930, 0
    %v942 = vsel %vm70, %v931, 0
    %v945 = vsel %vm70, %v932, 0
    %v948 = vsel %vm70, %v933, 0
    %v951 = vsel %vm70, %v934, 0
    %v954 = vsel %vm70, %v928, 0
    %956 = vmatpush.bf16.msra.mxu0 0
    %957 = vmatpush.bf16.msra.mxu0 0
    %958 = vmatpush.bf16.msra.mxu0 0
    %959 = vmatpush.bf16.msra.mxu0 0
    %960 = vmatpush.bf16.msra.mxu0 0
    %961 = vmatpush.bf16.msra.mxu0 0
    %962 = vmatpush.bf16.msra.mxu0 0
    %963 = vmatpush.bf16.msra.mxu0 %v939
    %964 = vmatmul.bf16.gmra.mxu0 %v936
    %v965 = vpop.f32.mrf.mxu0
    %v966 = vadd.f32 0.0, %v965
    %v967 = vpop.f32.mrf.mxu0
    %968 = vdwg.mxu0
    %969 = vmatpush.bf16.msra.mxu0 0
    %970 = vmatpush.bf16.msra.mxu0 0
    %971 = vmatpush.bf16.msra.mxu0 0
    %972 = vmatpush.bf16.msra.mxu0 0
    %973 = vmatpush.bf16.msra.mxu0 0
    %974 = vmatpush.bf16.msra.mxu0 0
    %975 = vmatpush.bf16.msra.mxu0 0
    %976 = vmatpush.bf16.msra.mxu0 %v942
    %977 = vmatmul.bf16.gmra.mxu0 %v936
    %v978 = vpop.f32.mrf.mxu0
    %v979 = vadd.f32 0.0, %v978
    %v980 = vpop.f32.mrf.mxu0
    %981 = vdwg.mxu0
    %982 = vmatpush.bf16.msra.mxu0 0
    %983 = vmatpush.bf16.msra.mxu0 0
    %984 = vmatpush.bf16.msra.mxu0 0
    %985 = vmatpush.bf16.msra.mxu0 0
    %986 = vmatpush.bf16.msra.mxu0 0
    %987 = vmatpush.bf16.msra.mxu0 0
    %988 = vmatpush.bf16.msra.mxu0 0
    %989 = vmatpush.bf16.msra.mxu0 %v945
    %990 = vmatmul.bf16.gmra.mxu0 %v936
    %v991 = vpop.f32.mrf.mxu0
    %v992 = vadd.f32 0.0, %v991
    %v993 = vpop.f32.mrf.mxu0
    %994 = vdwg.mxu0
    %995 = vmatpush.bf16.msra.mxu0 0
    %996 = vmatpush.bf16.msra.mxu0 0
    %997 = vmatpush.bf16.msra.mxu0 0
    %998 = vmatpush.bf16.msra.mxu0 0
    %999 = vmatpush.bf16.msra.mxu0 0
    %1000 = vmatpush.bf16.msra.mxu0 0
    %1001 = vmatpush.bf16.msra.mxu0 0
    %1002 = vmatpush.bf16.msra.mxu0 %v948
    %1003 = vmatmul.bf16.gmra.mxu0 %v936
    %v1004 = vpop.f32.mrf.mxu0
    %v1005 = vadd.f32 0.0, %v1004
    %v1006 = vpop.f32.mrf.mxu0
    %1007 = vdwg.mxu0
    %1008 = vmatpush.bf16.msra.mxu0 0
    %1009 = vmatpush.bf16.msra.mxu0 0
    %1010 = vmatpush.bf16.msra.mxu0 0
    %1011 = vmatpush.bf16.msra.mxu0 0
    %1012 = vmatpush.bf16.msra.mxu0 0
    %1013 = vmatpush.bf16.msra.mxu0 0
    %1014 = vmatpush.bf16.msra.mxu0 0
    %1015 = vmatpush.bf16.msra.mxu0 %v951
    %1016 = vmatmul.bf16.gmra.mxu0 %v936
    %v1017 = vpop.f32.mrf.mxu0
    %v1018 = vadd.f32 0.0, %v1017
    %v1019 = vpop.f32.mrf.mxu0
    %1020 = vdwg.mxu0
    %1021 = vmatpush.bf16.msra.mxu0 0
    %1022 = vmatpush.bf16.msra.mxu0 0
    %1023 = vmatpush.bf16.msra.mxu0 0
    %1024 = vmatpush.bf16.msra.mxu0 0
    %1025 = vmatpush.bf16.msra.mxu0 0
    %1026 = vmatpush.bf16.msra.mxu0 0
    %1027 = vmatpush.bf16.msra.mxu0 0
    %1028 = vmatpush.bf16.msra.mxu0 %v954
    %1029 = vmatmul.bf16.gmra.mxu0 %v936
    %v1030 = vpop.f32.mrf.mxu0
    %v1031 = vadd.f32 0.0, %v1030
    %v1032 = vpop.f32.mrf.mxu0
    %1033 = vdwg.mxu0
    %v1034 = vadd.f32 %v909, %v966
    %v1035 = vadd.f32 %v910, %v979
    %v1036 = vadd.f32 %v911, %v992
    %v1037 = vadd.f32 %v912, %v1005
    %v1038 = vadd.f32 %v913, %v1018
    %v1039 = vadd.f32 %v914, %v1031
    %s1040 = scalar_lea.vmem %s2, 104
    %v1041 = vld [vmem:[%s1040] sm:$0xf]
    %1042 = vrot.lane.b32.xlu0 %v417, 109
    %v1043 = vpop.permute.xlu0 %1042
    %1044 = vrot.lane.b32.xlu0 %v418, 109
    %v1045 = vpop.permute.xlu0 %1044
    %1046 = vrot.lane.b32.xlu0 %v419, 109
    %v1047 = vpop.permute.xlu0 %1046
    %1048 = vrot.lane.b32.xlu0 %v420, 109
    %v1049 = vpop.permute.xlu0 %1048
    %1050 = vrot.lane.b32.xlu0 %v421, 109
    %v1051 = vpop.permute.xlu0 %1050
    %1052 = vrot.lane.b32.xlu0 %v422, 109
    %v1053 = vpop.permute.xlu0 %1052
    %vm1054 = vcmask 891904
    %v1055 = vsel %vm1054, %v1043, %v1045
    %v1056 = vsel %vm1054, %v1045, %v1047
    %v1057 = vsel %vm1054, %v1047, %v1049
    %v1058 = vsel %vm1054, %v1049, %v1051
    %v1059 = vsel %vm1054, %v1051, %v1053
    %v1061 = vsel %vm66, %v1041, 0
    %v1064 = vsel %vm70, %v1055, 0
    %v1067 = vsel %vm70, %v1056, 0
    %v1070 = vsel %vm70, %v1057, 0
    %v1073 = vsel %vm70, %v1058, 0
    %v1076 = vsel %vm70, %v1059, 0
    %v1079 = vsel %vm70, %v1053, 0
    %1081 = vmatpush.bf16.msra.mxu0 0
    %1082 = vmatpush.bf16.msra.mxu0 0
    %1083 = vmatpush.bf16.msra.mxu0 0
    %1084 = vmatpush.bf16.msra.mxu0 0
    %1085 = vmatpush.bf16.msra.mxu0 0
    %1086 = vmatpush.bf16.msra.mxu0 0
    %1087 = vmatpush.bf16.msra.mxu0 0
    %1088 = vmatpush.bf16.msra.mxu0 %v1064
    %1089 = vmatmul.bf16.gmra.mxu0 %v1061
    %v1090 = vpop.f32.mrf.mxu0
    %v1091 = vadd.f32 0.0, %v1090
    %v1092 = vpop.f32.mrf.mxu0
    %1093 = vdwg.mxu0
    %1094 = vmatpush.bf16.msra.mxu0 0
    %1095 = vmatpush.bf16.msra.mxu0 0
    %1096 = vmatpush.bf16.msra.mxu0 0
    %1097 = vmatpush.bf16.msra.mxu0 0
    %1098 = vmatpush.bf16.msra.mxu0 0
    %1099 = vmatpush.bf16.msra.mxu0 0
    %1100 = vmatpush.bf16.msra.mxu0 0
    %1101 = vmatpush.bf16.msra.mxu0 %v1067
    %1102 = vmatmul.bf16.gmra.mxu0 %v1061
    %v1103 = vpop.f32.mrf.mxu0
    %v1104 = vadd.f32 0.0, %v1103
    %v1105 = vpop.f32.mrf.mxu0
    %1106 = vdwg.mxu0
    %1107 = vmatpush.bf16.msra.mxu0 0
    %1108 = vmatpush.bf16.msra.mxu0 0
    %1109 = vmatpush.bf16.msra.mxu0 0
    %1110 = vmatpush.bf16.msra.mxu0 0
    %1111 = vmatpush.bf16.msra.mxu0 0
    %1112 = vmatpush.bf16.msra.mxu0 0
    %1113 = vmatpush.bf16.msra.mxu0 0
    %1114 = vmatpush.bf16.msra.mxu0 %v1070
    %1115 = vmatmul.bf16.gmra.mxu0 %v1061
    %v1116 = vpop.f32.mrf.mxu0
    %v1117 = vadd.f32 0.0, %v1116
    %v1118 = vpop.f32.mrf.mxu0
    %1119 = vdwg.mxu0
    %1120 = vmatpush.bf16.msra.mxu0 0
    %1121 = vmatpush.bf16.msra.mxu0 0
    %1122 = vmatpush.bf16.msra.mxu0 0
    %1123 = vmatpush.bf16.msra.mxu0 0
    %1124 = vmatpush.bf16.msra.mxu0 0
    %1125 = vmatpush.bf16.msra.mxu0 0
    %1126 = vmatpush.bf16.msra.mxu0 0
    %1127 = vmatpush.bf16.msra.mxu0 %v1073
    %1128 = vmatmul.bf16.gmra.mxu0 %v1061
    %v1129 = vpop.f32.mrf.mxu0
    %v1130 = vadd.f32 0.0, %v1129
    %v1131 = vpop.f32.mrf.mxu0
    %1132 = vdwg.mxu0
    %1133 = vmatpush.bf16.msra.mxu0 0
    %1134 = vmatpush.bf16.msra.mxu0 0
    %1135 = vmatpush.bf16.msra.mxu0 0
    %1136 = vmatpush.bf16.msra.mxu0 0
    %1137 = vmatpush.bf16.msra.mxu0 0
    %1138 = vmatpush.bf16.msra.mxu0 0
    %1139 = vmatpush.bf16.msra.mxu0 0
    %1140 = vmatpush.bf16.msra.mxu0 %v1076
    %1141 = vmatmul.bf16.gmra.mxu0 %v1061
    %v1142 = vpop.f32.mrf.mxu0
    %v1143 = vadd.f32 0.0, %v1142
    %v1144 = vpop.f32.mrf.mxu0
    %1145 = vdwg.mxu0
    %1146 = vmatpush.bf16.msra.mxu0 0
    %1147 = vmatpush.bf16.msra.mxu0 0
    %1148 = vmatpush.bf16.msra.mxu0 0
    %1149 = vmatpush.bf16.msra.mxu0 0
    %1150 = vmatpush.bf16.msra.mxu0 0
    %1151 = vmatpush.bf16.msra.mxu0 0
    %1152 = vmatpush.bf16.msra.mxu0 0
    %1153 = vmatpush.bf16.msra.mxu0 %v1079
    %1154 = vmatmul.bf16.gmra.mxu0 %v1061
    %v1155 = vpop.f32.mrf.mxu0
    %v1156 = vadd.f32 0.0, %v1155
    %v1157 = vpop.f32.mrf.mxu0
    %1158 = vdwg.mxu0
    %v1159 = vadd.f32 %v1034, %v1091
    %v1160 = vadd.f32 %v1035, %v1104
    %v1161 = vadd.f32 %v1036, %v1117
    %v1162 = vadd.f32 %v1037, %v1130
    %v1163 = vadd.f32 %v1038, %v1143
    %v1164 = vadd.f32 %v1039, %v1156
    %v1166 = vperm.slane %v19, 0
    %v1167 = vperm.slane %v19, 1
    %v1168 = vperm.slane %v19, 2
    %v1169 = vperm.slane %v19, 3
    %v1170 = vperm.slane %v19, 4
    %v1171 = vperm.slane %v19, 5
    %v1178 = vmul.f32 %v1159, %v1166
    %v1179 = vmul.f32 %v1160, %v1167
    %v1180 = vmul.f32 %v1161, %v1168
    %v1181 = vmul.f32 %v1162, %v1169
    %v1182 = vmul.f32 %v1163, %v1170
    %v1183 = vmul.f32 %v1164, %v1171
    %v1184 = vadd.f32 %v1178, %v1179
    %v1185 = vadd.f32 %v1184, %v1180
    %v1186 = vadd.f32 %v1185, %v1181
    %v1187 = vadd.f32 %v1186, %v1182
    %v1188 = vsel %vm66, %v1183, 0.0
    %v1189 = vadd.f32 %v1187, %v1188
    %1190 = vadd.xlane.f32.xlu0 %v1189
    %v1191 = vpop.xlane.xlu0 %1190
    %v1192 = vrcp.pop 512.0
    %v1193 = vmul.f32 512.0, %v1192
    %v1194 = vsub.f32 1.0, %v1193
    %v1195 = vmul.f32 %v1192, %v1194
    %v1196 = vadd.f32 %v1192, %v1195
    %vm1197 = vweird.f32 %v1192
    %v1198 = vsel %vm1197, %v1192, %v1196
    %v1199 = vmul.f32 %v1191, %v1198
    %v1200 = vsub.f32 %v1159, %v1199
    %v1201 = vsub.f32 %v1160, %v1199
    %v1202 = vsub.f32 %v1161, %v1199
    %v1203 = vsub.f32 %v1162, %v1199
    %v1204 = vsub.f32 %v1163, %v1199
    %v1205 = vsub.f32 %v1164, %v1199
    %v1206 = vmul.f32 %v1166, %v1200
    %v1207 = vmul.f32 %v1167, %v1201
    %v1208 = vmul.f32 %v1168, %v1202
    %v1209 = vmul.f32 %v1169, %v1203
    %v1210 = vmul.f32 %v1170, %v1204
    %v1211 = vmul.f32 %v1171, %v1205
    %v1212 = vmul.f32 %v1206, %v1200
    %v1213 = vmul.f32 %v1207, %v1201
    %v1214 = vmul.f32 %v1208, %v1202
    %v1215 = vmul.f32 %v1209, %v1203
    %v1216 = vmul.f32 %v1210, %v1204
    %v1217 = vmul.f32 %v1211, %v1205
    %v1218 = vadd.f32 %v1212, %v1213
    %v1219 = vadd.f32 %v1218, %v1214
    %v1220 = vadd.f32 %v1219, %v1215
    %v1221 = vadd.f32 %v1220, %v1216
    %v1222 = vsel %vm66, %v1217, 0.0
    %v1223 = vadd.f32 %v1221, %v1222
    %1224 = vadd.xlane.f32.xlu0 %v1223
    %v1225 = vpop.xlane.xlu0 %1224
    %v1226 = vmul.f32 %v1225, %v1198
    %1228 = vset.pattern.permute.xlu0 4
    %1229 = vperm.xlu0 %1228, %v20
    %v1230 = vpop.permute.xlu0 %1229
    %v1232 = vmul.f32 %v1230, %v1200
    %v1233 = vmul.f32 %v1230, %v1201
    %v1234 = vmul.f32 %v1230, %v1202
    %v1235 = vmul.f32 %v1230, %v1203
    %v1236 = vmul.f32 %v1230, %v1204
    %v1237 = vmul.f32 %v1230, %v1205
    %v1238 = vadd.f32 %v1226, 1e-05
    %v1239 = vrsqrt.pop %v1238
    %v1240 = vmul.f32 %v1239, %v1238
    %v1241 = vmul.f32 %v1240, %v1239
    %v1242 = vmul.f32 0.5, %v1241
    %v1243 = vsub.f32 1.5, %v1242
    %v1244 = vmul.f32 %v1239, %v1243
    %vm1245 = vweird.f32 %v1238
    %vm1246 = vweird.f32 %v1239
    %vm1247 = vmor %vm1245, %vm1246
    %v1248 = vsel %vm1247, %v1239, %v1244
    %v1249 = vmul.f32 %v1232, %v1248
    %v1250 = vmul.f32 %v1233, %v1248
    %v1251 = vmul.f32 %v1234, %v1248
    %v1252 = vmul.f32 %v1235, %v1248
    %v1253 = vmul.f32 %v1236, %v1248
    %v1254 = vmul.f32 %v1237, %v1248
    %1255 = vset.pattern.permute.xlu0 5
    %1256 = vperm.xlu0 %1255, %v20
    %v1257 = vpop.permute.xlu0 %1256
    %v1259 = vadd.f32 %v1249, %v1257
    %v1260 = vadd.f32 %v1250, %v1257
    %v1261 = vadd.f32 %v1251, %v1257
    %v1262 = vadd.f32 %v1252, %v1257
    %v1263 = vadd.f32 %v1253, %v1257
    %v1264 = vadd.f32 %v1254, %v1257
    %1265 = vst [vmem:[#allocation3] sm:$0xff] %v1259
    %1266 = vst [vmem:[#allocation3 + $0x8] sm:$0xff] %v1260
    %1267 = vst [vmem:[#allocation3 + $0x10] sm:$0xff] %v1261
    %1268 = vst [vmem:[#allocation3 + $0x18] sm:$0xff] %v1262
    %1269 = vst [vmem:[#allocation3 + $0x20] sm:$0xff] %v1263
    %1270 = vst.msk [vmem:[#allocation3 + $0x28] sm:$0xff] %vm66, %v1264
    %v1271 = vld [vmem:[%s0 + $0x8] sm:$0xff]
    %v1272 = vld [vmem:[%s0 + $0x10] sm:$0xff]
    %v1273 = vld [vmem:[%s0 + $0x18] sm:$0xff]
    %v1274 = vld [vmem:[%s0 + $0x20] sm:$0xff]
    %v1275 = vld [vmem:[%s0 + $0x28] sm:$0xff]
    %v1276 = vld [vmem:[%s0 + $0x30] sm:$0xff]
    %v1277 = vmul.f32 %v1271, %v1166
    %v1278 = vmul.f32 %v1272, %v1167
    %v1279 = vmul.f32 %v1273, %v1168
    %v1280 = vmul.f32 %v1274, %v1169
    %v1281 = vmul.f32 %v1275, %v1170
    %v1282 = vmul.f32 %v1276, %v1171
    %v1283 = vadd.f32 %v1277, %v1278
    %v1284 = vadd.f32 %v1283, %v1279
    %v1285 = vadd.f32 %v1284, %v1280
    %v1286 = vadd.f32 %v1285, %v1281
    %v1287 = vsel %vm66, %v1282, 0.0
    %v1288 = vadd.f32 %v1286, %v1287
    %1289 = vadd.xlane.f32.xlu0 %v1288
    %v1290 = vpop.xlane.xlu0 %1289
    %v1291 = vmul.f32 %v1290, %v1198
    %v1292 = vsub.f32 %v1271, %v1291
    %v1293 = vsub.f32 %v1272, %v1291
    %v1294 = vsub.f32 %v1273, %v1291
    %v1295 = vsub.f32 %v1274, %v1291
    %v1296 = vsub.f32 %v1275, %v1291
    %v1297 = vsub.f32 %v1276, %v1291
    %v1298 = vmul.f32 %v1166, %v1292
    %v1299 = vmul.f32 %v1167, %v1293
    %v1300 = vmul.f32 %v1168, %v1294
    %v1301 = vmul.f32 %v1169, %v1295
    %v1302 = vmul.f32 %v1170, %v1296
    %v1303 = vmul.f32 %v1171, %v1297
    %v1304 = vmul.f32 %v1298, %v1292
    %v1305 = vmul.f32 %v1299, %v1293
    %v1306 = vmul.f32 %v1300, %v1294
    %v1307 = vmul.f32 %v1301, %v1295
    %v1308 = vmul.f32 %v1302, %v1296
    %v1309 = vmul.f32 %v1303, %v1297
    %v1310 = vadd.f32 %v1304, %v1305
    %v1311 = vadd.f32 %v1310, %v1306
    %v1312 = vadd.f32 %v1311, %v1307
    %v1313 = vadd.f32 %v1312, %v1308
    %v1314 = vsel %vm66, %v1309, 0.0
    %v1315 = vadd.f32 %v1313, %v1314
    %1316 = vadd.xlane.f32.xlu0 %v1315
    %v1317 = vpop.xlane.xlu0 %1316
    %v1318 = vmul.f32 %v1317, %v1198
    %1319 = vset.pattern.permute.xlu0 0
    %1320 = vperm.xlu0 %1319, %v20
    %v1321 = vpop.permute.xlu0 %1320
    %v1323 = vmul.f32 %v1321, %v1292
    %v1324 = vmul.f32 %v1321, %v1293
    %v1325 = vmul.f32 %v1321, %v1294
    %v1326 = vmul.f32 %v1321, %v1295
    %v1327 = vmul.f32 %v1321, %v1296
    %v1328 = vmul.f32 %v1321, %v1297
    %v1329 = vadd.f32 %v1318, 1e-05
    %v1330 = vrsqrt.pop %v1329
    %v1331 = vmul.f32 %v1330, %v1329
    %v1332 = vmul.f32 %v1331, %v1330
    %v1333 = vmul.f32 0.5, %v1332
    %v1334 = vsub.f32 1.5, %v1333
    %v1335 = vmul.f32 %v1330, %v1334
    %vm1336 = vweird.f32 %v1329
    %vm1337 = vweird.f32 %v1330
    %vm1338 = vmor %vm1336, %vm1337
    %v1339 = vsel %vm1338, %v1330, %v1335
    %v1340 = vmul.f32 %v1323, %v1339
    %v1341 = vmul.f32 %v1324, %v1339
    %v1342 = vmul.f32 %v1325, %v1339
    %v1343 = vmul.f32 %v1326, %v1339
    %v1344 = vmul.f32 %v1327, %v1339
    %v1345 = vmul.f32 %v1328, %v1339
    %1346 = vset.pattern.permute.xlu0 1
    %1347 = vperm.xlu0 %1346, %v20
    %v1348 = vpop.permute.xlu0 %1347
    %v1350 = vadd.f32 %v1340, %v1348
    %v1351 = vadd.f32 %v1341, %v1348
    %v1352 = vadd.f32 %v1342, %v1348
    %v1353 = vadd.f32 %v1343, %v1348
    %v1354 = vadd.f32 %v1344, %v1348
    %v1355 = vadd.f32 %v1345, %v1348
    %v1356 = vmax.f32 %v1350, 0.0
    %v1357 = vmax.f32 %v1351, 0.0
    %v1358 = vmax.f32 %v1352, 0.0
    %v1359 = vmax.f32 %v1353, 0.0
    %v1360 = vmax.f32 %v1354, 0.0
    %v1361 = vmax.f32 %v1355, 0.0
    %v1362 = vmul.f32 %v1356, %v1166
    %v1363 = vmul.f32 %v1357, %v1167
    %v1364 = vmul.f32 %v1358, %v1168
    %v1365 = vmul.f32 %v1359, %v1169
    %v1366 = vmul.f32 %v1360, %v1170
    %v1367 = vmul.f32 %v1361, %v1171
    %v1368 = vpack.c.bf16 %v1363, %v1362
    %v1369 = vpack.c.bf16 %v1365, %v1364
    %v1370 = vpack.c.bf16 %v1367, %v1366
    %1371 = vst [vmem:[#allocation2 + $0x4] sm:$0xff] %v1368
    %1372 = vst [vmem:[#allocation2 + $0xc] sm:$0xff] %v1369
    %vm1373 = vmor %vm23, %vm70
    %1374 = vst.msk [vmem:[#allocation2 + $0x14] sm:$0xff] %vm1373, %v1370
    %v1375 = vld [vmem:[#allocation2] sm:$0xff]
    %v1376 = vld [vmem:[#allocation2 + $0x8] sm:$0xff]
    %v1377 = vld [vmem:[#allocation2 + $0x10] sm:$0xff]
    %v1378 = vld [vmem:[%s2] sm:$0xf]
    %s1379 = scalar_lea.vmem %s2, 4
    %v1380 = vld [vmem:[%s1379] sm:$0xf]
    %v1384 = vunpack.c.l.b16 %v1375
    %v1385 = vunpack.c.h.b16 %v1375
    %v1386 = vunpack.c.l.b16 %v1376
    %v1387 = vunpack.c.h.b16 %v1376
    %v1388 = vunpack.c.l.b16 %v1377
    %v1389 = vunpack.c.h.b16 %v1377
    %v1390 = vpack.c.b16 %v1384, %v1384
    %v1391 = vpack.c.b16 %v1385, %v1385
    %v1392 = vpack.c.b16 %v1386, %v1386
    %v1393 = vpack.c.b16 %v1387, %v1387
    %v1394 = vpack.c.b16 %v1388, %v1388
    %v1395 = vpack.c.b16 %v1389, %v1389
    %1396 = vrot.lane.b32.xlu0 %v1390, 18
    %v1397 = vpop.permute.xlu0 %1396
    %1398 = vrot.lane.b32.xlu0 %v1391, 18
    %v1399 = vpop.permute.xlu0 %1398
    %1400 = vrot.lane.b32.xlu0 %v1392, 18
    %v1401 = vpop.permute.xlu0 %1400
    %1402 = vrot.lane.b32.xlu0 %v1393, 18
    %v1403 = vpop.permute.xlu0 %1402
    %1404 = vrot.lane.b32.xlu0 %v1394, 18
    %v1405 = vpop.permute.xlu0 %1404
    %1406 = vrot.lane.b32.xlu0 %v1395, 18
    %v1407 = vpop.permute.xlu0 %1406
    %v1408 = vsel %vm60, %v1397, %v1399
    %v1409 = vsel %vm60, %v1399, %v1401
    %v1410 = vsel %vm60, %v1401, %v1403
    %v1411 = vsel %vm60, %v1403, %v1405
    %v1412 = vsel %vm60, %v1405, %v1407
    %v1414 = vsel %vm66, %v1380, 0
    %v1417 = vsel %vm70, %v1408, 0
    %v1420 = vsel %vm70, %v1409, 0
    %v1423 = vsel %vm70, %v1410, 0
    %v1426 = vsel %vm70, %v1411, 0
    %v1429 = vsel %vm70, %v1412, 0
    %v1432 = vsel %vm70, %v1407, 0
    %1434 = vmatpush.bf16.msra.mxu0 0
    %1435 = vmatpush.bf16.msra.mxu0 0
    %1436 = vmatpush.bf16.msra.mxu0 0
    %1437 = vmatpush.bf16.msra.mxu0 0
    %1438 = vmatpush.bf16.msra.mxu0 0
    %1439 = vmatpush.bf16.msra.mxu0 0
    %1440 = vmatpush.bf16.msra.mxu0 0
    %1441 = vmatpush.bf16.msra.mxu0 %v1417
    %1442 = vmatmul.bf16.gmra.mxu0 %v1414
    %v1443 = vpop.f32.mrf.mxu0
    %v1444 = vadd.f32 0.0, %v1443
    %v1445 = vpop.f32.mrf.mxu0
    %1446 = vdwg.mxu0
    %1447 = vmatpush.bf16.msra.mxu0 0
    %1448 = vmatpush.bf16.msra.mxu0 0
    %1449 = vmatpush.bf16.msra.mxu0 0
    %1450 = vmatpush.bf16.msra.mxu0 0
    %1451 = vmatpush.bf16.msra.mxu0 0
    %1452 = vmatpush.bf16.msra.mxu0 0
    %1453 = vmatpush.bf16.msra.mxu0 0
    %1454 = vmatpush.bf16.msra.mxu0 %v1420
    %1455 = vmatmul.bf16.gmra.mxu0 %v1414
    %v1456 = vpop.f32.mrf.mxu0
    %v1457 = vadd.f32 0.0, %v1456
    %v1458 = vpop.f32.mrf.mxu0
    %1459 = vdwg.mxu0
    %1460 = vmatpush.bf16.msra.mxu0 0
    %1461 = vmatpush.bf16.msra.mxu0 0
    %1462 = vmatpush.bf16.msra.mxu0 0
    %1463 = vmatpush.bf16.msra.mxu0 0
    %1464 = vmatpush.bf16.msra.mxu0 0
    %1465 = vmatpush.bf16.msra.mxu0 0
    %1466 = vmatpush.bf16.msra.mxu0 0
    %1467 = vmatpush.bf16.msra.mxu0 %v1423
    %1468 = vmatmul.bf16.gmra.mxu0 %v1414
    %v1469 = vpop.f32.mrf.mxu0
    %v1470 = vadd.f32 0.0, %v1469
    %v1471 = vpop.f32.mrf.mxu0
    %1472 = vdwg.mxu0
    %1473 = vmatpush.bf16.msra.mxu0 0
    %1474 = vmatpush.bf16.msra.mxu0 0
    %1475 = vmatpush.bf16.msra.mxu0 0
    %1476 = vmatpush.bf16.msra.mxu0 0
    %1477 = vmatpush.bf16.msra.mxu0 0
    %1478 = vmatpush.bf16.msra.mxu0 0
    %1479 = vmatpush.bf16.msra.mxu0 0
    %1480 = vmatpush.bf16.msra.mxu0 %v1426
    %1481 = vmatmul.bf16.gmra.mxu0 %v1414
    %v1482 = vpop.f32.mrf.mxu0
    %v1483 = vadd.f32 0.0, %v1482
    %v1484 = vpop.f32.mrf.mxu0
    %1485 = vdwg.mxu0
    %1486 = vmatpush.bf16.msra.mxu0 0
    %1487 = vmatpush.bf16.msra.mxu0 0
    %1488 = vmatpush.bf16.msra.mxu0 0
    %1489 = vmatpush.bf16.msra.mxu0 0
    %1490 = vmatpush.bf16.msra.mxu0 0
    %1491 = vmatpush.bf16.msra.mxu0 0
    %1492 = vmatpush.bf16.msra.mxu0 0
    %1493 = vmatpush.bf16.msra.mxu0 %v1429
    %1494 = vmatmul.bf16.gmra.mxu0 %v1414
    %v1495 = vpop.f32.mrf.mxu0
    %v1496 = vadd.f32 0.0, %v1495
    %v1497 = vpop.f32.mrf.mxu0
    %1498 = vdwg.mxu0
    %1499 = vmatpush.bf16.msra.mxu0 0
    %1500 = vmatpush.bf16.msra.mxu0 0
    %1501 = vmatpush.bf16.msra.mxu0 0
    %1502 = vmatpush.bf16.msra.mxu0 0
    %1503 = vmatpush.bf16.msra.mxu0 0
    %1504 = vmatpush.bf16.msra.mxu0 0
    %1505 = vmatpush.bf16.msra.mxu0 0
    %1506 = vmatpush.bf16.msra.mxu0 %v1432
    %1507 = vmatmul.bf16.gmra.mxu0 %v1414
    %v1508 = vpop.f32.mrf.mxu0
    %v1509 = vadd.f32 0.0, %v1508
    %v1510 = vpop.f32.mrf.mxu0
    %1511 = vdwg.mxu0
    %1512 = vrot.lane.b32.xlu0 %v1390, 19
    %v1513 = vpop.permute.xlu0 %1512
    %1514 = vrot.lane.b32.xlu0 %v1391, 19
    %v1515 = vpop.permute.xlu0 %1514
    %1516 = vrot.lane.b32.xlu0 %v1392, 19
    %v1517 = vpop.permute.xlu0 %1516
    %1518 = vrot.lane.b32.xlu0 %v1393, 19
    %v1519 = vpop.permute.xlu0 %1518
    %1520 = vrot.lane.b32.xlu0 %v1394, 19
    %v1521 = vpop.permute.xlu0 %1520
    %1522 = vrot.lane.b32.xlu0 %v1395, 19
    %v1523 = vpop.permute.xlu0 %1522
    %v1524 = vsel %vm179, %v1513, %v1515
    %v1525 = vsel %vm179, %v1515, %v1517
    %v1526 = vsel %vm179, %v1517, %v1519
    %v1527 = vsel %vm179, %v1519, %v1521
    %v1528 = vsel %vm179, %v1521, %v1523
    %v1530 = vsel %vm66, %v1378, 0
    %v1533 = vsel %vm70, %v1524, 0
    %v1536 = vsel %vm70, %v1525, 0
    %v1539 = vsel %vm70, %v1526, 0
    %v1542 = vsel %vm70, %v1527, 0
    %v1545 = vsel %vm70, %v1528, 0
    %v1548 = vsel %vm70, %v1523, 0
    %1550 = vmatpush.bf16.msra.mxu0 0
    %1551 = vmatpush.bf16.msra.mxu0 0
    %1552 = vmatpush.bf16.msra.mxu0 0
    %1553 = vmatpush.bf16.msra.mxu0 0
    %1554 = vmatpush.bf16.msra.mxu0 0
    %1555 = vmatpush.bf16.msra.mxu0 0
    %1556 = vmatpush.bf16.msra.mxu0 0
    %1557 = vmatpush.bf16.msra.mxu0 %v1533
    %1558 = vmatmul.bf16.gmra.mxu0 %v1530
    %v1559 = vpop.f32.mrf.mxu0
    %v1560 = vadd.f32 %v1444, %v1559
    %v1561 = vpop.f32.mrf.mxu0
    %1562 = vdwg.mxu0
    %1563 = vmatpush.bf16.msra.mxu0 0
    %1564 = vmatpush.bf16.msra.mxu0 0
    %1565 = vmatpush.bf16.msra.mxu0 0
    %1566 = vmatpush.bf16.msra.mxu0 0
    %1567 = vmatpush.bf16.msra.mxu0 0
    %1568 = vmatpush.bf16.msra.mxu0 0
    %1569 = vmatpush.bf16.msra.mxu0 0
    %1570 = vmatpush.bf16.msra.mxu0 %v1536
    %1571 = vmatmul.bf16.gmra.mxu0 %v1530
    %v1572 = vpop.f32.mrf.mxu0
    %v1573 = vadd.f32 %v1457, %v1572
    %v1574 = vpop.f32.mrf.mxu0
    %1575 = vdwg.mxu0
    %1576 = vmatpush.bf16.msra.mxu0 0
    %1577 = vmatpush.bf16.msra.mxu0 0
    %1578 = vmatpush.bf16.msra.mxu0 0
    %1579 = vmatpush.bf16.msra.mxu0 0
    %1580 = vmatpush.bf16.msra.mxu0 0
    %1581 = vmatpush.bf16.msra.mxu0 0
    %1582 = vmatpush.bf16.msra.mxu0 0
    %1583 = vmatpush.bf16.msra.mxu0 %v1539
    %1584 = vmatmul.bf16.gmra.mxu0 %v1530
    %v1585 = vpop.f32.mrf.mxu0
    %v1586 = vadd.f32 %v1470, %v1585
    %v1587 = vpop.f32.mrf.mxu0
    %1588 = vdwg.mxu0
    %1589 = vmatpush.bf16.msra.mxu0 0
    %1590 = vmatpush.bf16.msra.mxu0 0
    %1591 = vmatpush.bf16.msra.mxu0 0
    %1592 = vmatpush.bf16.msra.mxu0 0
    %1593 = vmatpush.bf16.msra.mxu0 0
    %1594 = vmatpush.bf16.msra.mxu0 0
    %1595 = vmatpush.bf16.msra.mxu0 0
    %1596 = vmatpush.bf16.msra.mxu0 %v1542
    %1597 = vmatmul.bf16.gmra.mxu0 %v1530
    %v1598 = vpop.f32.mrf.mxu0
    %v1599 = vadd.f32 %v1483, %v1598
    %v1600 = vpop.f32.mrf.mxu0
    %1601 = vdwg.mxu0
    %1602 = vmatpush.bf16.msra.mxu0 0
    %1603 = vmatpush.bf16.msra.mxu0 0
    %1604 = vmatpush.bf16.msra.mxu0 0
    %1605 = vmatpush.bf16.msra.mxu0 0
    %1606 = vmatpush.bf16.msra.mxu0 0
    %1607 = vmatpush.bf16.msra.mxu0 0
    %1608 = vmatpush.bf16.msra.mxu0 0
    %1609 = vmatpush.bf16.msra.mxu0 %v1545
    %1610 = vmatmul.bf16.gmra.mxu0 %v1530
    %v1611 = vpop.f32.mrf.mxu0
    %v1612 = vadd.f32 %v1496, %v1611
    %v1613 = vpop.f32.mrf.mxu0
    %1614 = vdwg.mxu0
    %1615 = vmatpush.bf16.msra.mxu0 0
    %1616 = vmatpush.bf16.msra.mxu0 0
    %1617 = vmatpush.bf16.msra.mxu0 0
    %1618 = vmatpush.bf16.msra.mxu0 0
    %1619 = vmatpush.bf16.msra.mxu0 0
    %1620 = vmatpush.bf16.msra.mxu0 0
    %1621 = vmatpush.bf16.msra.mxu0 0
    %1622 = vmatpush.bf16.msra.mxu0 %v1548
    %1623 = vmatmul.bf16.gmra.mxu0 %v1530
    %v1624 = vpop.f32.mrf.mxu0
    %v1625 = vadd.f32 %v1509, %v1624
    %v1626 = vpop.f32.mrf.mxu0
    %1627 = vdwg.mxu0
    %s1628 = scalar_lea.vmem %s2, 8
    %v1629 = vld [vmem:[%s1628] sm:$0xf]
    %1630 = vrot.lane.b32.xlu0 %v1390, 17
    %v1631 = vpop.permute.xlu0 %1630
    %1632 = vrot.lane.b32.xlu0 %v1391, 17
    %v1633 = vpop.permute.xlu0 %1632
    %1634 = vrot.lane.b32.xlu0 %v1392, 17
    %v1635 = vpop.permute.xlu0 %1634
    %1636 = vrot.lane.b32.xlu0 %v1393, 17
    %v1637 = vpop.permute.xlu0 %1636
    %1638 = vrot.lane.b32.xlu0 %v1394, 17
    %v1639 = vpop.permute.xlu0 %1638
    %1640 = vrot.lane.b32.xlu0 %v1395, 17
    %v1641 = vpop.permute.xlu0 %1640
    %v1642 = vsel %vm298, %v1631, %v1633
    %v1643 = vsel %vm298, %v1633, %v1635
    %v1644 = vsel %vm298, %v1635, %v1637
    %v1645 = vsel %vm298, %v1637, %v1639
    %v1646 = vsel %vm298, %v1639, %v1641
    %v1648 = vsel %vm66, %v1629, 0
    %v1651 = vsel %vm70, %v1642, 0
    %v1654 = vsel %vm70, %v1643, 0
    %v1657 = vsel %vm70, %v1644, 0
    %v1660 = vsel %vm70, %v1645, 0
    %v1663 = vsel %vm70, %v1646, 0
    %v1666 = vsel %vm70, %v1641, 0
    %1668 = vmatpush.bf16.msra.mxu0 0
    %1669 = vmatpush.bf16.msra.mxu0 0
    %1670 = vmatpush.bf16.msra.mxu0 0
    %1671 = vmatpush.bf16.msra.mxu0 0
    %1672 = vmatpush.bf16.msra.mxu0 0
    %1673 = vmatpush.bf16.msra.mxu0 0
    %1674 = vmatpush.bf16.msra.mxu0 0
    %1675 = vmatpush.bf16.msra.mxu0 %v1651
    %1676 = vmatmul.bf16.gmra.mxu0 %v1648
    %v1677 = vpop.f32.mrf.mxu0
    %v1678 = vadd.f32 0.0, %v1677
    %v1679 = vpop.f32.mrf.mxu0
    %1680 = vdwg.mxu0
    %1681 = vmatpush.bf16.msra.mxu0 0
    %1682 = vmatpush.bf16.msra.mxu0 0
    %1683 = vmatpush.bf16.msra.mxu0 0
    %1684 = vmatpush.bf16.msra.mxu0 0
    %1685 = vmatpush.bf16.msra.mxu0 0
    %1686 = vmatpush.bf16.msra.mxu0 0
    %1687 = vmatpush.bf16.msra.mxu0 0
    %1688 = vmatpush.bf16.msra.mxu0 %v1654
    %1689 = vmatmul.bf16.gmra.mxu0 %v1648
    %v1690 = vpop.f32.mrf.mxu0
    %v1691 = vadd.f32 0.0, %v1690
    %v1692 = vpop.f32.mrf.mxu0
    %1693 = vdwg.mxu0
    %1694 = vmatpush.bf16.msra.mxu0 0
    %1695 = vmatpush.bf16.msra.mxu0 0
    %1696 = vmatpush.bf16.msra.mxu0 0
    %1697 = vmatpush.bf16.msra.mxu0 0
    %1698 = vmatpush.bf16.msra.mxu0 0
    %1699 = vmatpush.bf16.msra.mxu0 0
    %1700 = vmatpush.bf16.msra.mxu0 0
    %1701 = vmatpush.bf16.msra.mxu0 %v1657
    %1702 = vmatmul.bf16.gmra.mxu0 %v1648
    %v1703 = vpop.f32.mrf.mxu0
    %v1704 = vadd.f32 0.0, %v1703
    %v1705 = vpop.f32.mrf.mxu0
    %1706 = vdwg.mxu0
    %1707 = vmatpush.bf16.msra.mxu0 0
    %1708 = vmatpush.bf16.msra.mxu0 0
    %1709 = vmatpush.bf16.msra.mxu0 0
    %1710 = vmatpush.bf16.msra.mxu0 0
    %1711 = vmatpush.bf16.msra.mxu0 0
    %1712 = vmatpush.bf16.msra.mxu0 0
    %1713 = vmatpush.bf16.msra.mxu0 0
    %1714 = vmatpush.bf16.msra.mxu0 %v1660
    %1715 = vmatmul.bf16.gmra.mxu0 %v1648
    %v1716 = vpop.f32.mrf.mxu0
    %v1717 = vadd.f32 0.0, %v1716
    %v1718 = vpop.f32.mrf.mxu0
    %1719 = vdwg.mxu0
    %1720 = vmatpush.bf16.msra.mxu0 0
    %1721 = vmatpush.bf16.msra.mxu0 0
    %1722 = vmatpush.bf16.msra.mxu0 0
    %1723 = vmatpush.bf16.msra.mxu0 0
    %1724 = vmatpush.bf16.msra.mxu0 0
    %1725 = vmatpush.bf16.msra.mxu0 0
    %1726 = vmatpush.bf16.msra.mxu0 0
    %1727 = vmatpush.bf16.msra.mxu0 %v1663
    %1728 = vmatmul.bf16.gmra.mxu0 %v1648
    %v1729 = vpop.f32.mrf.mxu0
    %v1730 = vadd.f32 0.0, %v1729
    %v1731 = vpop.f32.mrf.mxu0
    %1732 = vdwg.mxu0
    %1733 = vmatpush.bf16.msra.mxu0 0
    %1734 = vmatpush.bf16.msra.mxu0 0
    %1735 = vmatpush.bf16.msra.mxu0 0
    %1736 = vmatpush.bf16.msra.mxu0 0
    %1737 = vmatpush.bf16.msra.mxu0 0
    %1738 = vmatpush.bf16.msra.mxu0 0
    %1739 = vmatpush.bf16.msra.mxu0 0
    %1740 = vmatpush.bf16.msra.mxu0 %v1666
    %1741 = vmatmul.bf16.gmra.mxu0 %v1648
    %v1742 = vpop.f32.mrf.mxu0
    %v1743 = vadd.f32 0.0, %v1742
    %v1744 = vpop.f32.mrf.mxu0
    %1745 = vdwg.mxu0
    %v1746 = vadd.f32 %v1560, %v1678
    %v1747 = vadd.f32 %v1573, %v1691
    %v1748 = vadd.f32 %v1586, %v1704
    %v1749 = vadd.f32 %v1599, %v1717
    %v1750 = vadd.f32 %v1612, %v1730
    %v1751 = vadd.f32 %v1625, %v1743
    %v1752 = vld [vmem:[#allocation2] sm:$0xff]
    %v1753 = vld [vmem:[#allocation2 + $0x8] sm:$0xff]
    %v1754 = vld [vmem:[#allocation2 + $0x10] sm:$0xff]
    %v1755 = vld [vmem:[#allocation2 + $0x18] sm:$0xf]
    %s1756 = scalar_lea.vmem %s2, 12
    %v1757 = vld [vmem:[%s1756] sm:$0xf]
    %v1762 = vunpack.c.l.b16 %v1752
    %v1763 = vunpack.c.h.b16 %v1752
    %v1764 = vunpack.c.l.b16 %v1753
    %v1765 = vunpack.c.h.b16 %v1753
    %v1766 = vunpack.c.l.b16 %v1754
    %v1767 = vunpack.c.h.b16 %v1754
    %v1768 = vunpack.c.l.b16 %v1755
    %v1769 = vpack.c.b16 %v1762, %v1762
    %v1770 = vpack.c.b16 %v1763, %v1763
    %v1771 = vpack.c.b16 %v1764, %v1764
    %v1772 = vpack.c.b16 %v1765, %v1765
    %v1773 = vpack.c.b16 %v1766, %v1766
    %v1774 = vpack.c.b16 %v1767, %v1767
    %v1775 = vpack.c.b16 %v1768, %v1768
    %1776 = vrot.lane.b32.xlu0 %v1769, 1
    %v1777 = vpop.permute.xlu0 %1776
    %1778 = vrot.lane.b32.xlu0 %v1770, 1
    %v1779 = vpop.permute.xlu0 %1778
    %1780 = vrot.lane.b32.xlu0 %v1771, 1
    %v1781 = vpop.permute.xlu0 %1780
    %1782 = vrot.lane.b32.xlu0 %v1772, 1
    %v1783 = vpop.permute.xlu0 %1782
    %1784 = vrot.lane.b32.xlu0 %v1773, 1
    %v1785 = vpop.permute.xlu0 %1784
    %1786 = vrot.lane.b32.xlu0 %v1774, 1
    %v1787 = vpop.permute.xlu0 %1786
    %1788 = vrot.lane.b32.xlu0 %v1775, 1
    %v1789 = vpop.permute.xlu0 %1788
    %v1790 = vsel %vm446, %v1777, %v1779
    %v1791 = vsel %vm446, %v1779, %v1781
    %v1792 = vsel %vm446, %v1781, %v1783
    %v1793 = vsel %vm446, %v1783, %v1785
    %v1794 = vsel %vm446, %v1785, %v1787
    %v1795 = vsel %vm446, %v1787, %v1789
    %v1797 = vsel %vm66, %v1757, 0
    %v1800 = vsel %vm70, %v1790, 0
    %v1803 = vsel %vm70, %v1791, 0
    %v1806 = vsel %vm70, %v1792, 0
    %v1809 = vsel %vm70, %v1793, 0
    %v1812 = vsel %vm70, %v1794, 0
    %v1815 = vsel %vm70, %v1795, 0
    %1817 = vmatpush.bf16.msra.mxu0 0
    %1818 = vmatpush.bf16.msra.mxu0 0
    %1819 = vmatpush.bf16.msra.mxu0 0
    %1820 = vmatpush.bf16.msra.mxu0 0
    %1821 = vmatpush.bf16.msra.mxu0 0
    %1822 = vmatpush.bf16.msra.mxu0 0
    %1823 = vmatpush.bf16.msra.mxu0 0
    %1824 = vmatpush.bf16.msra.mxu0 %v1800
    %1825 = vmatmul.bf16.gmra.mxu0 %v1797
    %v1826 = vpop.f32.mrf.mxu0
    %v1827 = vadd.f32 0.0, %v1826
    %v1828 = vpop.f32.mrf.mxu0
    %1829 = vdwg.mxu0
    %1830 = vmatpush.bf16.msra.mxu0 0
    %1831 = vmatpush.bf16.msra.mxu0 0
    %1832 = vmatpush.bf16.msra.mxu0 0
    %1833 = vmatpush.bf16.msra.mxu0 0
    %1834 = vmatpush.bf16.msra.mxu0 0
    %1835 = vmatpush.bf16.msra.mxu0 0
    %1836 = vmatpush.bf16.msra.mxu0 0
    %1837 = vmatpush.bf16.msra.mxu0 %v1803
    %1838 = vmatmul.bf16.gmra.mxu0 %v1797
    %v1839 = vpop.f32.mrf.mxu0
    %v1840 = vadd.f32 0.0, %v1839
    %v1841 = vpop.f32.mrf.mxu0
    %1842 = vdwg.mxu0
    %1843 = vmatpush.bf16.msra.mxu0 0
    %1844 = vmatpush.bf16.msra.mxu0 0
    %1845 = vmatpush.bf16.msra.mxu0 0
    %1846 = vmatpush.bf16.msra.mxu0 0
    %1847 = vmatpush.bf16.msra.mxu0 0
    %1848 = vmatpush.bf16.msra.mxu0 0
    %1849 = vmatpush.bf16.msra.mxu0 0
    %1850 = vmatpush.bf16.msra.mxu0 %v1806
    %1851 = vmatmul.bf16.gmra.mxu0 %v1797
    %v1852 = vpop.f32.mrf.mxu0
    %v1853 = vadd.f32 0.0, %v1852
    %v1854 = vpop.f32.mrf.mxu0
    %1855 = vdwg.mxu0
    %1856 = vmatpush.bf16.msra.mxu0 0
    %1857 = vmatpush.bf16.msra.mxu0 0
    %1858 = vmatpush.bf16.msra.mxu0 0
    %1859 = vmatpush.bf16.msra.mxu0 0
    %1860 = vmatpush.bf16.msra.mxu0 0
    %1861 = vmatpush.bf16.msra.mxu0 0
    %1862 = vmatpush.bf16.msra.mxu0 0
    %1863 = vmatpush.bf16.msra.mxu0 %v1809
    %1864 = vmatmul.bf16.gmra.mxu0 %v1797
    %v1865 = vpop.f32.mrf.mxu0
    %v1866 = vadd.f32 0.0, %v1865
    %v1867 = vpop.f32.mrf.mxu0
    %1868 = vdwg.mxu0
    %1869 = vmatpush.bf16.msra.mxu0 0
    %1870 = vmatpush.bf16.msra.mxu0 0
    %1871 = vmatpush.bf16.msra.mxu0 0
    %1872 = vmatpush.bf16.msra.mxu0 0
    %1873 = vmatpush.bf16.msra.mxu0 0
    %1874 = vmatpush.bf16.msra.mxu0 0
    %1875 = vmatpush.bf16.msra.mxu0 0
    %1876 = vmatpush.bf16.msra.mxu0 %v1812
    %1877 = vmatmul.bf16.gmra.mxu0 %v1797
    %v1878 = vpop.f32.mrf.mxu0
    %v1879 = vadd.f32 0.0, %v1878
    %v1880 = vpop.f32.mrf.mxu0
    %1881 = vdwg.mxu0
    %1882 = vmatpush.bf16.msra.mxu0 0
    %1883 = vmatpush.bf16.msra.mxu0 0
    %1884 = vmatpush.bf16.msra.mxu0 0
    %1885 = vmatpush.bf16.msra.mxu0 0
    %1886 = vmatpush.bf16.msra.mxu0 0
    %1887 = vmatpush.bf16.msra.mxu0 0
    %1888 = vmatpush.bf16.msra.mxu0 0
    %1889 = vmatpush.bf16.msra.mxu0 %v1815
    %1890 = vmatmul.bf16.gmra.mxu0 %v1797
    %v1891 = vpop.f32.mrf.mxu0
    %v1892 = vadd.f32 0.0, %v1891
    %v1893 = vpop.f32.mrf.mxu0
    %1894 = vdwg.mxu0
    %v1895 = vadd.f32 %v1746, %v1827
    %v1896 = vadd.f32 %v1747, %v1840
    %v1897 = vadd.f32 %v1748, %v1853
    %v1898 = vadd.f32 %v1749, %v1866
    %v1899 = vadd.f32 %v1750, %v1879
    %v1900 = vadd.f32 %v1751, %v1892
    %v1901 = vld [vmem:[#allocation2 + $0x4] sm:$0xff]
    %v1902 = vld [vmem:[#allocation2 + $0xc] sm:$0xff]
    %v1903 = vld [vmem:[#allocation2 + $0x14] sm:$0xff]
    %s1904 = scalar_lea.vmem %s2, 16
    %v1905 = vld [vmem:[%s1904] sm:$0xf]
    %v1909 = vunpack.c.l.b16 %v1901
    %v1910 = vunpack.c.h.b16 %v1901
    %v1911 = vunpack.c.l.b16 %v1902
    %v1912 = vunpack.c.h.b16 %v1902
    %v1913 = vunpack.c.l.b16 %v1903
    %v1914 = vunpack.c.h.b16 %v1903
    %v1915 = vpack.c.b16 %v1909, %v1909
    %v1916 = vpack.c.b16 %v1910, %v1910
    %v1917 = vpack.c.b16 %v1911, %v1911
    %v1918 = vpack.c.b16 %v1912, %v1912
    %v1919 = vpack.c.b16 %v1913, %v1913
    %v1920 = vpack.c.b16 %v1914, %v1914
    %v1922 = vsel %vm66, %v1905, 0
    %v1925 = vsel %vm70, %v1915, 0
    %v1928 = vsel %vm70, %v1916, 0
    %v1931 = vsel %vm70, %v1917, 0
    %v1934 = vsel %vm70, %v1918, 0
    %v1937 = vsel %vm70, %v1919, 0
    %v1940 = vsel %vm70, %v1920, 0
    %1942 = vmatpush.bf16.msra.mxu0 0
    %1943 = vmatpush.bf16.msra.mxu0 0
    %1944 = vmatpush.bf16.msra.mxu0 0
    %1945 = vmatpush.bf16.msra.mxu0 0
    %1946 = vmatpush.bf16.msra.mxu0 0
    %1947 = vmatpush.bf16.msra.mxu0 0
    %1948 = vmatpush.bf16.msra.mxu0 0
    %1949 = vmatpush.bf16.msra.mxu0 %v1925
    %1950 = vmatmul.bf16.gmra.mxu0 %v1922
    %v1951 = vpop.f32.mrf.mxu0
    %v1952 = vadd.f32 0.0, %v1951
    %v1953 = vpop.f32.mrf.mxu0
    %1954 = vdwg.mxu0
    %1955 = vmatpush.bf16.msra.mxu0 0
    %1956 = vmatpush.bf16.msra.mxu0 0
    %1957 = vmatpush.bf16.msra.mxu0 0
    %1958 = vmatpush.bf16.msra.mxu0 0
    %1959 = vmatpush.bf16.msra.mxu0 0
    %1960 = vmatpush.bf16.msra.mxu0 0
    %1961 = vmatpush.bf16.msra.mxu0 0
    %1962 = vmatpush.bf16.msra.mxu0 %v1928
    %1963 = vmatmul.bf16.gmra.mxu0 %v1922
    %v1964 = vpop.f32.mrf.mxu0
    %v1965 = vadd.f32 0.0, %v1964
    %v1966 = vpop.f32.mrf.mxu0
    %1967 = vdwg.mxu0
    %1968 = vmatpush.bf16.msra.mxu0 0
    %1969 = vmatpush.bf16.msra.mxu0 0
    %1970 = vmatpush.bf16.msra.mxu0 0
    %1971 = vmatpush.bf16.msra.mxu0 0
    %1972 = vmatpush.bf16.msra.mxu0 0
    %1973 = vmatpush.bf16.msra.mxu0 0
    %1974 = vmatpush.bf16.msra.mxu0 0
    %1975 = vmatpush.bf16.msra.mxu0 %v1931
    %1976 = vmatmul.bf16.gmra.mxu0 %v1922
    %v1977 = vpop.f32.mrf.mxu0
    %v1978 = vadd.f32 0.0, %v1977
    %v1979 = vpop.f32.mrf.mxu0
    %1980 = vdwg.mxu0
    %1981 = vmatpush.bf16.msra.mxu0 0
    %1982 = vmatpush.bf16.msra.mxu0 0
    %1983 = vmatpush.bf16.msra.mxu0 0
    %1984 = vmatpush.bf16.msra.mxu0 0
    %1985 = vmatpush.bf16.msra.mxu0 0
    %1986 = vmatpush.bf16.msra.mxu0 0
    %1987 = vmatpush.bf16.msra.mxu0 0
    %1988 = vmatpush.bf16.msra.mxu0 %v1934
    %1989 = vmatmul.bf16.gmra.mxu0 %v1922
    %v1990 = vpop.f32.mrf.mxu0
    %v1991 = vadd.f32 0.0, %v1990
    %v1992 = vpop.f32.mrf.mxu0
    %1993 = vdwg.mxu0
    %1994 = vmatpush.bf16.msra.mxu0 0
    %1995 = vmatpush.bf16.msra.mxu0 0
    %1996 = vmatpush.bf16.msra.mxu0 0
    %1997 = vmatpush.bf16.msra.mxu0 0
    %1998 = vmatpush.bf16.msra.mxu0 0
    %1999 = vmatpush.bf16.msra.mxu0 0
    %2000 = vmatpush.bf16.msra.mxu0 0
    %2001 = vmatpush.bf16.msra.mxu0 %v1937
    %2002 = vmatmul.bf16.gmra.mxu0 %v1922
    %v2003 = vpop.f32.mrf.mxu0
    %v2004 = vadd.f32 0.0, %v2003
    %v2005 = vpop.f32.mrf.mxu0
    %2006 = vdwg.mxu0
    %2007 = vmatpush.bf16.msra.mxu0 0
    %2008 = vmatpush.bf16.msra.mxu0 0
    %2009 = vmatpush.bf16.msra.mxu0 0
    %2010 = vmatpush.bf16.msra.mxu0 0
    %2011 = vmatpush.bf16.msra.mxu0 0
    %2012 = vmatpush.bf16.msra.mxu0 0
    %2013 = vmatpush.bf16.msra.mxu0 0
    %2014 = vmatpush.bf16.msra.mxu0 %v1940
    %2015 = vmatmul.bf16.gmra.mxu0 %v1922
    %v2016 = vpop.f32.mrf.mxu0
    %v2017 = vadd.f32 0.0, %v2016
    %v2018 = vpop.f32.mrf.mxu0
    %2019 = vdwg.mxu0
    %v2020 = vadd.f32 %v1895, %v1952
    %v2021 = vadd.f32 %v1896, %v1965
    %v2022 = vadd.f32 %v1897, %v1978
    %v2023 = vadd.f32 %v1898, %v1991
    %v2024 = vadd.f32 %v1899, %v2004
    %v2025 = vadd.f32 %v1900, %v2017
    %s2026 = scalar_lea.vmem %s2, 20
    %v2027 = vld [vmem:[%s2026] sm:$0xf]
    %2028 = vrot.lane.b32.xlu0 %v1915, 127
    %v2029 = vpop.permute.xlu0 %2028
    %2030 = vrot.lane.b32.xlu0 %v1916, 127
    %v2031 = vpop.permute.xlu0 %2030
    %2032 = vrot.lane.b32.xlu0 %v1917, 127
    %v2033 = vpop.permute.xlu0 %2032
    %2034 = vrot.lane.b32.xlu0 %v1918, 127
    %v2035 = vpop.permute.xlu0 %2034
    %2036 = vrot.lane.b32.xlu0 %v1919, 127
    %v2037 = vpop.permute.xlu0 %2036
    %2038 = vrot.lane.b32.xlu0 %v1920, 127
    %v2039 = vpop.permute.xlu0 %2038
    %v2040 = vsel %vm679, %v2029, %v2031
    %v2041 = vsel %vm679, %v2031, %v2033
    %v2042 = vsel %vm679, %v2033, %v2035
    %v2043 = vsel %vm679, %v2035, %v2037
    %v2044 = vsel %vm679, %v2037, %v2039
    %v2046 = vsel %vm66, %v2027, 0
    %v2049 = vsel %vm70, %v2040, 0
    %v2052 = vsel %vm70, %v2041, 0
    %v2055 = vsel %vm70, %v2042, 0
    %v2058 = vsel %vm70, %v2043, 0
    %v2061 = vsel %vm70, %v2044, 0
    %v2064 = vsel %vm70, %v2039, 0
    %2066 = vmatpush.bf16.msra.mxu0 0
    %2067 = vmatpush.bf16.msra.mxu0 0
    %2068 = vmatpush.bf16.msra.mxu0 0
    %2069 = vmatpush.bf16.msra.mxu0 0
    %2070 = vmatpush.bf16.msra.mxu0 0
    %2071 = vmatpush.bf16.msra.mxu0 0
    %2072 = vmatpush.bf16.msra.mxu0 0
    %2073 = vmatpush.bf16.msra.mxu0 %v2049
    %2074 = vmatmul.bf16.gmra.mxu0 %v2046
    %v2075 = vpop.f32.mrf.mxu0
    %v2076 = vadd.f32 0.0, %v2075
    %v2077 = vpop.f32.mrf.mxu0
    %2078 = vdwg.mxu0
    %2079 = vmatpush.bf16.msra.mxu0 0
    %2080 = vmatpush.bf16.msra.mxu0 0
    %2081 = vmatpush.bf16.msra.mxu0 0
    %2082 = vmatpush.bf16.msra.mxu0 0
    %2083 = vmatpush.bf16.msra.mxu0 0
    %2084 = vmatpush.bf16.msra.mxu0 0
    %2085 = vmatpush.bf16.msra.mxu0 0
    %2086 = vmatpush.bf16.msra.mxu0 %v2052
    %2087 = vmatmul.bf16.gmra.mxu0 %v2046
    %v2088 = vpop.f32.mrf.mxu0
    %v2089 = vadd.f32 0.0, %v2088
    %v2090 = vpop.f32.mrf.mxu0
    %2091 = vdwg.mxu0
    %2092 = vmatpush.bf16.msra.mxu0 0
    %2093 = vmatpush.bf16.msra.mxu0 0
    %2094 = vmatpush.bf16.msra.mxu0 0
    %2095 = vmatpush.bf16.msra.mxu0 0
    %2096 = vmatpush.bf16.msra.mxu0 0
    %2097 = vmatpush.bf16.msra.mxu0 0
    %2098 = vmatpush.bf16.msra.mxu0 0
    %2099 = vmatpush.bf16.msra.mxu0 %v2055
    %2100 = vmatmul.bf16.gmra.mxu0 %v2046
    %v2101 = vpop.f32.mrf.mxu0
    %v2102 = vadd.f32 0.0, %v2101
    %v2103 = vpop.f32.mrf.mxu0
    %2104 = vdwg.mxu0
    %2105 = vmatpush.bf16.msra.mxu0 0
    %2106 = vmatpush.bf16.msra.mxu0 0
    %2107 = vmatpush.bf16.msra.mxu0 0
    %2108 = vmatpush.bf16.msra.mxu0 0
    %2109 = vmatpush.bf16.msra.mxu0 0
    %2110 = vmatpush.bf16.msra.mxu0 0
    %2111 = vmatpush.bf16.msra.mxu0 0
    %2112 = vmatpush.bf16.msra.mxu0 %v2058
    %2113 = vmatmul.bf16.gmra.mxu0 %v2046
    %v2114 = vpop.f32.mrf.mxu0
    %v2115 = vadd.f32 0.0, %v2114
    %v2116 = vpop.f32.mrf.mxu0
    %2117 = vdwg.mxu0
    %2118 = vmatpush.bf16.msra.mxu0 0
    %2119 = vmatpush.bf16.msra.mxu0 0
    %2120 = vmatpush.bf16.msra.mxu0 0
    %2121 = vmatpush.bf16.msra.mxu0 0
    %2122 = vmatpush.bf16.msra.mxu0 0
    %2123 = vmatpush.bf16.msra.mxu0 0
    %2124 = vmatpush.bf16.msra.mxu0 0
    %2125 = vmatpush.bf16.msra.mxu0 %v2061
    %2126 = vmatmul.bf16.gmra.mxu0 %v2046
    %v2127 = vpop.f32.mrf.mxu0
    %v2128 = vadd.f32 0.0, %v2127
    %v2129 = vpop.f32.mrf.mxu0
    %2130 = vdwg.mxu0
    %2131 = vmatpush.bf16.msra.mxu0 0
    %2132 = vmatpush.bf16.msra.mxu0 0
    %2133 = vmatpush.bf16.msra.mxu0 0
    %2134 = vmatpush.bf16.msra.mxu0 0
    %2135 = vmatpush.bf16.msra.mxu0 0
    %2136 = vmatpush.bf16.msra.mxu0 0
    %2137 = vmatpush.bf16.msra.mxu0 0
    %2138 = vmatpush.bf16.msra.mxu0 %v2064
    %2139 = vmatmul.bf16.gmra.mxu0 %v2046
    %v2140 = vpop.f32.mrf.mxu0
    %v2141 = vadd.f32 0.0, %v2140
    %v2142 = vpop.f32.mrf.mxu0
    %2143 = vdwg.mxu0
    %v2144 = vadd.f32 %v2020, %v2076
    %v2145 = vadd.f32 %v2021, %v2089
    %v2146 = vadd.f32 %v2022, %v2102
    %v2147 = vadd.f32 %v2023, %v2115
    %v2148 = vadd.f32 %v2024, %v2128
    %v2149 = vadd.f32 %v2025, %v2141
    %s2150 = scalar_lea.vmem %s2, 24
    %v2151 = vld [vmem:[%s2150] sm:$0xf]
    %2152 = vrot.lane.b32.xlu0 %v1915, 111
    %v2153 = vpop.permute.xlu0 %2152
    %2154 = vrot.lane.b32.xlu0 %v1916, 111
    %v2155 = vpop.permute.xlu0 %2154
    %2156 = vrot.lane.b32.xlu0 %v1917, 111
    %v2157 = vpop.permute.xlu0 %2156
    %2158 = vrot.lane.b32.xlu0 %v1918, 111
    %v2159 = vpop.permute.xlu0 %2158
    %2160 = vrot.lane.b32.xlu0 %v1919, 111
    %v2161 = vpop.permute.xlu0 %2160
    %2162 = vrot.lane.b32.xlu0 %v1920, 111
    %v2163 = vpop.permute.xlu0 %2162
    %v2164 = vsel %vm804, %v2153, %v2155
    %v2165 = vsel %vm804, %v2155, %v2157
    %v2166 = vsel %vm804, %v2157, %v2159
    %v2167 = vsel %vm804, %v2159, %v2161
    %v2168 = vsel %vm804, %v2161, %v2163
    %v2170 = vsel %vm66, %v2151, 0
    %v2173 = vsel %vm70, %v2164, 0
    %v2176 = vsel %vm70, %v2165, 0
    %v2179 = vsel %vm70, %v2166, 0
    %v2182 = vsel %vm70, %v2167, 0
    %v2185 = vsel %vm70, %v2168, 0
    %v2188 = vsel %vm70, %v2163, 0
    %2190 = vmatpush.bf16.msra.mxu0 0
    %2191 = vmatpush.bf16.msra.mxu0 0
    %2192 = vmatpush.bf16.msra.mxu0 0
    %2193 = vmatpush.bf16.msra.mxu0 0
    %2194 = vmatpush.bf16.msra.mxu0 0
    %2195 = vmatpush.bf16.msra.mxu0 0
    %2196 = vmatpush.bf16.msra.mxu0 0
    %2197 = vmatpush.bf16.msra.mxu0 %v2173
    %2198 = vmatmul.bf16.gmra.mxu0 %v2170
    %v2199 = vpop.f32.mrf.mxu0
    %v2200 = vadd.f32 0.0, %v2199
    %v2201 = vpop.f32.mrf.mxu0
    %2202 = vdwg.mxu0
    %2203 = vmatpush.bf16.msra.mxu0 0
    %2204 = vmatpush.bf16.msra.mxu0 0
    %2205 = vmatpush.bf16.msra.mxu0 0
    %2206 = vmatpush.bf16.msra.mxu0 0
    %2207 = vmatpush.bf16.msra.mxu0 0
    %2208 = vmatpush.bf16.msra.mxu0 0
    %2209 = vmatpush.bf16.msra.mxu0 0
    %2210 = vmatpush.bf16.msra.mxu0 %v2176
    %2211 = vmatmul.bf16.gmra.mxu0 %v2170
    %v2212 = vpop.f32.mrf.mxu0
    %v2213 = vadd.f32 0.0, %v2212
    %v2214 = vpop.f32.mrf.mxu0
    %2215 = vdwg.mxu0
    %2216 = vmatpush.bf16.msra.mxu0 0
    %2217 = vmatpush.bf16.msra.mxu0 0
    %2218 = vmatpush.bf16.msra.mxu0 0
    %2219 = vmatpush.bf16.msra.mxu0 0
    %2220 = vmatpush.bf16.msra.mxu0 0
    %2221 = vmatpush.bf16.msra.mxu0 0
    %2222 = vmatpush.bf16.msra.mxu0 0
    %2223 = vmatpush.bf16.msra.mxu0 %v2179
    %2224 = vmatmul.bf16.gmra.mxu0 %v2170
    %v2225 = vpop.f32.mrf.mxu0
    %v2226 = vadd.f32 0.0, %v2225
    %v2227 = vpop.f32.mrf.mxu0
    %2228 = vdwg.mxu0
    %2229 = vmatpush.bf16.msra.mxu0 0
    %2230 = vmatpush.bf16.msra.mxu0 0
    %2231 = vmatpush.bf16.msra.mxu0 0
    %2232 = vmatpush.bf16.msra.mxu0 0
    %2233 = vmatpush.bf16.msra.mxu0 0
    %2234 = vmatpush.bf16.msra.mxu0 0
    %2235 = vmatpush.bf16.msra.mxu0 0
    %2236 = vmatpush.bf16.msra.mxu0 %v2182
    %2237 = vmatmul.bf16.gmra.mxu0 %v2170
    %v2238 = vpop.f32.mrf.mxu0
    %v2239 = vadd.f32 0.0, %v2238
    %v2240 = vpop.f32.mrf.mxu0
    %2241 = vdwg.mxu0
    %2242 = vmatpush.bf16.msra.mxu0 0
    %2243 = vmatpush.bf16.msra.mxu0 0
    %2244 = vmatpush.bf16.msra.mxu0 0
    %2245 = vmatpush.bf16.msra.mxu0 0
    %2246 = vmatpush.bf16.msra.mxu0 0
    %2247 = vmatpush.bf16.msra.mxu0 0
    %2248 = vmatpush.bf16.msra.mxu0 0
    %2249 = vmatpush.bf16.msra.mxu0 %v2185
    %2250 = vmatmul.bf16.gmra.mxu0 %v2170
    %v2251 = vpop.f32.mrf.mxu0
    %v2252 = vadd.f32 0.0, %v2251
    %v2253 = vpop.f32.mrf.mxu0
    %2254 = vdwg.mxu0
    %2255 = vmatpush.bf16.msra.mxu0 0
    %2256 = vmatpush.bf16.msra.mxu0 0
    %2257 = vmatpush.bf16.msra.mxu0 0
    %2258 = vmatpush.bf16.msra.mxu0 0
    %2259 = vmatpush.bf16.msra.mxu0 0
    %2260 = vmatpush.bf16.msra.mxu0 0
    %2261 = vmatpush.bf16.msra.mxu0 0
    %2262 = vmatpush.bf16.msra.mxu0 %v2188
    %2263 = vmatmul.bf16.gmra.mxu0 %v2170
    %v2264 = vpop.f32.mrf.mxu0
    %v2265 = vadd.f32 0.0, %v2264
    %v2266 = vpop.f32.mrf.mxu0
    %2267 = vdwg.mxu0
    %v2268 = vadd.f32 %v2144, %v2200
    %v2269 = vadd.f32 %v2145, %v2213
    %v2270 = vadd.f32 %v2146, %v2226
    %v2271 = vadd.f32 %v2147, %v2239
    %v2272 = vadd.f32 %v2148, %v2252
    %v2273 = vadd.f32 %v2149, %v2265
    %s2274 = scalar_lea.vmem %s2, 28
    %v2275 = vld [vmem:[%s2274] sm:$0xf]
    %2276 = vrot.lane.b32.xlu0 %v1915, 110
    %v2277 = vpop.permute.xlu0 %2276
    %2278 = vrot.lane.b32.xlu0 %v1916, 110
    %v2279 = vpop.permute.xlu0 %2278
    %2280 = vrot.lane.b32.xlu0 %v1917, 110
    %v2281 = vpop.permute.xlu0 %2280
    %2282 = vrot.lane.b32.xlu0 %v1918, 110
    %v2283 = vpop.permute.xlu0 %2282
    %2284 = vrot.lane.b32.xlu0 %v1919, 110
    %v2285 = vpop.permute.xlu0 %2284
    %2286 = vrot.lane.b32.xlu0 %v1920, 110
    %v2287 = vpop.permute.xlu0 %2286
    %v2288 = vsel %vm929, %v2277, %v2279
    %v2289 = vsel %vm929, %v2279, %v2281
    %v2290 = vsel %vm929, %v2281, %v2283
    %v2291 = vsel %vm929, %v2283, %v2285
    %v2292 = vsel %vm929, %v2285, %v2287
    %v2294 = vsel %vm66, %v2275, 0
    %v2297 = vsel %vm70, %v2288, 0
    %v2300 = vsel %vm70, %v2289, 0
    %v2303 = vsel %vm70, %v2290, 0
    %v2306 = vsel %vm70, %v2291, 0
    %v2309 = vsel %vm70, %v2292, 0
    %v2312 = vsel %vm70, %v2287, 0
    %2314 = vmatpush.bf16.msra.mxu0 0
    %2315 = vmatpush.bf16.msra.mxu0 0
    %2316 = vmatpush.bf16.msra.mxu0 0
    %2317 = vmatpush.bf16.msra.mxu0 0
    %2318 = vmatpush.bf16.msra.mxu0 0
    %2319 = vmatpush.bf16.msra.mxu0 0
    %2320 = vmatpush.bf16.msra.mxu0 0
    %2321 = vmatpush.bf16.msra.mxu0 %v2297
    %2322 = vmatmul.bf16.gmra.mxu0 %v2294
    %v2323 = vpop.f32.mrf.mxu0
    %v2324 = vadd.f32 0.0, %v2323
    %v2325 = vpop.f32.mrf.mxu0
    %2326 = vdwg.mxu0
    %2327 = vmatpush.bf16.msra.mxu0 0
    %2328 = vmatpush.bf16.msra.mxu0 0
    %2329 = vmatpush.bf16.msra.mxu0 0
    %2330 = vmatpush.bf16.msra.mxu0 0
    %2331 = vmatpush.bf16.msra.mxu0 0
    %2332 = vmatpush.bf16.msra.mxu0 0
    %2333 = vmatpush.bf16.msra.mxu0 0
    %2334 = vmatpush.bf16.msra.mxu0 %v2300
    %2335 = vmatmul.bf16.gmra.mxu0 %v2294
    %v2336 = vpop.f32.mrf.mxu0
    %v2337 = vadd.f32 0.0, %v2336
    %v2338 = vpop.f32.mrf.mxu0
    %2339 = vdwg.mxu0
    %2340 = vmatpush.bf16.msra.mxu0 0
    %2341 = vmatpush.bf16.msra.mxu0 0
    %2342 = vmatpush.bf16.msra.mxu0 0
    %2343 = vmatpush.bf16.msra.mxu0 0
    %2344 = vmatpush.bf16.msra.mxu0 0
    %2345 = vmatpush.bf16.msra.mxu0 0
    %2346 = vmatpush.bf16.msra.mxu0 0
    %2347 = vmatpush.bf16.msra.mxu0 %v2303
    %2348 = vmatmul.bf16.gmra.mxu0 %v2294
    %v2349 = vpop.f32.mrf.mxu0
    %v2350 = vadd.f32 0.0, %v2349
    %v2351 = vpop.f32.mrf.mxu0
    %2352 = vdwg.mxu0
    %2353 = vmatpush.bf16.msra.mxu0 0
    %2354 = vmatpush.bf16.msra.mxu0 0
    %2355 = vmatpush.bf16.msra.mxu0 0
    %2356 = vmatpush.bf16.msra.mxu0 0
    %2357 = vmatpush.bf16.msra.mxu0 0
    %2358 = vmatpush.bf16.msra.mxu0 0
    %2359 = vmatpush.bf16.msra.mxu0 0
    %2360 = vmatpush.bf16.msra.mxu0 %v2306
    %2361 = vmatmul.bf16.gmra.mxu0 %v2294
    %v2362 = vpop.f32.mrf.mxu0
    %v2363 = vadd.f32 0.0, %v2362
    %v2364 = vpop.f32.mrf.mxu0
    %2365 = vdwg.mxu0
    %2366 = vmatpush.bf16.msra.mxu0 0
    %2367 = vmatpush.bf16.msra.mxu0 0
    %2368 = vmatpush.bf16.msra.mxu0 0
    %2369 = vmatpush.bf16.msra.mxu0 0
    %2370 = vmatpush.bf16.msra.mxu0 0
    %2371 = vmatpush.bf16.msra.mxu0 0
    %2372 = vmatpush.bf16.msra.mxu0 0
    %2373 = vmatpush.bf16.msra.mxu0 %v2309
    %2374 = vmatmul.bf16.gmra.mxu0 %v2294
    %v2375 = vpop.f32.mrf.mxu0
    %v2376 = vadd.f32 0.0, %v2375
    %v2377 = vpop.f32.mrf.mxu0
    %2378 = vdwg.mxu0
    %2379 = vmatpush.bf16.msra.mxu0 0
    %2380 = vmatpush.bf16.msra.mxu0 0
    %2381 = vmatpush.bf16.msra.mxu0 0
    %2382 = vmatpush.bf16.msra.mxu0 0
    %2383 = vmatpush.bf16.msra.mxu0 0
    %2384 = vmatpush.bf16.msra.mxu0 0
    %2385 = vmatpush.bf16.msra.mxu0 0
    %2386 = vmatpush.bf16.msra.mxu0 %v2312
    %2387 = vmatmul.bf16.gmra.mxu0 %v2294
    %v2388 = vpop.f32.mrf.mxu0
    %v2389 = vadd.f32 0.0, %v2388
    %v2390 = vpop.f32.mrf.mxu0
    %2391 = vdwg.mxu0
    %v2392 = vadd.f32 %v2268, %v2324
    %v2393 = vadd.f32 %v2269, %v2337
    %v2394 = vadd.f32 %v2270, %v2350
    %v2395 = vadd.f32 %v2271, %v2363
    %v2396 = vadd.f32 %v2272, %v2376
    %v2397 = vadd.f32 %v2273, %v2389
    %s2398 = scalar_lea.vmem %s2, 32
    %v2399 = vld [vmem:[%s2398] sm:$0xf]
    %2400 = vrot.lane.b32.xlu0 %v1915, 109
    %v2401 = vpop.permute.xlu0 %2400
    %2402 = vrot.lane.b32.xlu0 %v1916, 109
    %v2403 = vpop.permute.xlu0 %2402
    %2404 = vrot.lane.b32.xlu0 %v1917, 109
    %v2405 = vpop.permute.xlu0 %2404
    %2406 = vrot.lane.b32.xlu0 %v1918, 109
    %v2407 = vpop.permute.xlu0 %2406
    %2408 = vrot.lane.b32.xlu0 %v1919, 109
    %v2409 = vpop.permute.xlu0 %2408
    %2410 = vrot.lane.b32.xlu0 %v1920, 109
    %v2411 = vpop.permute.xlu0 %2410
    %v2412 = vsel %vm1054, %v2401, %v2403
    %v2413 = vsel %vm1054, %v2403, %v2405
    %v2414 = vsel %vm1054, %v2405, %v2407
    %v2415 = vsel %vm1054, %v2407, %v2409
    %v2416 = vsel %vm1054, %v2409, %v2411
    %v2418 = vsel %vm66, %v2399, 0
    %v2421 = vsel %vm70, %v2412, 0
    %v2424 = vsel %vm70, %v2413, 0
    %v2427 = vsel %vm70, %v2414, 0
    %v2430 = vsel %vm70, %v2415, 0
    %v2433 = vsel %vm70, %v2416, 0
    %v2436 = vsel %vm70, %v2411, 0
    %2438 = vmatpush.bf16.msra.mxu0 0
    %2439 = vmatpush.bf16.msra.mxu0 0
    %2440 = vmatpush.bf16.msra.mxu0 0
    %2441 = vmatpush.bf16.msra.mxu0 0
    %2442 = vmatpush.bf16.msra.mxu0 0
    %2443 = vmatpush.bf16.msra.mxu0 0
    %2444 = vmatpush.bf16.msra.mxu0 0
    %2445 = vmatpush.bf16.msra.mxu0 %v2421
    %2446 = vmatmul.bf16.gmra.mxu0 %v2418
    %v2447 = vpop.f32.mrf.mxu0
    %v2448 = vadd.f32 0.0, %v2447
    %v2449 = vpop.f32.mrf.mxu0
    %2450 = vdwg.mxu0
    %2451 = vmatpush.bf16.msra.mxu0 0
    %2452 = vmatpush.bf16.msra.mxu0 0
    %2453 = vmatpush.bf16.msra.mxu0 0
    %2454 = vmatpush.bf16.msra.mxu0 0
    %2455 = vmatpush.bf16.msra.mxu0 0
    %2456 = vmatpush.bf16.msra.mxu0 0
    %2457 = vmatpush.bf16.msra.mxu0 0
    %2458 = vmatpush.bf16.msra.mxu0 %v2424
    %2459 = vmatmul.bf16.gmra.mxu0 %v2418
    %v2460 = vpop.f32.mrf.mxu0
    %v2461 = vadd.f32 0.0, %v2460
    %v2462 = vpop.f32.mrf.mxu0
    %2463 = vdwg.mxu0
    %2464 = vmatpush.bf16.msra.mxu0 0
    %2465 = vmatpush.bf16.msra.mxu0 0
    %2466 = vmatpush.bf16.msra.mxu0 0
    %2467 = vmatpush.bf16.msra.mxu0 0
    %2468 = vmatpush.bf16.msra.mxu0 0
    %2469 = vmatpush.bf16.msra.mxu0 0
    %2470 = vmatpush.bf16.msra.mxu0 0
    %2471 = vmatpush.bf16.msra.mxu0 %v2427
    %2472 = vmatmul.bf16.gmra.mxu0 %v2418
    %v2473 = vpop.f32.mrf.mxu0
    %v2474 = vadd.f32 0.0, %v2473
    %v2475 = vpop.f32.mrf.mxu0
    %2476 = vdwg.mxu0
    %2477 = vmatpush.bf16.msra.mxu0 0
    %2478 = vmatpush.bf16.msra.mxu0 0
    %2479 = vmatpush.bf16.msra.mxu0 0
    %2480 = vmatpush.bf16.msra.mxu0 0
    %2481 = vmatpush.bf16.msra.mxu0 0
    %2482 = vmatpush.bf16.msra.mxu0 0
    %2483 = vmatpush.bf16.msra.mxu0 0
    %2484 = vmatpush.bf16.msra.mxu0 %v2430
    %2485 = vmatmul.bf16.gmra.mxu0 %v2418
    %v2486 = vpop.f32.mrf.mxu0
    %v2487 = vadd.f32 0.0, %v2486
    %v2488 = vpop.f32.mrf.mxu0
    %2489 = vdwg.mxu0
    %2490 = vmatpush.bf16.msra.mxu0 0
    %2491 = vmatpush.bf16.msra.mxu0 0
    %2492 = vmatpush.bf16.msra.mxu0 0
    %2493 = vmatpush.bf16.msra.mxu0 0
    %2494 = vmatpush.bf16.msra.mxu0 0
    %2495 = vmatpush.bf16.msra.mxu0 0
    %2496 = vmatpush.bf16.msra.mxu0 0
    %2497 = vmatpush.bf16.msra.mxu0 %v2433
    %2498 = vmatmul.bf16.gmra.mxu0 %v2418
    %v2499 = vpop.f32.mrf.mxu0
    %v2500 = vadd.f32 0.0, %v2499
    %v2501 = vpop.f32.mrf.mxu0
    %2502 = vdwg.mxu0
    %2503 = vmatpush.bf16.msra.mxu0 0
    %2504 = vmatpush.bf16.msra.mxu0 0
    %2505 = vmatpush.bf16.msra.mxu0 0
    %2506 = vmatpush.bf16.msra.mxu0 0
    %2507 = vmatpush.bf16.msra.mxu0 0
    %2508 = vmatpush.bf16.msra.mxu0 0
    %2509 = vmatpush.bf16.msra.mxu0 0
    %2510 = vmatpush.bf16.msra.mxu0 %v2436
    %2511 = vmatmul.bf16.gmra.mxu0 %v2418
    %v2512 = vpop.f32.mrf.mxu0
    %v2513 = vadd.f32 0.0, %v2512
    %v2514 = vpop.f32.mrf.mxu0
    %2515 = vdwg.mxu0
    %v2516 = vadd.f32 %v2392, %v2448
    %v2517 = vadd.f32 %v2393, %v2461
    %v2518 = vadd.f32 %v2394, %v2474
    %v2519 = vadd.f32 %v2395, %v2487
    %v2520 = vadd.f32 %v2396, %v2500
    %v2521 = vadd.f32 %v2397, %v2513
    %v2522 = vmul.f32 %v2516, %v1166
    %v2523 = vmul.f32 %v2517, %v1167
    %v2524 = vmul.f32 %v2518, %v1168
    %v2525 = vmul.f32 %v2519, %v1169
    %v2526 = vmul.f32 %v2520, %v1170
    %v2527 = vmul.f32 %v2521, %v1171
    %v2528 = vadd.f32 %v2522, %v2523
    %v2529 = vadd.f32 %v2528, %v2524
    %v2530 = vadd.f32 %v2529, %v2525
    %v2531 = vadd.f32 %v2530, %v2526
    %v2532 = vsel %vm66, %v2527, 0.0
    %v2533 = vadd.f32 %v2531, %v2532
    %2534 = vadd.xlane.f32.xlu0 %v2533
    %v2535 = vpop.xlane.xlu0 %2534
    %v2536 = vmul.f32 %v2535, %v1198
    %v2537 = vsub.f32 %v2516, %v2536
    %v2538 = vsub.f32 %v2517, %v2536
    %v2539 = vsub.f32 %v2518, %v2536
    %v2540 = vsub.f32 %v2519, %v2536
    %v2541 = vsub.f32 %v2520, %v2536
    %v2542 = vsub.f32 %v2521, %v2536
    %v2543 = vmul.f32 %v1166, %v2537
    %v2544 = vmul.f32 %v1167, %v2538
    %v2545 = vmul.f32 %v1168, %v2539
    %v2546 = vmul.f32 %v1169, %v2540
    %v2547 = vmul.f32 %v1170, %v2541
    %v2548 = vmul.f32 %v1171, %v2542
    %v2549 = vmul.f32 %v2543, %v2537
    %v2550 = vmul.f32 %v2544, %v2538
    %v2551 = vmul.f32 %v2545, %v2539
    %v2552 = vmul.f32 %v2546, %v2540
    %v2553 = vmul.f32 %v2547, %v2541
    %v2554 = vmul.f32 %v2548, %v2542
    %v2555 = vadd.f32 %v2549, %v2550
    %v2556 = vadd.f32 %v2555, %v2551
    %v2557 = vadd.f32 %v2556, %v2552
    %v2558 = vadd.f32 %v2557, %v2553
    %v2559 = vsel %vm66, %v2554, 0.0
    %v2560 = vadd.f32 %v2558, %v2559
    %2561 = vadd.xlane.f32.xlu0 %v2560
    %v2562 = vpop.xlane.xlu0 %2561
    %v2563 = vmul.f32 %v2562, %v1198
    %2564 = vset.pattern.permute.xlu0 2
    %2565 = vperm.xlu0 %2564, %v20
    %v2566 = vpop.permute.xlu0 %2565
    %v2568 = vmul.f32 %v2566, %v2537
    %v2569 = vmul.f32 %v2566, %v2538
    %v2570 = vmul.f32 %v2566, %v2539
    %v2571 = vmul.f32 %v2566, %v2540
    %v2572 = vmul.f32 %v2566, %v2541
    %v2573 = vmul.f32 %v2566, %v2542
    %v2574 = vadd.f32 %v2563, 1e-05
    %v2575 = vrsqrt.pop %v2574
    %v2576 = vmul.f32 %v2575, %v2574
    %v2577 = vmul.f32 %v2576, %v2575
    %v2578 = vmul.f32 0.5, %v2577
    %v2579 = vsub.f32 1.5, %v2578
    %v2580 = vmul.f32 %v2575, %v2579
    %vm2581 = vweird.f32 %v2574
    %vm2582 = vweird.f32 %v2575
    %vm2583 = vmor %vm2581, %vm2582
    %v2584 = vsel %vm2583, %v2575, %v2580
    %v2585 = vmul.f32 %v2568, %v2584
    %v2586 = vmul.f32 %v2569, %v2584
    %v2587 = vmul.f32 %v2570, %v2584
    %v2588 = vmul.f32 %v2571, %v2584
    %v2589 = vmul.f32 %v2572, %v2584
    %v2590 = vmul.f32 %v2573, %v2584
    %2591 = vset.pattern.permute.xlu0 3
    %2592 = vperm.xlu0 %2591, %v20
    %v2593 = vpop.permute.xlu0 %2592
    %v2595 = vadd.f32 %v2585, %v2593
    %v2596 = vadd.f32 %v2586, %v2593
    %v2597 = vadd.f32 %v2587, %v2593
    %v2598 = vadd.f32 %v2588, %v2593
    %v2599 = vadd.f32 %v2589, %v2593
    %v2600 = vadd.f32 %v2590, %v2593
    %v2601 = vmax.f32 %v2595, 0.0
    %v2602 = vmax.f32 %v2596, 0.0
    %v2603 = vmax.f32 %v2597, 0.0
    %v2604 = vmax.f32 %v2598, 0.0
    %v2605 = vmax.f32 %v2599, 0.0
    %v2606 = vmax.f32 %v2600, 0.0
    %v2607 = vmul.f32 %v2601, %v1166
    %v2608 = vmul.f32 %v2602, %v1167
    %v2609 = vmul.f32 %v2603, %v1168
    %v2610 = vmul.f32 %v2604, %v1169
    %v2611 = vmul.f32 %v2605, %v1170
    %v2612 = vmul.f32 %v2606, %v1171
    %v2613 = vpack.c.bf16 %v2608, %v2607
    %v2614 = vpack.c.bf16 %v2610, %v2609
    %v2615 = vpack.c.bf16 %v2612, %v2611
    %2616 = vst [vmem:[#allocation2 + $0x4] sm:$0xff] %v2613
    %2617 = vst [vmem:[#allocation2 + $0xc] sm:$0xff] %v2614
    %2618 = vst.msk [vmem:[#allocation2 + $0x14] sm:$0xff] %vm1373, %v2615
    %v2619 = vld [vmem:[#allocation2] sm:$0xff]
    %v2620 = vld [vmem:[#allocation2 + $0x8] sm:$0xff]
    %v2621 = vld [vmem:[#allocation2 + $0x10] sm:$0xff]
    %s2622 = scalar_lea.vmem %s2, 36
    %v2623 = vld [vmem:[%s2622] sm:$0xf]
    %s2624 = scalar_lea.vmem %s2, 40
    %v2625 = vld [vmem:[%s2624] sm:$0xf]
    %v2629 = vunpack.c.l.b16 %v2619
    %v2630 = vunpack.c.h.b16 %v2619
    %v2631 = vunpack.c.l.b16 %v2620
    %v2632 = vunpack.c.h.b16 %v2620
    %v2633 = vunpack.c.l.b16 %v2621
    %v2634 = vunpack.c.h.b16 %v2621
    %v2635 = vpack.c.b16 %v2629, %v2629
    %v2636 = vpack.c.b16 %v2630, %v2630
    %v2637 = vpack.c.b16 %v2631, %v2631
    %v2638 = vpack.c.b16 %v2632, %v2632
    %v2639 = vpack.c.b16 %v2633, %v2633
    %v2640 = vpack.c.b16 %v2634, %v2634
    %2641 = vrot.lane.b32.xlu0 %v2635, 18
    %v2642 = vpop.permute.xlu0 %2641
    %2643 = vrot.lane.b32.xlu0 %v2636, 18
    %v2644 = vpop.permute.xlu0 %2643
    %2645 = vrot.lane.b32.xlu0 %v2637, 18
    %v2646 = vpop.permute.xlu0 %2645
    %2647 = vrot.lane.b32.xlu0 %v2638, 18
    %v2648 = vpop.permute.xlu0 %2647
    %2649 = vrot.lane.b32.xlu0 %v2639, 18
    %v2650 = vpop.permute.xlu0 %2649
    %2651 = vrot.lane.b32.xlu0 %v2640, 18
    %v2652 = vpop.permute.xlu0 %2651
    %v2653 = vsel %vm60, %v2642, %v2644
    %v2654 = vsel %vm60, %v2644, %v2646
    %v2655 = vsel %vm60, %v2646, %v2648
    %v2656 = vsel %vm60, %v2648, %v2650
    %v2657 = vsel %vm60, %v2650, %v2652
    %v2659 = vsel %vm66, %v2625, 0
    %v2662 = vsel %vm70, %v2653, 0
    %v2665 = vsel %vm70, %v2654, 0
    %v2668 = vsel %vm70, %v2655, 0
    %v2671 = vsel %vm70, %v2656, 0
    %v2674 = vsel %vm70, %v2657, 0
    %v2677 = vsel %vm70, %v2652, 0
    %2679 = vmatpush.bf16.msra.mxu0 0
    %2680 = vmatpush.bf16.msra.mxu0 0
    %2681 = vmatpush.bf16.msra.mxu0 0
    %2682 = vmatpush.bf16.msra.mxu0 0
    %2683 = vmatpush.bf16.msra.mxu0 0
    %2684 = vmatpush.bf16.msra.mxu0 0
    %2685 = vmatpush.bf16.msra.mxu0 0
    %2686 = vmatpush.bf16.msra.mxu0 %v2662
    %2687 = vmatmul.bf16.gmra.mxu0 %v2659
    %v2688 = vpop.f32.mrf.mxu0
    %v2689 = vadd.f32 0.0, %v2688
    %v2690 = vpop.f32.mrf.mxu0
    %2691 = vdwg.mxu0
    %2692 = vmatpush.bf16.msra.mxu0 0
    %2693 = vmatpush.bf16.msra.mxu0 0
    %2694 = vmatpush.bf16.msra.mxu0 0
    %2695 = vmatpush.bf16.msra.mxu0 0
    %2696 = vmatpush.bf16.msra.mxu0 0
    %2697 = vmatpush.bf16.msra.mxu0 0
    %2698 = vmatpush.bf16.msra.mxu0 0
    %2699 = vmatpush.bf16.msra.mxu0 %v2665
    %2700 = vmatmul.bf16.gmra.mxu0 %v2659
    %v2701 = vpop.f32.mrf.mxu0
    %v2702 = vadd.f32 0.0, %v2701
    %v2703 = vpop.f32.mrf.mxu0
    %2704 = vdwg.mxu0
    %2705 = vmatpush.bf16.msra.mxu0 0
    %2706 = vmatpush.bf16.msra.mxu0 0
    %2707 = vmatpush.bf16.msra.mxu0 0
    %2708 = vmatpush.bf16.msra.mxu0 0
    %2709 = vmatpush.bf16.msra.mxu0 0
    %2710 = vmatpush.bf16.msra.mxu0 0
    %2711 = vmatpush.bf16.msra.mxu0 0
    %2712 = vmatpush.bf16.msra.mxu0 %v2668
    %2713 = vmatmul.bf16.gmra.mxu0 %v2659
    %v2714 = vpop.f32.mrf.mxu0
    %v2715 = vadd.f32 0.0, %v2714
    %v2716 = vpop.f32.mrf.mxu0
    %2717 = vdwg.mxu0
    %2718 = vmatpush.bf16.msra.mxu0 0
    %2719 = vmatpush.bf16.msra.mxu0 0
    %2720 = vmatpush.bf16.msra.mxu0 0
    %2721 = vmatpush.bf16.msra.mxu0 0
    %2722 = vmatpush.bf16.msra.mxu0 0
    %2723 = vmatpush.bf16.msra.mxu0 0
    %2724 = vmatpush.bf16.msra.mxu0 0
    %2725 = vmatpush.bf16.msra.mxu0 %v2671
    %2726 = vmatmul.bf16.gmra.mxu0 %v2659
    %v2727 = vpop.f32.mrf.mxu0
    %v2728 = vadd.f32 0.0, %v2727
    %v2729 = vpop.f32.mrf.mxu0
    %2730 = vdwg.mxu0
    %2731 = vmatpush.bf16.msra.mxu0 0
    %2732 = vmatpush.bf16.msra.mxu0 0
    %2733 = vmatpush.bf16.msra.mxu0 0
    %2734 = vmatpush.bf16.msra.mxu0 0
    %2735 = vmatpush.bf16.msra.mxu0 0
    %2736 = vmatpush.bf16.msra.mxu0 0
    %2737 = vmatpush.bf16.msra.mxu0 0
    %2738 = vmatpush.bf16.msra.mxu0 %v2674
    %2739 = vmatmul.bf16.gmra.mxu0 %v2659
    %v2740 = vpop.f32.mrf.mxu0
    %v2741 = vadd.f32 0.0, %v2740
    %v2742 = vpop.f32.mrf.mxu0
    %2743 = vdwg.mxu0
    %2744 = vmatpush.bf16.msra.mxu0 0
    %2745 = vmatpush.bf16.msra.mxu0 0
    %2746 = vmatpush.bf16.msra.mxu0 0
    %2747 = vmatpush.bf16.msra.mxu0 0
    %2748 = vmatpush.bf16.msra.mxu0 0
    %2749 = vmatpush.bf16.msra.mxu0 0
    %2750 = vmatpush.bf16.msra.mxu0 0
    %2751 = vmatpush.bf16.msra.mxu0 %v2677
    %2752 = vmatmul.bf16.gmra.mxu0 %v2659
    %v2753 = vpop.f32.mrf.mxu0
    %v2754 = vadd.f32 0.0, %v2753
    %v2755 = vpop.f32.mrf.mxu0
    %2756 = vdwg.mxu0
    %2757 = vrot.lane.b32.xlu0 %v2635, 19
    %v2758 = vpop.permute.xlu0 %2757
    %2759 = vrot.lane.b32.xlu0 %v2636, 19
    %v2760 = vpop.permute.xlu0 %2759
    %2761 = vrot.lane.b32.xlu0 %v2637, 19
    %v2762 = vpop.permute.xlu0 %2761
    %2763 = vrot.lane.b32.xlu0 %v2638, 19
    %v2764 = vpop.permute.xlu0 %2763
    %2765 = vrot.lane.b32.xlu0 %v2639, 19
    %v2766 = vpop.permute.xlu0 %2765
    %2767 = vrot.lane.b32.xlu0 %v2640, 19
    %v2768 = vpop.permute.xlu0 %2767
    %v2769 = vsel %vm179, %v2758, %v2760
    %v2770 = vsel %vm179, %v2760, %v2762
    %v2771 = vsel %vm179, %v2762, %v2764
    %v2772 = vsel %vm179, %v2764, %v2766
    %v2773 = vsel %vm179, %v2766, %v2768
    %v2775 = vsel %vm66, %v2623, 0
    %v2778 = vsel %vm70, %v2769, 0
    %v2781 = vsel %vm70, %v2770, 0
    %v2784 = vsel %vm70, %v2771, 0
    %v2787 = vsel %vm70, %v2772, 0
    %v2790 = vsel %vm70, %v2773, 0
    %v2793 = vsel %vm70, %v2768, 0
    %2795 = vmatpush.bf16.msra.mxu0 0
    %2796 = vmatpush.bf16.msra.mxu0 0
    %2797 = vmatpush.bf16.msra.mxu0 0
    %2798 = vmatpush.bf16.msra.mxu0 0
    %2799 = vmatpush.bf16.msra.mxu0 0
    %2800 = vmatpush.bf16.msra.mxu0 0
    %2801 = vmatpush.bf16.msra.mxu0 0
    %2802 = vmatpush.bf16.msra.mxu0 %v2778
    %2803 = vmatmul.bf16.gmra.mxu0 %v2775
    %v2804 = vpop.f32.mrf.mxu0
    %v2805 = vadd.f32 %v2689, %v2804
    %v2806 = vpop.f32.mrf.mxu0
    %2807 = vdwg.mxu0
    %2808 = vmatpush.bf16.msra.mxu0 0
    %2809 = vmatpush.bf16.msra.mxu0 0
    %2810 = vmatpush.bf16.msra.mxu0 0
    %2811 = vmatpush.bf16.msra.mxu0 0
    %2812 = vmatpush.bf16.msra.mxu0 0
    %2813 = vmatpush.bf16.msra.mxu0 0
    %2814 = vmatpush.bf16.msra.mxu0 0
    %2815 = vmatpush.bf16.msra.mxu0 %v2781
    %2816 = vmatmul.bf16.gmra.mxu0 %v2775
    %v2817 = vpop.f32.mrf.mxu0
    %v2818 = vadd.f32 %v2702, %v2817
    %v2819 = vpop.f32.mrf.mxu0
    %2820 = vdwg.mxu0
    %2821 = vmatpush.bf16.msra.mxu0 0
    %2822 = vmatpush.bf16.msra.mxu0 0
    %2823 = vmatpush.bf16.msra.mxu0 0
    %2824 = vmatpush.bf16.msra.mxu0 0
    %2825 = vmatpush.bf16.msra.mxu0 0
    %2826 = vmatpush.bf16.msra.mxu0 0
    %2827 = vmatpush.bf16.msra.mxu0 0
    %2828 = vmatpush.bf16.msra.mxu0 %v2784
    %2829 = vmatmul.bf16.gmra.mxu0 %v2775
    %v2830 = vpop.f32.mrf.mxu0
    %v2831 = vadd.f32 %v2715, %v2830
    %v2832 = vpop.f32.mrf.mxu0
    %2833 = vdwg.mxu0
    %2834 = vmatpush.bf16.msra.mxu0 0
    %2835 = vmatpush.bf16.msra.mxu0 0
    %2836 = vmatpush.bf16.msra.mxu0 0
    %2837 = vmatpush.bf16.msra.mxu0 0
    %2838 = vmatpush.bf16.msra.mxu0 0
    %2839 = vmatpush.bf16.msra.mxu0 0
    %2840 = vmatpush.bf16.msra.mxu0 0
    %2841 = vmatpush.bf16.msra.mxu0 %v2787
    %2842 = vmatmul.bf16.gmra.mxu0 %v2775
    %v2843 = vpop.f32.mrf.mxu0
    %v2844 = vadd.f32 %v2728, %v2843
    %v2845 = vpop.f32.mrf.mxu0
    %2846 = vdwg.mxu0
    %2847 = vmatpush.bf16.msra.mxu0 0
    %2848 = vmatpush.bf16.msra.mxu0 0
    %2849 = vmatpush.bf16.msra.mxu0 0
    %2850 = vmatpush.bf16.msra.mxu0 0
    %2851 = vmatpush.bf16.msra.mxu0 0
    %2852 = vmatpush.bf16.msra.mxu0 0
    %2853 = vmatpush.bf16.msra.mxu0 0
    %2854 = vmatpush.bf16.msra.mxu0 %v2790
    %2855 = vmatmul.bf16.gmra.mxu0 %v2775
    %v2856 = vpop.f32.mrf.mxu0
    %v2857 = vadd.f32 %v2741, %v2856
    %v2858 = vpop.f32.mrf.mxu0
    %2859 = vdwg.mxu0
    %2860 = vmatpush.bf16.msra.mxu0 0
    %2861 = vmatpush.bf16.msra.mxu0 0
    %2862 = vmatpush.bf16.msra.mxu0 0
    %2863 = vmatpush.bf16.msra.mxu0 0
    %2864 = vmatpush.bf16.msra.mxu0 0
    %2865 = vmatpush.bf16.msra.mxu0 0
    %2866 = vmatpush.bf16.msra.mxu0 0
    %2867 = vmatpush.bf16.msra.mxu0 %v2793
    %2868 = vmatmul.bf16.gmra.mxu0 %v2775
    %v2869 = vpop.f32.mrf.mxu0
    %v2870 = vadd.f32 %v2754, %v2869
    %v2871 = vpop.f32.mrf.mxu0
    %2872 = vdwg.mxu0
    %s2873 = scalar_lea.vmem %s2, 44
    %v2874 = vld [vmem:[%s2873] sm:$0xf]
    %2875 = vrot.lane.b32.xlu0 %v2635, 17
    %v2876 = vpop.permute.xlu0 %2875
    %2877 = vrot.lane.b32.xlu0 %v2636, 17
    %v2878 = vpop.permute.xlu0 %2877
    %2879 = vrot.lane.b32.xlu0 %v2637, 17
    %v2880 = vpop.permute.xlu0 %2879
    %2881 = vrot.lane.b32.xlu0 %v2638, 17
    %v2882 = vpop.permute.xlu0 %2881
    %2883 = vrot.lane.b32.xlu0 %v2639, 17
    %v2884 = vpop.permute.xlu0 %2883
    %2885 = vrot.lane.b32.xlu0 %v2640, 17
    %v2886 = vpop.permute.xlu0 %2885
    %v2887 = vsel %vm298, %v2876, %v2878
    %v2888 = vsel %vm298, %v2878, %v2880
    %v2889 = vsel %vm298, %v2880, %v2882
    %v2890 = vsel %vm298, %v2882, %v2884
    %v2891 = vsel %vm298, %v2884, %v2886
    %v2893 = vsel %vm66, %v2874, 0
    %v2896 = vsel %vm70, %v2887, 0
    %v2899 = vsel %vm70, %v2888, 0
    %v2902 = vsel %vm70, %v2889, 0
    %v2905 = vsel %vm70, %v2890, 0
    %v2908 = vsel %vm70, %v2891, 0
    %v2911 = vsel %vm70, %v2886, 0
    %2913 = vmatpush.bf16.msra.mxu0 0
    %2914 = vmatpush.bf16.msra.mxu0 0
    %2915 = vmatpush.bf16.msra.mxu0 0
    %2916 = vmatpush.bf16.msra.mxu0 0
    %2917 = vmatpush.bf16.msra.mxu0 0
    %2918 = vmatpush.bf16.msra.mxu0 0
    %2919 = vmatpush.bf16.msra.mxu0 0
    %2920 = vmatpush.bf16.msra.mxu0 %v2896
    %2921 = vmatmul.bf16.gmra.mxu0 %v2893
    %v2922 = vpop.f32.mrf.mxu0
    %v2923 = vadd.f32 0.0, %v2922
    %v2924 = vpop.f32.mrf.mxu0
    %2925 = vdwg.mxu0
    %2926 = vmatpush.bf16.msra.mxu0 0
    %2927 = vmatpush.bf16.msra.mxu0 0
    %2928 = vmatpush.bf16.msra.mxu0 0
    %2929 = vmatpush.bf16.msra.mxu0 0
    %2930 = vmatpush.bf16.msra.mxu0 0
    %2931 = vmatpush.bf16.msra.mxu0 0
    %2932 = vmatpush.bf16.msra.mxu0 0
    %2933 = vmatpush.bf16.msra.mxu0 %v2899
    %2934 = vmatmul.bf16.gmra.mxu0 %v2893
    %v2935 = vpop.f32.mrf.mxu0
    %v2936 = vadd.f32 0.0, %v2935
    %v2937 = vpop.f32.mrf.mxu0
    %2938 = vdwg.mxu0
    %2939 = vmatpush.bf16.msra.mxu0 0
    %2940 = vmatpush.bf16.msra.mxu0 0
    %2941 = vmatpush.bf16.msra.mxu0 0
    %2942 = vmatpush.bf16.msra.mxu0 0
    %2943 = vmatpush.bf16.msra.mxu0 0
    %2944 = vmatpush.bf16.msra.mxu0 0
    %2945 = vmatpush.bf16.msra.mxu0 0
    %2946 = vmatpush.bf16.msra.mxu0 %v2902
    %2947 = vmatmul.bf16.gmra.mxu0 %v2893
    %v2948 = vpop.f32.mrf.mxu0
    %v2949 = vadd.f32 0.0, %v2948
    %v2950 = vpop.f32.mrf.mxu0
    %2951 = vdwg.mxu0
    %2952 = vmatpush.bf16.msra.mxu0 0
    %2953 = vmatpush.bf16.msra.mxu0 0
    %2954 = vmatpush.bf16.msra.mxu0 0
    %2955 = vmatpush.bf16.msra.mxu0 0
    %2956 = vmatpush.bf16.msra.mxu0 0
    %2957 = vmatpush.bf16.msra.mxu0 0
    %2958 = vmatpush.bf16.msra.mxu0 0
    %2959 = vmatpush.bf16.msra.mxu0 %v2905
    %2960 = vmatmul.bf16.gmra.mxu0 %v2893
    %v2961 = vpop.f32.mrf.mxu0
    %v2962 = vadd.f32 0.0, %v2961
    %v2963 = vpop.f32.mrf.mxu0
    %2964 = vdwg.mxu0
    %2965 = vmatpush.bf16.msra.mxu0 0
    %2966 = vmatpush.bf16.msra.mxu0 0
    %2967 = vmatpush.bf16.msra.mxu0 0
    %2968 = vmatpush.bf16.msra.mxu0 0
    %2969 = vmatpush.bf16.msra.mxu0 0
    %2970 = vmatpush.bf16.msra.mxu0 0
    %2971 = vmatpush.bf16.msra.mxu0 0
    %2972 = vmatpush.bf16.msra.mxu0 %v2908
    %2973 = vmatmul.bf16.gmra.mxu0 %v2893
    %v2974 = vpop.f32.mrf.mxu0
    %v2975 = vadd.f32 0.0, %v2974
    %v2976 = vpop.f32.mrf.mxu0
    %2977 = vdwg.mxu0
    %2978 = vmatpush.bf16.msra.mxu0 0
    %2979 = vmatpush.bf16.msra.mxu0 0
    %2980 = vmatpush.bf16.msra.mxu0 0
    %2981 = vmatpush.bf16.msra.mxu0 0
    %2982 = vmatpush.bf16.msra.mxu0 0
    %2983 = vmatpush.bf16.msra.mxu0 0
    %2984 = vmatpush.bf16.msra.mxu0 0
    %2985 = vmatpush.bf16.msra.mxu0 %v2911
    %2986 = vmatmul.bf16.gmra.mxu0 %v2893
    %v2987 = vpop.f32.mrf.mxu0
    %v2988 = vadd.f32 0.0, %v2987
    %v2989 = vpop.f32.mrf.mxu0
    %2990 = vdwg.mxu0
    %v2991 = vadd.f32 %v2805, %v2923
    %v2992 = vadd.f32 %v2818, %v2936
    %v2993 = vadd.f32 %v2831, %v2949
    %v2994 = vadd.f32 %v2844, %v2962
    %v2995 = vadd.f32 %v2857, %v2975
    %v2996 = vadd.f32 %v2870, %v2988
    %v2997 = vld [vmem:[#allocation2] sm:$0xff]
    %v2998 = vld [vmem:[#allocation2 + $0x8] sm:$0xff]
    %v2999 = vld [vmem:[#allocation2 + $0x10] sm:$0xff]
    %v3000 = vld [vmem:[#allocation2 + $0x18] sm:$0xf]
    %s3001 = scalar_lea.vmem %s2, 48
    %v3002 = vld [vmem:[%s3001] sm:$0xf]
    %v3007 = vunpack.c.l.b16 %v2997
    %v3008 = vunpack.c.h.b16 %v2997
    %v3009 = vunpack.c.l.b16 %v2998
    %v3010 = vunpack.c.h.b16 %v2998
    %v3011 = vunpack.c.l.b16 %v2999
    %v3012 = vunpack.c.h.b16 %v2999
    %v3013 = vunpack.c.l.b16 %v3000
    %v3014 = vpack.c.b16 %v3007, %v3007
    %v3015 = vpack.c.b16 %v3008, %v3008
    %v3016 = vpack.c.b16 %v3009, %v3009
    %v3017 = vpack.c.b16 %v3010, %v3010
    %v3018 = vpack.c.b16 %v3011, %v3011
    %v3019 = vpack.c.b16 %v3012, %v3012
    %v3020 = vpack.c.b16 %v3013, %v3013
    %3021 = vrot.lane.b32.xlu0 %v3014, 1
    %v3022 = vpop.permute.xlu0 %3021
    %3023 = vrot.lane.b32.xlu0 %v3015, 1
    %v3024 = vpop.permute.xlu0 %3023
    %3025 = vrot.lane.b32.xlu0 %v3016, 1
    %v3026 = vpop.permute.xlu0 %3025
    %3027 = vrot.lane.b32.xlu0 %v3017, 1
    %v3028 = vpop.permute.xlu0 %3027
    %3029 = vrot.lane.b32.xlu0 %v3018, 1
    %v3030 = vpop.permute.xlu0 %3029
    %3031 = vrot.lane.b32.xlu0 %v3019, 1
    %v3032 = vpop.permute.xlu0 %3031
    %3033 = vrot.lane.b32.xlu0 %v3020, 1
    %v3034 = vpop.permute.xlu0 %3033
    %v3035 = vsel %vm446, %v3022, %v3024
    %v3036 = vsel %vm446, %v3024, %v3026
    %v3037 = vsel %vm446, %v3026, %v3028
    %v3038 = vsel %vm446, %v3028, %v3030
    %v3039 = vsel %vm446, %v3030, %v3032
    %v3040 = vsel %vm446, %v3032, %v3034
    %v3042 = vsel %vm66, %v3002, 0
    %v3045 = vsel %vm70, %v3035, 0
    %v3048 = vsel %vm70, %v3036, 0
    %v3051 = vsel %vm70, %v3037, 0
    %v3054 = vsel %vm70, %v3038, 0
    %v3057 = vsel %vm70, %v3039, 0
    %v3060 = vsel %vm70, %v3040, 0
    %3062 = vmatpush.bf16.msra.mxu0 0
    %3063 = vmatpush.bf16.msra.mxu0 0
    %3064 = vmatpush.bf16.msra.mxu0 0
    %3065 = vmatpush.bf16.msra.mxu0 0
    %3066 = vmatpush.bf16.msra.mxu0 0
    %3067 = vmatpush.bf16.msra.mxu0 0
    %3068 = vmatpush.bf16.msra.mxu0 0
    %3069 = vmatpush.bf16.msra.mxu0 %v3045
    %3070 = vmatmul.bf16.gmra.mxu0 %v3042
    %v3071 = vpop.f32.mrf.mxu0
    %v3072 = vadd.f32 0.0, %v3071
    %v3073 = vpop.f32.mrf.mxu0
    %3074 = vdwg.mxu0
    %3075 = vmatpush.bf16.msra.mxu0 0
    %3076 = vmatpush.bf16.msra.mxu0 0
    %3077 = vmatpush.bf16.msra.mxu0 0
    %3078 = vmatpush.bf16.msra.mxu0 0
    %3079 = vmatpush.bf16.msra.mxu0 0
    %3080 = vmatpush.bf16.msra.mxu0 0
    %3081 = vmatpush.bf16.msra.mxu0 0
    %3082 = vmatpush.bf16.msra.mxu0 %v3048
    %3083 = vmatmul.bf16.gmra.mxu0 %v3042
    %v3084 = vpop.f32.mrf.mxu0
    %v3085 = vadd.f32 0.0, %v3084
    %v3086 = vpop.f32.mrf.mxu0
    %3087 = vdwg.mxu0
    %3088 = vmatpush.bf16.msra.mxu0 0
    %3089 = vmatpush.bf16.msra.mxu0 0
    %3090 = vmatpush.bf16.msra.mxu0 0
    %3091 = vmatpush.bf16.msra.mxu0 0
    %3092 = vmatpush.bf16.msra.mxu0 0
    %3093 = vmatpush.bf16.msra.mxu0 0
    %3094 = vmatpush.bf16.msra.mxu0 0
    %3095 = vmatpush.bf16.msra.mxu0 %v3051
    %3096 = vmatmul.bf16.gmra.mxu0 %v3042
    %v3097 = vpop.f32.mrf.mxu0
    %v3098 = vadd.f32 0.0, %v3097
    %v3099 = vpop.f32.mrf.mxu0
    %3100 = vdwg.mxu0
    %3101 = vmatpush.bf16.msra.mxu0 0
    %3102 = vmatpush.bf16.msra.mxu0 0
    %3103 = vmatpush.bf16.msra.mxu0 0
    %3104 = vmatpush.bf16.msra.mxu0 0
    %3105 = vmatpush.bf16.msra.mxu0 0
    %3106 = vmatpush.bf16.msra.mxu0 0
    %3107 = vmatpush.bf16.msra.mxu0 0
    %3108 = vmatpush.bf16.msra.mxu0 %v3054
    %3109 = vmatmul.bf16.gmra.mxu0 %v3042
    %v3110 = vpop.f32.mrf.mxu0
    %v3111 = vadd.f32 0.0, %v3110
    %v3112 = vpop.f32.mrf.mxu0
    %3113 = vdwg.mxu0
    %3114 = vmatpush.bf16.msra.mxu0 0
    %3115 = vmatpush.bf16.msra.mxu0 0
    %3116 = vmatpush.bf16.msra.mxu0 0
    %3117 = vmatpush.bf16.msra.mxu0 0
    %3118 = vmatpush.bf16.msra.mxu0 0
    %3119 = vmatpush.bf16.msra.mxu0 0
    %3120 = vmatpush.bf16.msra.mxu0 0
    %3121 = vmatpush.bf16.msra.mxu0 %v3057
    %3122 = vmatmul.bf16.gmra.mxu0 %v3042
    %v3123 = vpop.f32.mrf.mxu0
    %v3124 = vadd.f32 0.0, %v3123
    %v3125 = vpop.f32.mrf.mxu0
    %3126 = vdwg.mxu0
    %3127 = vmatpush.bf16.msra.mxu0 0
    %3128 = vmatpush.bf16.msra.mxu0 0
    %3129 = vmatpush.bf16.msra.mxu0 0
    %3130 = vmatpush.bf16.msra.mxu0 0
    %3131 = vmatpush.bf16.msra.mxu0 0
    %3132 = vmatpush.bf16.msra.mxu0 0
    %3133 = vmatpush.bf16.msra.mxu0 0
    %3134 = vmatpush.bf16.msra.mxu0 %v3060
    %3135 = vmatmul.bf16.gmra.mxu0 %v3042
    %v3136 = vpop.f32.mrf.mxu0
    %v3137 = vadd.f32 0.0, %v3136
    %v3138 = vpop.f32.mrf.mxu0
    %3139 = vdwg.mxu0
    %v3140 = vadd.f32 %v2991, %v3072
    %v3141 = vadd.f32 %v2992, %v3085
    %v3142 = vadd.f32 %v2993, %v3098
    %v3143 = vadd.f32 %v2994, %v3111
    %v3144 = vadd.f32 %v2995, %v3124
    %v3145 = vadd.f32 %v2996, %v3137
    %v3146 = vld [vmem:[#allocation2 + $0x4] sm:$0xff]
    %v3147 = vld [vmem:[#allocation2 + $0xc] sm:$0xff]
    %v3148 = vld [vmem:[#allocation2 + $0x14] sm:$0xff]
    %s3149 = scalar_lea.vmem %s2, 52
    %v3150 = vld [vmem:[%s3149] sm:$0xf]
    %v3154 = vunpack.c.l.b16 %v3146
    %v3155 = vunpack.c.h.b16 %v3146
    %v3156 = vunpack.c.l.b16 %v3147
    %v3157 = vunpack.c.h.b16 %v3147
    %v3158 = vunpack.c.l.b16 %v3148
    %v3159 = vunpack.c.h.b16 %v3148
    %v3160 = vpack.c.b16 %v3154, %v3154
    %v3161 = vpack.c.b16 %v3155, %v3155
    %v3162 = vpack.c.b16 %v3156, %v3156
    %v3163 = vpack.c.b16 %v3157, %v3157
    %v3164 = vpack.c.b16 %v3158, %v3158
    %v3165 = vpack.c.b16 %v3159, %v3159
    %v3167 = vsel %vm66, %v3150, 0
    %v3170 = vsel %vm70, %v3160, 0
    %v3173 = vsel %vm70, %v3161, 0
    %v3176 = vsel %vm70, %v3162, 0
    %v3179 = vsel %vm70, %v3163, 0
    %v3182 = vsel %vm70, %v3164, 0
    %v3185 = vsel %vm70, %v3165, 0
    %3187 = vmatpush.bf16.msra.mxu0 0
    %3188 = vmatpush.bf16.msra.mxu0 0
    %3189 = vmatpush.bf16.msra.mxu0 0
    %3190 = vmatpush.bf16.msra.mxu0 0
    %3191 = vmatpush.bf16.msra.mxu0 0
    %3192 = vmatpush.bf16.msra.mxu0 0
    %3193 = vmatpush.bf16.msra.mxu0 0
    %3194 = vmatpush.bf16.msra.mxu0 %v3170
    %3195 = vmatmul.bf16.gmra.mxu0 %v3167
    %v3196 = vpop.f32.mrf.mxu0
    %v3197 = vadd.f32 0.0, %v3196
    %v3198 = vpop.f32.mrf.mxu0
    %3199 = vdwg.mxu0
    %3200 = vmatpush.bf16.msra.mxu0 0
    %3201 = vmatpush.bf16.msra.mxu0 0
    %3202 = vmatpush.bf16.msra.mxu0 0
    %3203 = vmatpush.bf16.msra.mxu0 0
    %3204 = vmatpush.bf16.msra.mxu0 0
    %3205 = vmatpush.bf16.msra.mxu0 0
    %3206 = vmatpush.bf16.msra.mxu0 0
    %3207 = vmatpush.bf16.msra.mxu0 %v3173
    %3208 = vmatmul.bf16.gmra.mxu0 %v3167
    %v3209 = vpop.f32.mrf.mxu0
    %v3210 = vadd.f32 0.0, %v3209
    %v3211 = vpop.f32.mrf.mxu0
    %3212 = vdwg.mxu0
    %3213 = vmatpush.bf16.msra.mxu0 0
    %3214 = vmatpush.bf16.msra.mxu0 0
    %3215 = vmatpush.bf16.msra.mxu0 0
    %3216 = vmatpush.bf16.msra.mxu0 0
    %3217 = vmatpush.bf16.msra.mxu0 0
    %3218 = vmatpush.bf16.msra.mxu0 0
    %3219 = vmatpush.bf16.msra.mxu0 0
    %3220 = vmatpush.bf16.msra.mxu0 %v3176
    %3221 = vmatmul.bf16.gmra.mxu0 %v3167
    %v3222 = vpop.f32.mrf.mxu0
    %v3223 = vadd.f32 0.0, %v3222
    %v3224 = vpop.f32.mrf.mxu0
    %3225 = vdwg.mxu0
    %3226 = vmatpush.bf16.msra.mxu0 0
    %3227 = vmatpush.bf16.msra.mxu0 0
    %3228 = vmatpush.bf16.msra.mxu0 0
    %3229 = vmatpush.bf16.msra.mxu0 0
    %3230 = vmatpush.bf16.msra.mxu0 0
    %3231 = vmatpush.bf16.msra.mxu0 0
    %3232 = vmatpush.bf16.msra.mxu0 0
    %3233 = vmatpush.bf16.msra.mxu0 %v3179
    %3234 = vmatmul.bf16.gmra.mxu0 %v3167
    %v3235 = vpop.f32.mrf.mxu0
    %v3236 = vadd.f32 0.0, %v3235
    %v3237 = vpop.f32.mrf.mxu0
    %3238 = vdwg.mxu0
    %3239 = vmatpush.bf16.msra.mxu0 0
    %3240 = vmatpush.bf16.msra.mxu0 0
    %3241 = vmatpush.bf16.msra.mxu0 0
    %3242 = vmatpush.bf16.msra.mxu0 0
    %3243 = vmatpush.bf16.msra.mxu0 0
    %3244 = vmatpush.bf16.msra.mxu0 0
    %3245 = vmatpush.bf16.msra.mxu0 0
    %3246 = vmatpush.bf16.msra.mxu0 %v3182
    %3247 = vmatmul.bf16.gmra.mxu0 %v3167
    %v3248 = vpop.f32.mrf.mxu0
    %v3249 = vadd.f32 0.0, %v3248
    %v3250 = vpop.f32.mrf.mxu0
    %3251 = vdwg.mxu0
    %3252 = vmatpush.bf16.msra.mxu0 0
    %3253 = vmatpush.bf16.msra.mxu0 0
    %3254 = vmatpush.bf16.msra.mxu0 0
    %3255 = vmatpush.bf16.msra.mxu0 0
    %3256 = vmatpush.bf16.msra.mxu0 0
    %3257 = vmatpush.bf16.msra.mxu0 0
    %3258 = vmatpush.bf16.msra.mxu0 0
    %3259 = vmatpush.bf16.msra.mxu0 %v3185
    %3260 = vmatmul.bf16.gmra.mxu0 %v3167
    %v3261 = vpop.f32.mrf.mxu0
    %v3262 = vadd.f32 0.0, %v3261
    %v3263 = vpop.f32.mrf.mxu0
    %3264 = vdwg.mxu0
    %v3265 = vadd.f32 %v3140, %v3197
    %v3266 = vadd.f32 %v3141, %v3210
    %v3267 = vadd.f32 %v3142, %v3223
    %v3268 = vadd.f32 %v3143, %v3236
    %v3269 = vadd.f32 %v3144, %v3249
    %v3270 = vadd.f32 %v3145, %v3262
    %s3271 = scalar_lea.vmem %s2, 56
    %v3272 = vld [vmem:[%s3271] sm:$0xf]
    %3273 = vrot.lane.b32.xlu0 %v3160, 127
    %v3274 = vpop.permute.xlu0 %3273
    %3275 = vrot.lane.b32.xlu0 %v3161, 127
    %v3276 = vpop.permute.xlu0 %3275
    %3277 = vrot.lane.b32.xlu0 %v3162, 127
    %v3278 = vpop.permute.xlu0 %3277
    %3279 = vrot.lane.b32.xlu0 %v3163, 127
    %v3280 = vpop.permute.xlu0 %3279
    %3281 = vrot.lane.b32.xlu0 %v3164, 127
    %v3282 = vpop.permute.xlu0 %3281
    %3283 = vrot.lane.b32.xlu0 %v3165, 127
    %v3284 = vpop.permute.xlu0 %3283
    %v3285 = vsel %vm679, %v3274, %v3276
    %v3286 = vsel %vm679, %v3276, %v3278
    %v3287 = vsel %vm679, %v3278, %v3280
    %v3288 = vsel %vm679, %v3280, %v3282
    %v3289 = vsel %vm679, %v3282, %v3284
    %v3291 = vsel %vm66, %v3272, 0
    %v3294 = vsel %vm70, %v3285, 0
    %v3297 = vsel %vm70, %v3286, 0
    %v3300 = vsel %vm70, %v3287, 0
    %v3303 = vsel %vm70, %v3288, 0
    %v3306 = vsel %vm70, %v3289, 0
    %v3309 = vsel %vm70, %v3284, 0
    %3311 = vmatpush.bf16.msra.mxu0 0
    %3312 = vmatpush.bf16.msra.mxu0 0
    %3313 = vmatpush.bf16.msra.mxu0 0
    %3314 = vmatpush.bf16.msra.mxu0 0
    %3315 = vmatpush.bf16.msra.mxu0 0
    %3316 = vmatpush.bf16.msra.mxu0 0
    %3317 = vmatpush.bf16.msra.mxu0 0
    %3318 = vmatpush.bf16.msra.mxu0 %v3294
    %3319 = vmatmul.bf16.gmra.mxu0 %v3291
    %v3320 = vpop.f32.mrf.mxu0
    %v3321 = vadd.f32 0.0, %v3320
    %v3322 = vpop.f32.mrf.mxu0
    %3323 = vdwg.mxu0
    %3324 = vmatpush.bf16.msra.mxu0 0
    %3325 = vmatpush.bf16.msra.mxu0 0
    %3326 = vmatpush.bf16.msra.mxu0 0
    %3327 = vmatpush.bf16.msra.mxu0 0
    %3328 = vmatpush.bf16.msra.mxu0 0
    %3329 = vmatpush.bf16.msra.mxu0 0
    %3330 = vmatpush.bf16.msra.mxu0 0
    %3331 = vmatpush.bf16.msra.mxu0 %v3297
    %3332 = vmatmul.bf16.gmra.mxu0 %v3291
    %v3333 = vpop.f32.mrf.mxu0
    %v3334 = vadd.f32 0.0, %v3333
    %v3335 = vpop.f32.mrf.mxu0
    %3336 = vdwg.mxu0
    %3337 = vmatpush.bf16.msra.mxu0 0
    %3338 = vmatpush.bf16.msra.mxu0 0
    %3339 = vmatpush.bf16.msra.mxu0 0
    %3340 = vmatpush.bf16.msra.mxu0 0
    %3341 = vmatpush.bf16.msra.mxu0 0
    %3342 = vmatpush.bf16.msra.mxu0 0
    %3343 = vmatpush.bf16.msra.mxu0 0
    %3344 = vmatpush.bf16.msra.mxu0 %v3300
    %3345 = vmatmul.bf16.gmra.mxu0 %v3291
    %v3346 = vpop.f32.mrf.mxu0
    %v3347 = vadd.f32 0.0, %v3346
    %v3348 = vpop.f32.mrf.mxu0
    %3349 = vdwg.mxu0
    %3350 = vmatpush.bf16.msra.mxu0 0
    %3351 = vmatpush.bf16.msra.mxu0 0
    %3352 = vmatpush.bf16.msra.mxu0 0
    %3353 = vmatpush.bf16.msra.mxu0 0
    %3354 = vmatpush.bf16.msra.mxu0 0
    %3355 = vmatpush.bf16.msra.mxu0 0
    %3356 = vmatpush.bf16.msra.mxu0 0
    %3357 = vmatpush.bf16.msra.mxu0 %v3303
    %3358 = vmatmul.bf16.gmra.mxu0 %v3291
    %v3359 = vpop.f32.mrf.mxu0
    %v3360 = vadd.f32 0.0, %v3359
    %v3361 = vpop.f32.mrf.mxu0
    %3362 = vdwg.mxu0
    %3363 = vmatpush.bf16.msra.mxu0 0
    %3364 = vmatpush.bf16.msra.mxu0 0
    %3365 = vmatpush.bf16.msra.mxu0 0
    %3366 = vmatpush.bf16.msra.mxu0 0
    %3367 = vmatpush.bf16.msra.mxu0 0
    %3368 = vmatpush.bf16.msra.mxu0 0
    %3369 = vmatpush.bf16.msra.mxu0 0
    %3370 = vmatpush.bf16.msra.mxu0 %v3306
    %3371 = vmatmul.bf16.gmra.mxu0 %v3291
    %v3372 = vpop.f32.mrf.mxu0
    %v3373 = vadd.f32 0.0, %v3372
    %v3374 = vpop.f32.mrf.mxu0
    %3375 = vdwg.mxu0
    %3376 = vmatpush.bf16.msra.mxu0 0
    %3377 = vmatpush.bf16.msra.mxu0 0
    %3378 = vmatpush.bf16.msra.mxu0 0
    %3379 = vmatpush.bf16.msra.mxu0 0
    %3380 = vmatpush.bf16.msra.mxu0 0
    %3381 = vmatpush.bf16.msra.mxu0 0
    %3382 = vmatpush.bf16.msra.mxu0 0
    %3383 = vmatpush.bf16.msra.mxu0 %v3309
    %3384 = vmatmul.bf16.gmra.mxu0 %v3291
    %v3385 = vpop.f32.mrf.mxu0
    %v3386 = vadd.f32 0.0, %v3385
    %v3387 = vpop.f32.mrf.mxu0
    %3388 = vdwg.mxu0
    %v3389 = vadd.f32 %v3265, %v3321
    %v3390 = vadd.f32 %v3266, %v3334
    %v3391 = vadd.f32 %v3267, %v3347
    %v3392 = vadd.f32 %v3268, %v3360
    %v3393 = vadd.f32 %v3269, %v3373
    %v3394 = vadd.f32 %v3270, %v3386
    %s3395 = scalar_lea.vmem %s2, 60
    %v3396 = vld [vmem:[%s3395] sm:$0xf]
    %3397 = vrot.lane.b32.xlu0 %v3160, 111
    %v3398 = vpop.permute.xlu0 %3397
    %3399 = vrot.lane.b32.xlu0 %v3161, 111
    %v3400 = vpop.permute.xlu0 %3399
    %3401 = vrot.lane.b32.xlu0 %v3162, 111
    %v3402 = vpop.permute.xlu0 %3401
    %3403 = vrot.lane.b32.xlu0 %v3163, 111
    %v3404 = vpop.permute.xlu0 %3403
    %3405 = vrot.lane.b32.xlu0 %v3164, 111
    %v3406 = vpop.permute.xlu0 %3405
    %3407 = vrot.lane.b32.xlu0 %v3165, 111
    %v3408 = vpop.permute.xlu0 %3407
    %v3409 = vsel %vm804, %v3398, %v3400
    %v3410 = vsel %vm804, %v3400, %v3402
    %v3411 = vsel %vm804, %v3402, %v3404
    %v3412 = vsel %vm804, %v3404, %v3406
    %v3413 = vsel %vm804, %v3406, %v3408
    %v3415 = vsel %vm66, %v3396, 0
    %v3418 = vsel %vm70, %v3409, 0
    %v3421 = vsel %vm70, %v3410, 0
    %v3424 = vsel %vm70, %v3411, 0
    %v3427 = vsel %vm70, %v3412, 0
    %v3430 = vsel %vm70, %v3413, 0
    %v3433 = vsel %vm70, %v3408, 0
    %3435 = vmatpush.bf16.msra.mxu0 0
    %3436 = vmatpush.bf16.msra.mxu0 0
    %3437 = vmatpush.bf16.msra.mxu0 0
    %3438 = vmatpush.bf16.msra.mxu0 0
    %3439 = vmatpush.bf16.msra.mxu0 0
    %3440 = vmatpush.bf16.msra.mxu0 0
    %3441 = vmatpush.bf16.msra.mxu0 0
    %3442 = vmatpush.bf16.msra.mxu0 %v3418
    %3443 = vmatmul.bf16.gmra.mxu0 %v3415
    %v3444 = vpop.f32.mrf.mxu0
    %v3445 = vadd.f32 0.0, %v3444
    %v3446 = vpop.f32.mrf.mxu0
    %3447 = vdwg.mxu0
    %3448 = vmatpush.bf16.msra.mxu0 0
    %3449 = vmatpush.bf16.msra.mxu0 0
    %3450 = vmatpush.bf16.msra.mxu0 0
    %3451 = vmatpush.bf16.msra.mxu0 0
    %3452 = vmatpush.bf16.msra.mxu0 0
    %3453 = vmatpush.bf16.msra.mxu0 0
    %3454 = vmatpush.bf16.msra.mxu0 0
    %3455 = vmatpush.bf16.msra.mxu0 %v3421
    %3456 = vmatmul.bf16.gmra.mxu0 %v3415
    %v3457 = vpop.f32.mrf.mxu0
    %v3458 = vadd.f32 0.0, %v3457
    %v3459 = vpop.f32.mrf.mxu0
    %3460 = vdwg.mxu0
    %3461 = vmatpush.bf16.msra.mxu0 0
    %3462 = vmatpush.bf16.msra.mxu0 0
    %3463 = vmatpush.bf16.msra.mxu0 0
    %3464 = vmatpush.bf16.msra.mxu0 0
    %3465 = vmatpush.bf16.msra.mxu0 0
    %3466 = vmatpush.bf16.msra.mxu0 0
    %3467 = vmatpush.bf16.msra.mxu0 0
    %3468 = vmatpush.bf16.msra.mxu0 %v3424
    %3469 = vmatmul.bf16.gmra.mxu0 %v3415
    %v3470 = vpop.f32.mrf.mxu0
    %v3471 = vadd.f32 0.0, %v3470
    %v3472 = vpop.f32.mrf.mxu0
    %3473 = vdwg.mxu0
    %3474 = vmatpush.bf16.msra.mxu0 0
    %3475 = vmatpush.bf16.msra.mxu0 0
    %3476 = vmatpush.bf16.msra.mxu0 0
    %3477 = vmatpush.bf16.msra.mxu0 0
    %3478 = vmatpush.bf16.msra.mxu0 0
    %3479 = vmatpush.bf16.msra.mxu0 0
    %3480 = vmatpush.bf16.msra.mxu0 0
    %3481 = vmatpush.bf16.msra.mxu0 %v3427
    %3482 = vmatmul.bf16.gmra.mxu0 %v3415
    %v3483 = vpop.f32.mrf.mxu0
    %v3484 = vadd.f32 0.0, %v3483
    %v3485 = vpop.f32.mrf.mxu0
    %3486 = vdwg.mxu0
    %3487 = vmatpush.bf16.msra.mxu0 0
    %3488 = vmatpush.bf16.msra.mxu0 0
    %3489 = vmatpush.bf16.msra.mxu0 0
    %3490 = vmatpush.bf16.msra.mxu0 0
    %3491 = vmatpush.bf16.msra.mxu0 0
    %3492 = vmatpush.bf16.msra.mxu0 0
    %3493 = vmatpush.bf16.msra.mxu0 0
    %3494 = vmatpush.bf16.msra.mxu0 %v3430
    %3495 = vmatmul.bf16.gmra.mxu0 %v3415
    %v3496 = vpop.f32.mrf.mxu0
    %v3497 = vadd.f32 0.0, %v3496
    %v3498 = vpop.f32.mrf.mxu0
    %3499 = vdwg.mxu0
    %3500 = vmatpush.bf16.msra.mxu0 0
    %3501 = vmatpush.bf16.msra.mxu0 0
    %3502 = vmatpush.bf16.msra.mxu0 0
    %3503 = vmatpush.bf16.msra.mxu0 0
    %3504 = vmatpush.bf16.msra.mxu0 0
    %3505 = vmatpush.bf16.msra.mxu0 0
    %3506 = vmatpush.bf16.msra.mxu0 0
    %3507 = vmatpush.bf16.msra.mxu0 %v3433
    %3508 = vmatmul.bf16.gmra.mxu0 %v3415
    %v3509 = vpop.f32.mrf.mxu0
    %v3510 = vadd.f32 0.0, %v3509
    %v3511 = vpop.f32.mrf.mxu0
    %3512 = vdwg.mxu0
    %v3513 = vadd.f32 %v3389, %v3445
    %v3514 = vadd.f32 %v3390, %v3458
    %v3515 = vadd.f32 %v3391, %v3471
    %v3516 = vadd.f32 %v3392, %v3484
    %v3517 = vadd.f32 %v3393, %v3497
    %v3518 = vadd.f32 %v3394, %v3510
    %s3519 = scalar_lea.vmem %s2, 64
    %v3520 = vld [vmem:[%s3519] sm:$0xf]
    %3521 = vrot.lane.b32.xlu0 %v3160, 110
    %v3522 = vpop.permute.xlu0 %3521
    %3523 = vrot.lane.b32.xlu0 %v3161, 110
    %v3524 = vpop.permute.xlu0 %3523
    %3525 = vrot.lane.b32.xlu0 %v3162, 110
    %v3526 = vpop.permute.xlu0 %3525
    %3527 = vrot.lane.b32.xlu0 %v3163, 110
    %v3528 = vpop.permute.xlu0 %3527
    %3529 = vrot.lane.b32.xlu0 %v3164, 110
    %v3530 = vpop.permute.xlu0 %3529
    %3531 = vrot.lane.b32.xlu0 %v3165, 110
    %v3532 = vpop.permute.xlu0 %3531
    %v3533 = vsel %vm929, %v3522, %v3524
    %v3534 = vsel %vm929, %v3524, %v3526
    %v3535 = vsel %vm929, %v3526, %v3528
    %v3536 = vsel %vm929, %v3528, %v3530
    %v3537 = vsel %vm929, %v3530, %v3532
    %v3539 = vsel %vm66, %v3520, 0
    %v3542 = vsel %vm70, %v3533, 0
    %v3545 = vsel %vm70, %v3534, 0
    %v3548 = vsel %vm70, %v3535, 0
    %v3551 = vsel %vm70, %v3536, 0
    %v3554 = vsel %vm70, %v3537, 0
    %v3557 = vsel %vm70, %v3532, 0
    %3559 = vmatpush.bf16.msra.mxu0 0
    %3560 = vmatpush.bf16.msra.mxu0 0
    %3561 = vmatpush.bf16.msra.mxu0 0
    %3562 = vmatpush.bf16.msra.mxu0 0
    %3563 = vmatpush.bf16.msra.mxu0 0
    %3564 = vmatpush.bf16.msra.mxu0 0
    %3565 = vmatpush.bf16.msra.mxu0 0
    %3566 = vmatpush.bf16.msra.mxu0 %v3542
    %3567 = vmatmul.bf16.gmra.mxu0 %v3539
    %v3568 = vpop.f32.mrf.mxu0
    %v3569 = vadd.f32 0.0, %v3568
    %v3570 = vpop.f32.mrf.mxu0
    %3571 = vdwg.mxu0
    %3572 = vmatpush.bf16.msra.mxu0 0
    %3573 = vmatpush.bf16.msra.mxu0 0
    %3574 = vmatpush.bf16.msra.mxu0 0
    %3575 = vmatpush.bf16.msra.mxu0 0
    %3576 = vmatpush.bf16.msra.mxu0 0
    %3577 = vmatpush.bf16.msra.mxu0 0
    %3578 = vmatpush.bf16.msra.mxu0 0
    %3579 = vmatpush.bf16.msra.mxu0 %v3545
    %3580 = vmatmul.bf16.gmra.mxu0 %v3539
    %v3581 = vpop.f32.mrf.mxu0
    %v3582 = vadd.f32 0.0, %v3581
    %v3583 = vpop.f32.mrf.mxu0
    %3584 = vdwg.mxu0
    %3585 = vmatpush.bf16.msra.mxu0 0
    %3586 = vmatpush.bf16.msra.mxu0 0
    %3587 = vmatpush.bf16.msra.mxu0 0
    %3588 = vmatpush.bf16.msra.mxu0 0
    %3589 = vmatpush.bf16.msra.mxu0 0
    %3590 = vmatpush.bf16.msra.mxu0 0
    %3591 = vmatpush.bf16.msra.mxu0 0
    %3592 = vmatpush.bf16.msra.mxu0 %v3548
    %3593 = vmatmul.bf16.gmra.mxu0 %v3539
    %v3594 = vpop.f32.mrf.mxu0
    %v3595 = vadd.f32 0.0, %v3594
    %v3596 = vpop.f32.mrf.mxu0
    %3597 = vdwg.mxu0
    %3598 = vmatpush.bf16.msra.mxu0 0
    %3599 = vmatpush.bf16.msra.mxu0 0
    %3600 = vmatpush.bf16.msra.mxu0 0
    %3601 = vmatpush.bf16.msra.mxu0 0
    %3602 = vmatpush.bf16.msra.mxu0 0
    %3603 = vmatpush.bf16.msra.mxu0 0
    %3604 = vmatpush.bf16.msra.mxu0 0
    %3605 = vmatpush.bf16.msra.mxu0 %v3551
    %3606 = vmatmul.bf16.gmra.mxu0 %v3539
    %v3607 = vpop.f32.mrf.mxu0
    %v3608 = vadd.f32 0.0, %v3607
    %v3609 = vpop.f32.mrf.mxu0
    %3610 = vdwg.mxu0
    %3611 = vmatpush.bf16.msra.mxu0 0
    %3612 = vmatpush.bf16.msra.mxu0 0
    %3613 = vmatpush.bf16.msra.mxu0 0
    %3614 = vmatpush.bf16.msra.mxu0 0
    %3615 = vmatpush.bf16.msra.mxu0 0
    %3616 = vmatpush.bf16.msra.mxu0 0
    %3617 = vmatpush.bf16.msra.mxu0 0
    %3618 = vmatpush.bf16.msra.mxu0 %v3554
    %3619 = vmatmul.bf16.gmra.mxu0 %v3539
    %v3620 = vpop.f32.mrf.mxu0
    %v3621 = vadd.f32 0.0, %v3620
    %v3622 = vpop.f32.mrf.mxu0
    %3623 = vdwg.mxu0
    %3624 = vmatpush.bf16.msra.mxu0 0
    %3625 = vmatpush.bf16.msra.mxu0 0
    %3626 = vmatpush.bf16.msra.mxu0 0
    %3627 = vmatpush.bf16.msra.mxu0 0
    %3628 = vmatpush.bf16.msra.mxu0 0
    %3629 = vmatpush.bf16.msra.mxu0 0
    %3630 = vmatpush.bf16.msra.mxu0 0
    %3631 = vmatpush.bf16.msra.mxu0 %v3557
    %3632 = vmatmul.bf16.gmra.mxu0 %v3539
    %v3633 = vpop.f32.mrf.mxu0
    %v3634 = vadd.f32 0.0, %v3633
    %v3635 = vpop.f32.mrf.mxu0
    %3636 = vdwg.mxu0
    %v3637 = vadd.f32 %v3513, %v3569
    %v3638 = vadd.f32 %v3514, %v3582
    %v3639 = vadd.f32 %v3515, %v3595
    %v3640 = vadd.f32 %v3516, %v3608
    %v3641 = vadd.f32 %v3517, %v3621
    %v3642 = vadd.f32 %v3518, %v3634
    %s3643 = scalar_lea.vmem %s2, 68
    %v3644 = vld [vmem:[%s3643] sm:$0xf]
    %3645 = vrot.lane.b32.xlu0 %v3160, 109
    %v3646 = vpop.permute.xlu0 %3645
    %3647 = vrot.lane.b32.xlu0 %v3161, 109
    %v3648 = vpop.permute.xlu0 %3647
    %3649 = vrot.lane.b32.xlu0 %v3162, 109
    %v3650 = vpop.permute.xlu0 %3649
    %3651 = vrot.lane.b32.xlu0 %v3163, 109
    %v3652 = vpop.permute.xlu0 %3651
    %3653 = vrot.lane.b32.xlu0 %v3164, 109
    %v3654 = vpop.permute.xlu0 %3653
    %3655 = vrot.lane.b32.xlu0 %v3165, 109
    %v3656 = vpop.permute.xlu0 %3655
    %v3657 = vsel %vm1054, %v3646, %v3648
    %v3658 = vsel %vm1054, %v3648, %v3650
    %v3659 = vsel %vm1054, %v3650, %v3652
    %v3660 = vsel %vm1054, %v3652, %v3654
    %v3661 = vsel %vm1054, %v3654, %v3656
    %v3663 = vsel %vm66, %v3644, 0
    %v3666 = vsel %vm70, %v3657, 0
    %v3669 = vsel %vm70, %v3658, 0
    %v3672 = vsel %vm70, %v3659, 0
    %v3675 = vsel %vm70, %v3660, 0
    %v3678 = vsel %vm70, %v3661, 0
    %v3681 = vsel %vm70, %v3656, 0
    %3683 = vmatpush.bf16.msra.mxu0 0
    %3684 = vmatpush.bf16.msra.mxu0 0
    %3685 = vmatpush.bf16.msra.mxu0 0
    %3686 = vmatpush.bf16.msra.mxu0 0
    %3687 = vmatpush.bf16.msra.mxu0 0
    %3688 = vmatpush.bf16.msra.mxu0 0
    %3689 = vmatpush.bf16.msra.mxu0 0
    %3690 = vmatpush.bf16.msra.mxu0 %v3666
    %3691 = vmatmul.bf16.gmra.mxu0 %v3663
    %v3692 = vpop.f32.mrf.mxu0
    %v3693 = vadd.f32 0.0, %v3692
    %v3694 = vpop.f32.mrf.mxu0
    %3695 = vdwg.mxu0
    %3696 = vmatpush.bf16.msra.mxu0 0
    %3697 = vmatpush.bf16.msra.mxu0 0
    %3698 = vmatpush.bf16.msra.mxu0 0
    %3699 = vmatpush.bf16.msra.mxu0 0
    %3700 = vmatpush.bf16.msra.mxu0 0
    %3701 = vmatpush.bf16.msra.mxu0 0
    %3702 = vmatpush.bf16.msra.mxu0 0
    %3703 = vmatpush.bf16.msra.mxu0 %v3669
    %3704 = vmatmul.bf16.gmra.mxu0 %v3663
    %v3705 = vpop.f32.mrf.mxu0
    %v3706 = vadd.f32 0.0, %v3705
    %v3707 = vpop.f32.mrf.mxu0
    %3708 = vdwg.mxu0
    %3709 = vmatpush.bf16.msra.mxu0 0
    %3710 = vmatpush.bf16.msra.mxu0 0
    %3711 = vmatpush.bf16.msra.mxu0 0
    %3712 = vmatpush.bf16.msra.mxu0 0
    %3713 = vmatpush.bf16.msra.mxu0 0
    %3714 = vmatpush.bf16.msra.mxu0 0
    %3715 = vmatpush.bf16.msra.mxu0 0
    %3716 = vmatpush.bf16.msra.mxu0 %v3672
    %3717 = vmatmul.bf16.gmra.mxu0 %v3663
    %v3718 = vpop.f32.mrf.mxu0
    %v3719 = vadd.f32 0.0, %v3718
    %v3720 = vpop.f32.mrf.mxu0
    %3721 = vdwg.mxu0
    %3722 = vmatpush.bf16.msra.mxu0 0
    %3723 = vmatpush.bf16.msra.mxu0 0
    %3724 = vmatpush.bf16.msra.mxu0 0
    %3725 = vmatpush.bf16.msra.mxu0 0
    %3726 = vmatpush.bf16.msra.mxu0 0
    %3727 = vmatpush.bf16.msra.mxu0 0
    %3728 = vmatpush.bf16.msra.mxu0 0
    %3729 = vmatpush.bf16.msra.mxu0 %v3675
    %3730 = vmatmul.bf16.gmra.mxu0 %v3663
    %v3731 = vpop.f32.mrf.mxu0
    %v3732 = vadd.f32 0.0, %v3731
    %v3733 = vpop.f32.mrf.mxu0
    %3734 = vdwg.mxu0
    %3735 = vmatpush.bf16.msra.mxu0 0
    %3736 = vmatpush.bf16.msra.mxu0 0
    %3737 = vmatpush.bf16.msra.mxu0 0
    %3738 = vmatpush.bf16.msra.mxu0 0
    %3739 = vmatpush.bf16.msra.mxu0 0
    %3740 = vmatpush.bf16.msra.mxu0 0
    %3741 = vmatpush.bf16.msra.mxu0 0
    %3742 = vmatpush.bf16.msra.mxu0 %v3678
    %3743 = vmatmul.bf16.gmra.mxu0 %v3663
    %v3744 = vpop.f32.mrf.mxu0
    %v3745 = vadd.f32 0.0, %v3744
    %v3746 = vpop.f32.mrf.mxu0
    %3747 = vdwg.mxu0
    %3748 = vmatpush.bf16.msra.mxu0 0
    %3749 = vmatpush.bf16.msra.mxu0 0
    %3750 = vmatpush.bf16.msra.mxu0 0
    %3751 = vmatpush.bf16.msra.mxu0 0
    %3752 = vmatpush.bf16.msra.mxu0 0
    %3753 = vmatpush.bf16.msra.mxu0 0
    %3754 = vmatpush.bf16.msra.mxu0 0
    %3755 = vmatpush.bf16.msra.mxu0 %v3681
    %3756 = vmatmul.bf16.gmra.mxu0 %v3663
    %v3757 = vpop.f32.mrf.mxu0
    %v3758 = vadd.f32 0.0, %v3757
    %v3759 = vpop.f32.mrf.mxu0
    %3760 = vdwg.mxu0
    %v3761 = vadd.f32 %v3637, %v3693
    %v3762 = vadd.f32 %v3638, %v3706
    %v3763 = vadd.f32 %v3639, %v3719
    %v3764 = vadd.f32 %v3640, %v3732
    %v3765 = vadd.f32 %v3641, %v3745
    %v3766 = vadd.f32 %v3642, %v3758
    %3767 = vset.pattern.permute.xlu0 6
    %3768 = vperm.xlu0 %3767, %v20
    %v3769 = vpop.permute.xlu0 %3768
    %v3771 = vadd.f32 %v3761, %v3769
    %v3772 = vadd.f32 %v3762, %v3769
    %v3773 = vadd.f32 %v3763, %v3769
    %v3774 = vadd.f32 %v3764, %v3769
    %v3775 = vadd.f32 %v3765, %v3769
    %v3776 = vadd.f32 %v3766, %v3769
    %v3777 = vld [vmem:[#allocation3] sm:$0xff]
    %v3778 = vld [vmem:[#allocation3 + $0x8] sm:$0xff]
    %v3779 = vld [vmem:[#allocation3 + $0x10] sm:$0xff]
    %v3780 = vld [vmem:[#allocation3 + $0x18] sm:$0xff]
    %v3781 = vld [vmem:[#allocation3 + $0x20] sm:$0xff]
    %v3782 = vld [vmem:[#allocation3 + $0x28] sm:$0xff]
    %v3783 = vadd.f32 %v3777, %v3771
    %v3784 = vadd.f32 %v3778, %v3772
    %v3785 = vadd.f32 %v3779, %v3773
    %v3786 = vadd.f32 %v3780, %v3774
    %v3787 = vadd.f32 %v3781, %v3775
    %v3788 = vadd.f32 %v3782, %v3776
    %3789 = vst [vmem:[#allocation3] sm:$0xff] %v3783
    %3790 = vst [vmem:[#allocation3 + $0x8] sm:$0xff] %v3784
    %3791 = vst [vmem:[#allocation3 + $0x10] sm:$0xff] %v3785
    %3792 = vst [vmem:[#allocation3 + $0x18] sm:$0xff] %v3786
    %3793 = vst [vmem:[#allocation3 + $0x20] sm:$0xff] %v3787
    %3794 = vst.msk [vmem:[#allocation3 + $0x28] sm:$0xff] %vm66, %v3788
    // Predicated region
    $region18: #{tpu_custom_call.1} parent=1 // pred_check
      _
    $region19: #{tpu_custom_call.1} parent=1 // pred_check_branch
      %3796 = sbr.rel (0) target = $region21
    $region20: #{tpu_custom_call.1} parent=1 // pred_region
      %3798 = vsyncadd [#allocation4], 0
      %s3800 = sshll.u32 [#allocation3], 4
      %s3801 = int_to_ptr.vmem [resolvable:$true] %s3800
      %s3802 = sshll.u32 %s4, 4
      %s3803 = int_to_ptr.hbm [resolvable:$true] %s3802
      %3805 = dma.vmem_to_hbm [thread:$0]  %s3801, 768, %s3803, [#allocation4]
    $region21: #{tpu_custom_call.1} parent=1 // pred_fallthru
      _
    // Predicated region
    $region22: #{tpu_custom_call.1} parent=1 // pred_check
      _
    $region23: #{tpu_custom_call.1} parent=1 // pred_check_branch
      %3807 = sbr.rel (0) target = $region25
    $region24: #{tpu_custom_call.1} parent=1 // pred_region
      %3809 = dma.done [#allocation4], 768
    $region25: #{tpu_custom_call.1} parent=1 // pred_fallthru
      _
    %3810 = vsyncpa [#allocation4], 1

</llo_original>
